<compile_context>
chip_gen: v5e
topology: v5e:2x2
jax: 0.10.0
libtpu: 0.0.40
codegen_flags: <defaults>
</compile_context>

<pallas_src>
import functools

import jax
import jax.numpy as jnp
from jax.experimental import pallas as pl
from jax.experimental.pallas import tpu as pltpu


# ----------------------------------------------------------------------------- kernel


def projector_kernel(x_ref, wc_ref, bc_ref, w1_ref, b1_ref, w2_ref, b2_ref, o_ref):
    """One row-tile of the fused projector.

    x_ref  : (tile_m, k*C_in)   input rows; k consecutive frames flattened per output row
    wc_ref : (k*C_in, C_pad)    bf16  conv1d weight, tap-major flattened
    bc_ref : (1, C_pad)         f32
    w1_ref : (C_pad, hidden)    bf16
    b1_ref : (1, hidden)        f32
    w2_ref : (hidden, llm_pad)  bf16
    b2_ref : (1, llm_pad)       f32
    o_ref  : (tile_m, llm_pad)
    """
    x = x_ref[...].astype(jnp.bfloat16)

    # conv1d(kernel=k, stride=k, padding=0) == a single matmul over the flattened (k*C_in) axis
    h = jnp.dot(x, wc_ref[...], preferred_element_type=jnp.float32)
    h = jnp.maximum(h + bc_ref[...], 0.0)                               # conv bias + relu1

    h = jnp.dot(h.astype(jnp.bfloat16), w1_ref[...],
                preferred_element_type=jnp.float32) + b1_ref[...]
    h = jnp.maximum(h, 0.0)                                             # relu2

    out = jnp.dot(h.astype(jnp.bfloat16), w2_ref[...],
                  preferred_element_type=jnp.float32) + b2_ref[...]
    o_ref[...] = out.astype(o_ref.dtype)


# ----------------------------------------------------------------------------- helpers


def _round_up(n, m):
    return ((n + m - 1) // m) * m


def _pad_last(a, mult):
    n = a.shape[-1]
    n_pad = _round_up(n, mult)
    if n_pad != n:
        a = jnp.pad(a, [(0, 0)] * (a.ndim - 1) + [(0, n_pad - n)])
    return a


_VMEM_LIMIT = None


def _vmem_limit_bytes():
    """~90% of physical VMEM (64 MiB on v7x, 128 MiB on v5e/v6e), with a safe fallback."""
    global _VMEM_LIMIT
    if _VMEM_LIMIT is None:
        try:
            cap = int(pltpu.get_tpu_info().vmem_capacity_bytes)
        except Exception:
            cap = 64 * 1024 * 1024  # v7x-safe floor
        _VMEM_LIMIT = min(int(cap * 0.90), 112 * 1024 * 1024)
    return _VMEM_LIMIT


_PAD_MULT = None


def _lane_pad_multiple():
    """256 on v6e/v7x (2x256x256 MXU), 128 on v5e and older / unknown."""
    global _PAD_MULT
    if _PAD_MULT is None:
        try:
            kind = jax.devices()[0].device_kind.lower()
        except Exception:
            kind = ""
        if any(v in kind for v in ("v2", "v3", "v4", "v5")):
            _PAD_MULT = 128
        else:
            _PAD_MULT = 256
    return _PAD_MULT


_BUFFERED1_OK = None


def _buffered1_supported():
    """Probe pl.Buffered(1) support with a tiny dummy kernel (so the real kernel's
    errors are never silently swallowed)."""
    global _BUFFERED1_OK
    if _BUFFERED1_OK is None:
        try:
            def _probe(a_ref, o_ref):
                o_ref[...] = a_ref[...] + 1.0

            a = jnp.zeros((8, 128), jnp.float32)
            out = pl.pallas_call(
                _probe,
                out_shape=jax.ShapeDtypeStruct((8, 128), jnp.float32),
                grid=(1,),
                in_specs=[pl.BlockSpec((8, 128), lambda i: (0, 0),
                                       pipeline_mode=pl.Buffered(1))],
                out_specs=pl.BlockSpec((8, 128), lambda i: (0, 0)),
            )(a)
            jax.block_until_ready(out)
            _BUFFERED1_OK = True
        except Exception:
            _BUFFERED1_OK = False
    return _BUFFERED1_OK


def _pick_tile_m(M, kC, C_pad, hidden, llm_pad, x_itemsize, out_itemsize, weight_buffers):
    """Largest tile_m whose footprint fits the VMEM budget (weights are resident)."""
    vmem_limit = _vmem_limit_bytes()
    weights = weight_buffers * (
        (kC * C_pad + C_pad * hidden + hidden * llm_pad) * 2     # bf16 weights
        + (C_pad + hidden + llm_pad) * 4                         # f32 biases
    )
    chosen = 8
    for tm in (256, 128, 64, 32, 16, 8):
        act = (2 * tm * kC * x_itemsize              # double-buffered input tile
               + 2 * tm * llm_pad * out_itemsize     # double-buffered output tile
               + 3 * tm * max(C_pad, hidden) * 4)    # in-kernel f32 intermediates headroom
        if weights + act <= vmem_limit:
            chosen = tm
            break
    # TODO(synk): if the resident weights alone exceed the budget (very large llm_dim on
    # v7x), add a second grid axis over llm_pad tiles and cache the linear1 output in VMEM
    # scratch under pl.when(j==0) instead of shrinking tile_m.
    return min(chosen, max(8, _round_up(M, 8)))


# ----------------------------------------------------------------------------- forward


@functools.partial(
    jax.jit,
    static_argnames=("k", "tile_m", "pad_mult", "weight_buffers", "out_dtype"))
def _forward(x, w_conv, b_conv, w1, b1, w2, b2, *,
             k, tile_m, pad_mult, weight_buffers, out_dtype):
    B, T, C = x.shape
    T_out = T // k
    hidden = w1.shape[0]                 # 2048 in the module
    llm_dim = w2.shape[0]
    kC = k * C
    C_pad = _round_up(C, pad_mult)       # lane-dense conv-out / linear1-in
    llm_pad = _round_up(llm_dim, pad_mult)

    # ---- pack weights (bf16 MXU inputs, f32 biases). Cheap one-off wrapper glue.
    # torch Conv1d weight (C_out, C_in, k):
    #   out[t, co] = b[co] + sum_{ci,j} w[co, ci, j] * x[t*k + j, ci]
    # flattened x row t = concat_j x[t*k+j, :]  ->  wc_flat[j*C + ci, co] = w[co, ci, j]
    wc = jnp.transpose(w_conv, (2, 1, 0)).reshape(kC, llm_dim * 0 + w_conv.shape[0])
    wc = _pad_last(wc, pad_mult).astype(jnp.bfloat16)                        # (k*C, C_pad)
    bc = _pad_last(b_conv.reshape(1, C), pad_mult).astype(jnp.float32)       # (1, C_pad)

    w1_t = w1.T                                                              # (C, hidden)
    if C_pad != C:
        w1_t = jnp.pad(w1_t, ((0, C_pad - C), (0, 0)))
    w1_t = w1_t.astype(jnp.bfloat16)                                         # (C_pad, hidden)
    b1_2 = b1.reshape(1, hidden).astype(jnp.float32)

    w2_t = _pad_last(w2.T, pad_mult).astype(jnp.bfloat16)                    # (hidden, llm_pad)
    b2_2 = _pad_last(b2.reshape(1, llm_dim), pad_mult).astype(jnp.float32)   # (1, llm_pad)

    # ---- activation: (B, T, C) -> (B*T_out, k*C) is a pure row-major view (no relayout).
    if T != T_out * k:
        x = x[:, : T_out * k, :]
    x2 = x.reshape(B * T_out, kC)

    M = B * T_out
    M_pad = _round_up(M, tile_m)
    if M_pad != M:
        x2 = jnp.pad(x2, ((0, M_pad - M), (0, 0)))
    num_tiles = M_pad // tile_m

    single_buffer = (weight_buffers == 1)

    def _const_spec(shape):
        # Grid-invariant operand (weights / biases): keep resident in VMEM.
        if single_buffer:
            return pl.BlockSpec(shape, lambda i: (0,) * len(shape),
                                pipeline_mode=pl.Buffered(1))
        return pl.BlockSpec(shape, lambda i: (0,) * len(shape))

    flops = 2 * M_pad * (kC * C_pad + C_pad * hidden + hidden * llm_pad)
    bytes_accessed = (
        x2.size * x2.dtype.itemsize
        + (wc.size + w1_t.size + w2_t.size) * 2
        + (bc.size + b1_2.size + b2_2.size) * 4
        + M_pad * llm_pad * jnp.dtype(out_dtype).itemsize
    )

    out = pl.pallas_call(
        projector_kernel,
        out_shape=jax.ShapeDtypeStruct((M_pad, llm_pad), out_dtype),
        grid_spec=pltpu.PrefetchScalarGridSpec(
            num_scalar_prefetch=0,
            grid=(num_tiles,),
            in_specs=[
                pl.BlockSpec((tile_m, kC), lambda i: (i, 0)),   # input rows (pipelined)
                _const_spec((kC, C_pad)),                       # conv weight (flattened)
                _const_spec((1, C_pad)),                        # conv bias
                _const_spec((C_pad, hidden)),                   # linear1 weight
                _const_spec((1, hidden)),                       # linear1 bias
                _const_spec((hidden, llm_pad)),                 # linear2 weight
                _const_spec((1, llm_pad)),                      # linear2 bias
            ],
            out_specs=pl.BlockSpec((tile_m, llm_pad), lambda i: (i, 0)),
        ),
        compiler_params=pltpu.CompilerParams(
            dimension_semantics=("parallel",),      # megacore sharding of the row-tile axis
            vmem_limit_bytes=_vmem_limit_bytes(),
        ),
        cost_estimate=pl.CostEstimate(
            flops=flops, transcendentals=0, bytes_accessed=bytes_accessed),
    )(x2, wc, bc, w1_t, b1_2, w2_t, b2_2)

    return out[:M, :llm_dim].reshape(B, T_out, llm_dim)


def encoder_projector_cov1d(x, w_conv, b_conv, w1, b1, w2, b2, *, k,
                            tile_m=None, out_dtype=None):
    """x: (B, T, encoder_dim). Returns (B, T // k, llm_dim), matching the PyTorch module.

    out_dtype=None keeps x.dtype (module semantics); pass jnp.bfloat16 to halve output
    DMA/VMEM if the downstream LLM consumes bf16.
    """
    B, T, C = x.shape
    T_out = T // k
    hidden = w1.shape[0]
    llm_dim = w2.shape[0]
    pad_mult = _lane_pad_multiple()
    C_pad = _round_up(C, pad_mult)
    llm_pad = _round_up(llm_dim, pad_mult)
    out_dtype = jnp.dtype(x.dtype if out_dtype is None else out_dtype)

    weight_buffers = 1 if _buffered1_supported() else 2
    M = B * T_out
    if tile_m is None:
        tile_m = _pick_tile_m(M, k * C, C_pad, hidden, llm_pad,
                              jnp.dtype(x.dtype).itemsize, out_dtype.itemsize,
                              weight_buffers)
    tile_m = max(8, (int(tile_m) // 8) * 8)       # f32 sublane granularity
    tile_m = min(tile_m, max(8, _round_up(M, 8)))

    return _forward(x, w_conv, b_conv, w1, b1, w2, b2,
                    k=k, tile_m=tile_m, pad_mult=pad_mult,
                    weight_buffers=weight_buffers, out_dtype=out_dtype)


# ----------------------------------------------------------------------------- reference / test


def _reference(x, w_conv, b_conv, w1, b1, w2, b2, k):
    """Pure-JAX f32 replica of the PyTorch forward."""
    B, T, C = x.shape
    T_out = T // k
    patches = x[:, : T_out * k, :].reshape(B, T_out, k, C)              # (B, To, k, Cin)
    conv = jnp.einsum("btjc,ocj->bto", patches, w_conv) + b_conv        # (B, To, Cout)
    h = jnp.maximum(conv, 0.0)
    h = h @ w1.T + b1
    h = jnp.maximum(h, 0.0)
    return h @ w2.T + b2


if __name__ == "__main__":
    # config: encoder_projector_ds_rate=k, encoder_dim, llm_dim (hidden=2048 hardcoded in module)
    k = 2
    encoder_dim = 32
    llm_dim = 64
    hidden = 2048
    B, T = 2, 16

    key = jax.random.PRNGKey(0)
    ks = jax.random.split(key, 8)
    x = jax.random.normal(ks[0], (B, T, encoder_dim), jnp.float32)

    w_conv = jax.random.normal(ks[1], (encoder_dim, encoder_dim, k), jnp.float32) * 0.05
    b_conv = jax.random.normal(ks[2], (encoder_dim,), jnp.float32) * 0.05
    w1 = jax.random.normal(ks[3], (hidden, encoder_dim), jnp.float32) * 0.05
    b1 = jax.random.normal(ks[4], (hidden,), jnp.float32) * 0.05
    w2 = jax.random.normal(ks[5], (llm_dim, hidden), jnp.float32) * 0.02
    b2 = jax.random.normal(ks[6], (llm_dim,), jnp.float32) * 0.02

    out = encoder_projector_cov1d(x, w_conv, b_conv, w1, b1, w2, b2, k=k)
    out = jax.block_until_ready(out)

    ref = _reference(x, w_conv, b_conv, w1, b1, w2, b2, k)
    assert out.shape == (B, T // k, llm_dim), out.shape

    # bf16 MXU inputs with f32 accumulation -> relative tolerance (scales with |ref|).
    max_err = float(jnp.max(jnp.abs(out.astype(jnp.float32) - ref)))
    scale = float(jnp.max(jnp.abs(ref)))
    assert max_err <= 2e-2 * scale + 2e-2, (max_err, scale)

    print("KERNEL_OK")
</pallas_src>

<mosaic_0001>
module attributes {stable_mosaic.version = 11 : i64} {
  func.func @_probe(%arg0: i32, %arg1: memref<8x128xf32, #tpu.memory_space<vmem>>, %arg2: memref<8x128xf32, #tpu.memory_space<vmem>>) attributes {dimension_semantics = [#tpu.dimension_semantics<arbitrary>], iteration_bounds = array<i64: 1>, scalar_prefetch = 0 : i64, scratch_operands = 0 : i64, tpu.core_type = #tpu.core_type<tc>, window_params = [{pipeline_mode = #tpu.pipeline_mode<synchronous>, transform_indices = @transform_0, window_bounds = array<i64: 8, 128>}, {pipeline_mode = #tpu.pipeline_mode<synchronous>, transform_indices = @transform_1, window_bounds = array<i64: 8, 128>}]} {
    %c0 = arith.constant 0 : index
    %c0_0 = arith.constant 0 : index
    %0 = vector.load %arg1[%c0, %c0_0] : memref<8x128xf32, #tpu.memory_space<vmem>>, vector<8x128xf32>
    %cst = arith.constant 1.000000e+00 : f32
    %1 = vector.broadcast %cst : f32 to vector<8x128xf32>
    %2 = arith.addf %0, %1 : vector<8x128xf32>
    %c0_1 = arith.constant 0 : index
    %c0_2 = arith.constant 0 : index
    %3 = vector.load %arg2[%c0_1, %c0_2] : memref<8x128xf32, #tpu.memory_space<vmem>>, vector<8x128xf32>
    tpu.vector_store %arg2[%c0_1, %c0_2], %2 {strides = array<i32>} : memref<8x128xf32, #tpu.memory_space<vmem>>, vector<8x128xf32>,
    return
  }
  func.func @transform_0(%arg0: i32) -> (i32, i32) {
    %c0_i32 = arith.constant 0 : i32
    %c0_i32_0 = arith.constant 0 : i32
    %c0_i32_1 = arith.constant 0 : i32
    return %c0_i32, %c0_i32_0 : i32, i32
  }
  func.func @transform_1(%arg0: i32) -> (i32, i32) {
    %c0_i32 = arith.constant 0 : i32
    %c0_i32_0 = arith.constant 0 : i32
    %c0_i32_1 = arith.constant 0 : i32
    return %c0_i32, %c0_i32_0 : i32, i32
  }
}

module attributes {stable_mosaic.version = 11 : i64} {
  func.func @projector_kernel(%arg0: i32, %arg1: memref<16x64xf32, #tpu.memory_space<vmem>>, %arg2: memref<64x256xbf16, #tpu.memory_space<vmem>>, %arg3: memref<1x256xf32, #tpu.memory_space<vmem>>, %arg4: memref<256x2048xbf16, #tpu.memory_space<vmem>>, %arg5: memref<1x2048xf32, #tpu.memory_space<vmem>>, %arg6: memref<2048x256xbf16, #tpu.memory_space<vmem>>, %arg7: memref<1x256xf32, #tpu.memory_space<vmem>>, %arg8: memref<16x256xf32, #tpu.memory_space<vmem>>) attributes {dimension_semantics = [#tpu.dimension_semantics<parallel>], iteration_bounds = array<i64: 1>, scalar_prefetch = 0 : i64, scratch_operands = 0 : i64, tpu.core_type = #tpu.core_type<tc>, window_params = [{transform_indices = @transform_0, window_bounds = array<i64: 16, 64>}, {pipeline_mode = #tpu.pipeline_mode<synchronous>, transform_indices = @transform_1, window_bounds = array<i64: 64, 256>}, {pipeline_mode = #tpu.pipeline_mode<synchronous>, transform_indices = @transform_2, window_bounds = array<i64: 1, 256>}, {pipeline_mode = #tpu.pipeline_mode<synchronous>, transform_indices = @transform_3, window_bounds = array<i64: 256, 2048>}, {pipeline_mode = #tpu.pipeline_mode<synchronous>, transform_indices = @transform_4, window_bounds = array<i64: 1, 2048>}, {pipeline_mode = #tpu.pipeline_mode<synchronous>, transform_indices = @transform_5, window_bounds = array<i64: 2048, 256>}, {pipeline_mode = #tpu.pipeline_mode<synchronous>, transform_indices = @transform_6, window_bounds = array<i64: 1, 256>}, {transform_indices = @transform_7, window_bounds = array<i64: 16, 256>}]} {
    %c0 = arith.constant 0 : index
    %c0_0 = arith.constant 0 : index
    %0 = vector.load %arg1[%c0, %c0_0] : memref<16x64xf32, #tpu.memory_space<vmem>>, vector<16x64xf32>
    %1 = arith.truncf %0 : vector<16x64xf32> to vector<16x64xbf16>
    %c0_1 = arith.constant 0 : index
    %c0_2 = arith.constant 0 : index
    %2 = vector.load %arg2[%c0_1, %c0_2] : memref<64x256xbf16, #tpu.memory_space<vmem>>, vector<64x256xbf16>
    %cst = arith.constant dense<0.000000e+00> : vector<16x256xf32>
    %3 = tpu.matmul %1, %2, %cst {dimension_numbers = #tpu.dot_dimension_numbers<[1], [0], [0], [1], [0, 0, 1, 1], [], []>} : vector<16x64xbf16>, vector<64x256xbf16>, vector<16x256xf32> -> vector<16x256xf32>
    %c0_3 = arith.constant 0 : index
    %c0_4 = arith.constant 0 : index
    %4 = vector.load %arg3[%c0_3, %c0_4] : memref<1x256xf32, #tpu.memory_space<vmem>>, vector<1x256xf32>
    %5 = vector.broadcast %4 : vector<1x256xf32> to vector<16x256xf32>
    %6 = arith.addf %3, %5 : vector<16x256xf32>
    %cst_5 = arith.constant 0.000000e+00 : f32
    %7 = vector.broadcast %cst_5 : f32 to vector<16x256xf32>
    %8 = arith.maximumf %6, %7 : vector<16x256xf32>
    %9 = arith.truncf %8 : vector<16x256xf32> to vector<16x256xbf16>
    %c0_6 = arith.constant 0 : index
    %c0_7 = arith.constant 0 : index
    %10 = vector.load %arg4[%c0_6, %c0_7] : memref<256x2048xbf16, #tpu.memory_space<vmem>>, vector<256x2048xbf16>
    %cst_8 = arith.constant dense<0.000000e+00> : vector<16x2048xf32>
    %11 = tpu.matmul %9, %10, %cst_8 {dimension_numbers = #tpu.dot_dimension_numbers<[1], [0], [0], [1], [0, 0, 1, 1], [], []>} : vector<16x256xbf16>, vector<256x2048xbf16>, vector<16x2048xf32> -> vector<16x2048xf32>
    %c0_9 = arith.constant 0 : index
    %c0_10 = arith.constant 0 : index
    %12 = vector.load %arg5[%c0_9, %c0_10] : memref<1x2048xf32, #tpu.memory_space<vmem>>, vector<1x2048xf32>
    %13 = vector.broadcast %12 : vector<1x2048xf32> to vector<16x2048xf32>
    %14 = arith.addf %11, %13 : vector<16x2048xf32>
    %cst_11 = arith.constant 0.000000e+00 : f32
    %15 = vector.broadcast %cst_11 : f32 to vector<16x2048xf32>
    %16 = arith.maximumf %14, %15 : vector<16x2048xf32>
    %17 = arith.truncf %16 : vector<16x2048xf32> to vector<16x2048xbf16>
    %c0_12 = arith.constant 0 : index
    %c0_13 = arith.constant 0 : index
    %18 = vector.load %arg6[%c0_12, %c0_13] : memref<2048x256xbf16, #tpu.memory_space<vmem>>, vector<2048x256xbf16>
    %cst_14 = arith.constant dense<0.000000e+00> : vector<16x256xf32>
    %19 = tpu.matmul %17, %18, %cst_14 {dimension_numbers = #tpu.dot_dimension_numbers<[1], [0], [0], [1], [0, 0, 1, 1], [], []>} : vector<16x2048xbf16>, vector<2048x256xbf16>, vector<16x256xf32> -> vector<16x256xf32>
    %c0_15 = arith.constant 0 : index
    %c0_16 = arith.constant 0 : index
    %20 = vector.load %arg7[%c0_15, %c0_16] : memref<1x256xf32, #tpu.memory_space<vmem>>, vector<1x256xf32>
    %21 = vector.broadcast %20 : vector<1x256xf32> to vector<16x256xf32>
    %22 = arith.addf %19, %21 : vector<16x256xf32>
    %c0_17 = arith.constant 0 : index
    %c0_18 = arith.constant 0 : index
    %23 = vector.load %arg8[%c0_17, %c0_18] : memref<16x256xf32, #tpu.memory_space<vmem>>, vector<16x256xf32>
    tpu.vector_store %arg8[%c0_17, %c0_18], %22 {strides = array<i32>} : memref<16x256xf32, #tpu.memory_space<vmem>>, vector<16x256xf32>,
    return
  }
  func.func @transform_0(%arg0: i32) -> (i32, i32) {
    %c0_i32 = arith.constant 0 : i32
    %c0_i32_0 = arith.constant 0 : i32
    return %arg0, %c0_i32 : i32, i32
  }
  func.func @transform_1(%arg0: i32) -> (i32, i32) {
    %c0_i32 = arith.constant 0 : i32
    %c0_i32_0 = arith.constant 0 : i32
    %c0_i32_1 = arith.constant 0 : i32
    return %c0_i32, %c0_i32_0 : i32, i32
  }
  func.func @transform_2(%arg0: i32) -> (i32, i32) {
    %c0_i32 = arith.constant 0 : i32
    %c0_i32_0 = arith.constant 0 : i32
    %c0_i32_1 = arith.constant 0 : i32
    return %c0_i32, %c0_i32_0 : i32, i32
  }
  func.func @transform_3(%arg0: i32) -> (i32, i32) {
    %c0_i32 = arith.constant 0 : i32
    %c0_i32_0 = arith.constant 0 : i32
    %c0_i32_1 = arith.constant 0 : i32
    return %c0_i32, %c0_i32_0 : i32, i32
  }
  func.func @transform_4(%arg0: i32) -> (i32, i32) {
    %c0_i32 = arith.constant 0 : i32
    %c0_i32_0 = arith.constant 0 : i32
    %c0_i32_1 = arith.constant 0 : i32
    return %c0_i32, %c0_i32_0 : i32, i32
  }
  func.func @transform_5(%arg0: i32) -> (i32, i32) {
    %c0_i32 = arith.constant 0 : i32
    %c0_i32_0 = arith.constant 0 : i32
    %c0_i32_1 = arith.constant 0 : i32
    return %c0_i32, %c0_i32_0 : i32, i32
  }
  func.func @transform_6(%arg0: i32) -> (i32, i32) {
    %c0_i32 = arith.constant 0 : i32
    %c0_i32_0 = arith.constant 0 : i32
    %c0_i32_1 = arith.constant 0 : i32
    return %c0_i32, %c0_i32_0 : i32, i32
  }
  func.func @transform_7(%arg0: i32) -> (i32, i32) {
    %c0_i32 = arith.constant 0 : i32
    %c0_i32_0 = arith.constant 0 : i32
    return %arg0, %c0_i32 : i32, i32
  }
}

</mosaic_0001>

<llo_original>
// kernel: tpu_custom_call.1
$region0: #{tpu_custom_call.1}
  #allocation0 [shape = 'u32[]', space=smem, size = 0x4, offset = 0x4, fixed_abs, tag = 'smem constant byte address 0x4 - core index']
  #allocation1 [shape = 'u32[72,128]{1,0:T(1,128)}', space=vmem, size = 0x9000, scoped, tag = 'internal scratch']
  %s0 = inlined_call_operand.hbm [shape: f32[8,128], index: 0, kind: input, shape index: {}]
  %s1 = inlined_call_operand.hbm [shape: f32[8,128], index: 1, kind: output, shape index: {}]
  %s2 = sld [smem:[#allocation0]]
  $region18: #{tpu_custom_call.1} parent=0
    _
  %s4 = ssub.s32 1, %s2
  %s5 = scalar_select 0, %s4, %s2
  $region1: #{tpu_custom_call.1} parent=0
    #allocation2 [shape = 'u8[4096]{0}', space=vmem, size = 0x1000, scoped, tag = 'input window, operand 0, single buffered']
    #allocation3 [shape = 's32[1]{0}', space=sflag, size = 0x4, scoped, tag = 'scoped memory for tpu_custom_call.1']
    #allocation4 [shape = 's32[1]{0}', space=sflag, size = 0x4, scoped, tag = 'scoped memory for tpu_custom_call.1']
    #allocation5 [shape = 'u8[4096]{0}', space=vmem, size = 0x1000, scoped, tag = 'output window, operand 0, single buffered']
    %6 = vsyncpa [#allocation3], 0
    %7 = vsyncpa [#allocation4], 0
    // Predicated region
    $region2: #{tpu_custom_call.1} parent=1 // pred_check
      _
    $region3: #{tpu_custom_call.1} parent=1 // pred_check_branch
      %9 = sbr.rel (0) target = $region5
    $region4: #{tpu_custom_call.1} parent=1 // pred_region
      %11 = vsyncadd [#allocation3], 0
      %s13 = sshll.u32 %s0, 4
      %s14 = int_to_ptr.hbm [resolvable:$true] %s13
      %s15 = sshll.u32 [#allocation2], 4
      %s16 = int_to_ptr.vmem [resolvable:$true] %s15
      %18 = dma.hbm_to_vmem [thread:$0]  %s14, 128, %s16, [#allocation3]
    $region5: #{tpu_custom_call.1} parent=1 // pred_fallthru
      _
    // Predicated region
    $region6: #{tpu_custom_call.1} parent=1 // pred_check
      _
    $region7: #{tpu_custom_call.1} parent=1 // pred_check_branch
      %20 = sbr.rel (0) target = $region9
    $region8: #{tpu_custom_call.1} parent=1 // pred_region
      %22 = dma.done [#allocation3], 128
    $region9: #{tpu_custom_call.1} parent=1 // pred_fallthru
      _
    %v23 = vld [vmem:[#allocation2] sm:$0xff]
    %v24 = vadd.f32 %v23, 1.0
    %25 = vst [vmem:[#allocation5] sm:$0xff] %v24
    // Predicated region
    $region10: #{tpu_custom_call.1} parent=1 // pred_check
      _
    $region11: #{tpu_custom_call.1} parent=1 // pred_check_branch
      %27 = sbr.rel (0) target = $region13
    $region12: #{tpu_custom_call.1} parent=1 // pred_region
      %29 = vsyncadd [#allocation4], 0
      %s31 = sshll.u32 [#allocation5], 4
      %s32 = int_to_ptr.vmem [resolvable:$true] %s31
      %s33 = sshll.u32 %s1, 4
      %s34 = int_to_ptr.hbm [resolvable:$true] %s33
      %36 = dma.vmem_to_hbm [thread:$0]  %s32, 128, %s34, [#allocation4]
    $region13: #{tpu_custom_call.1} parent=1 // pred_fallthru
      _
    // Predicated region
    $region14: #{tpu_custom_call.1} parent=1 // pred_check
      _
    $region15: #{tpu_custom_call.1} parent=1 // pred_check_branch
      %38 = sbr.rel (0) target = $region17
    $region16: #{tpu_custom_call.1} parent=1 // pred_region
      %40 = dma.done [#allocation4], 128
    $region17: #{tpu_custom_call.1} parent=1 // pred_fallthru
      _
    %41 = vsyncpa [#allocation3], 1
    %42 = vsyncpa [#allocation4], 1

// kernel: _forward.1
$region0: #{_forward.1}
  #allocation0 [shape = 'u32[]', space=smem, size = 0x4, offset = 0x4, fixed_abs, tag = 'smem constant byte address 0x4 - core index']
  #allocation1 [shape = 'u32[72,128]{1,0:T(1,128)}', space=vmem, size = 0x9000, scoped, tag = 'internal scratch']
  %s0 = inlined_call_operand.vmem [shape: f32[16,64], index: 0, kind: input, shape index: {}]
  %s1 = inlined_call_operand.vmem [shape: bf16[64,256], index: 1, kind: input, shape index: {}]
  %s2 = inlined_call_operand.vmem [shape: f32[1,256], index: 2, kind: input, shape index: {}]
  %s3 = inlined_call_operand.vmem [shape: bf16[256,2048], index: 3, kind: input, shape index: {}]
  %s4 = inlined_call_operand.vmem [shape: f32[1,2048], index: 4, kind: input, shape index: {}]
  %s5 = inlined_call_operand.vmem [shape: bf16[2048,256], index: 5, kind: input, shape index: {}]
  %s6 = inlined_call_operand.vmem [shape: f32[1,256], index: 6, kind: input, shape index: {}]
  %s7 = inlined_call_operand.vmem [shape: f32[16,256], index: 7, kind: output, shape index: {}]
  %s8 = sld [smem:[#allocation0]]
  $region38: #{_forward.1} parent=0
    _
  %s10 = ssub.s32 1, %s8
  %s11 = scalar_select 0, %s10, %s8
  // Predicated region
  $region2: #{_forward.1} parent=0 // pred_check
    _
  $region3: #{_forward.1} parent=0 // pred_check_branch
    %13 = sbr.rel (0) target = $region5
  $region4: #{_forward.1} parent=0 // pred_region
    _
  $region5: #{_forward.1} parent=0 // pred_fallthru
    _
  // Predicated region
  $region6: #{_forward.1} parent=0 // pred_check
    _
  $region7: #{_forward.1} parent=0 // pred_check_branch
    %15 = sbr.rel (0) target = $region9
  $region8: #{_forward.1} parent=0 // pred_region
    _
  $region9: #{_forward.1} parent=0 // pred_fallthru
    _
  // Predicated region
  $region10: #{_forward.1} parent=0 // pred_check
    _
  $region11: #{_forward.1} parent=0 // pred_check_branch
    %17 = sbr.rel (0) target = $region13
  $region12: #{_forward.1} parent=0 // pred_region
    _
  $region13: #{_forward.1} parent=0 // pred_fallthru
    _
  // Predicated region
  $region14: #{_forward.1} parent=0 // pred_check
    _
  $region15: #{_forward.1} parent=0 // pred_check_branch
    %19 = sbr.rel (0) target = $region17
  $region16: #{_forward.1} parent=0 // pred_region
    _
  $region17: #{_forward.1} parent=0 // pred_fallthru
    _
  // Predicated region
  $region18: #{_forward.1} parent=0 // pred_check
    _
  $region19: #{_forward.1} parent=0 // pred_check_branch
    %21 = sbr.rel (0) target = $region21
  $region20: #{_forward.1} parent=0 // pred_region
    _
  $region21: #{_forward.1} parent=0 // pred_fallthru
    _
  // Predicated region
  $region22: #{_forward.1} parent=0 // pred_check
    _
  $region23: #{_forward.1} parent=0 // pred_check_branch
    %23 = sbr.rel (0) target = $region25
  $region24: #{_forward.1} parent=0 // pred_region
    _
  $region25: #{_forward.1} parent=0 // pred_fallthru
    _
  // Predicated region
  $region26: #{_forward.1} parent=0 // pred_check
    _
  $region27: #{_forward.1} parent=0 // pred_check_branch
    %25 = sbr.rel (0) target = $region29
  $region28: #{_forward.1} parent=0 // pred_region
    _
  $region29: #{_forward.1} parent=0 // pred_fallthru
    _
  %v27 = vld [vmem:[%s0] sm:$0xff]
  %v28 = vld [vmem:[%s0 + $0x8] sm:$0xff]
  %v29 = vpack.c.bf16 %v28, %v27
  %v30 = vld [vmem:[%s1] sm:$0xff]
  %v31 = vld [vmem:[%s1 + $0x8] sm:$0xff]
  %v32 = vld [vmem:[%s1 + $0x10] sm:$0xff]
  %v33 = vld [vmem:[%s1 + $0x18] sm:$0xff]
  %v34 = vld [vmem:[%s1 + $0x20] sm:$0xff]
  %v35 = vld [vmem:[%s1 + $0x28] sm:$0xff]
  %v36 = vld [vmem:[%s1 + $0x30] sm:$0xff]
  %v37 = vld [vmem:[%s1 + $0x38] sm:$0xff]
  %v38 = vld [vmem:[%s2] sm:$0x3]
  %v40 = vperm.slane %v38, 0
  %v41 = vperm.slane %v38, 1
  %v52 = vunpack.c.l.b16 %v30
  %v53 = vunpack.c.h.b16 %v30
  %v54 = vunpack.c.l.b16 %v31
  %v55 = vunpack.c.h.b16 %v31
  %v56 = vunpack.c.l.b16 %v32
  %v57 = vunpack.c.h.b16 %v32
  %v58 = vunpack.c.l.b16 %v33
  %v59 = vunpack.c.h.b16 %v33
  %v60 = vunpack.c.l.b16 %v34
  %v61 = vunpack.c.h.b16 %v34
  %v62 = vunpack.c.l.b16 %v35
  %v63 = vunpack.c.h.b16 %v35
  %v64 = vunpack.c.l.b16 %v36
  %v65 = vunpack.c.h.b16 %v36
  %v66 = vunpack.c.l.b16 %v37
  %v67 = vunpack.c.h.b16 %v37
  %v68 = vpack.c.b16 %v54, %v52
  %v69 = vpack.c.b16 %v55, %v53
  %v70 = vpack.c.b16 %v58, %v56
  %v71 = vpack.c.b16 %v59, %v57
  %v72 = vpack.c.b16 %v62, %v60
  %v73 = vpack.c.b16 %v63, %v61
  %v74 = vpack.c.b16 %v66, %v64
  %v75 = vpack.c.b16 %v67, %v65
  %vm84 = vcmask 523264
  %v86 = vsel %vm84, %v29, 0
  %88 = vmatpush.bf16.msra.mxu0 0
  %89 = vmatpush.bf16.msra.mxu0 0
  %90 = vmatpush.bf16.msra.mxu0 0
  %91 = vmatpush.bf16.msra.mxu0 0
  %92 = vmatpush.bf16.msra.mxu0 %v74
  %93 = vmatpush.bf16.msra.mxu0 %v72
  %94 = vmatpush.bf16.msra.mxu0 %v70
  %95 = vmatpush.bf16.msra.mxu0 %v68
  %96 = vmatmul.bf16.gmra.mxu0 %v86
  %v97 = vpop.f32.mrf.mxu0
  %v98 = vadd.f32 %v40, %v97
  %v99 = vpop.f32.mrf.mxu0
  %v100 = vadd.f32 %v40, %v99
  %101 = vdwg.mxu0
  %102 = vmatpush.bf16.msra.mxu0 0
  %103 = vmatpush.bf16.msra.mxu0 0
  %104 = vmatpush.bf16.msra.mxu0 0
  %105 = vmatpush.bf16.msra.mxu0 0
  %106 = vmatpush.bf16.msra.mxu0 %v75
  %107 = vmatpush.bf16.msra.mxu0 %v73
  %108 = vmatpush.bf16.msra.mxu0 %v71
  %109 = vmatpush.bf16.msra.mxu0 %v69
  %110 = vmatmul.bf16.gmra.mxu0 %v86
  %v111 = vpop.f32.mrf.mxu0
  %v112 = vadd.f32 %v41, %v111
  %v113 = vpop.f32.mrf.mxu0
  %v114 = vadd.f32 %v41, %v113
  %115 = vdwg.mxu0
  %v116 = vmax.f32 %v98, 0.0
  %v117 = vmax.f32 %v112, 0.0
  %v118 = vmax.f32 %v100, 0.0
  %v119 = vmax.f32 %v114, 0.0
  %v120 = vpack.c.bf16 %v118, %v116
  %v121 = vpack.c.bf16 %v119, %v117
  %v122 = vld [vmem:[%s3] sm:$0xff]
  %v123 = vld [vmem:[%s3 + $0x8] sm:$0xff]
  %v124 = vld [vmem:[%s3 + $0x10] sm:$0xff]
  %v125 = vld [vmem:[%s3 + $0x18] sm:$0xff]
  %v126 = vld [vmem:[%s3 + $0x20] sm:$0xff]
  %v127 = vld [vmem:[%s3 + $0x28] sm:$0xff]
  %v128 = vld [vmem:[%s3 + $0x30] sm:$0xff]
  %v129 = vld [vmem:[%s3 + $0x38] sm:$0xff]
  %v130 = vld [vmem:[%s3 + $0x40] sm:$0xff]
  %v131 = vld [vmem:[%s3 + $0x48] sm:$0xff]
  %v132 = vld [vmem:[%s3 + $0x50] sm:$0xff]
  %v133 = vld [vmem:[%s3 + $0x58] sm:$0xff]
  %v134 = vld [vmem:[%s3 + $0x60] sm:$0xff]
  %v135 = vld [vmem:[%s3 + $0x68] sm:$0xff]
  %v136 = vld [vmem:[%s3 + $0x70] sm:$0xff]
  %v137 = vld [vmem:[%s3 + $0x78] sm:$0xff]
  %v138 = vld [vmem:[%s3 + $0x80] sm:$0xff]
  %v139 = vld [vmem:[%s3 + $0x88] sm:$0xff]
  %v140 = vld [vmem:[%s3 + $0x90] sm:$0xff]
  %v141 = vld [vmem:[%s3 + $0x98] sm:$0xff]
  %v142 = vld [vmem:[%s3 + $0xa0] sm:$0xff]
  %v143 = vld [vmem:[%s3 + $0xa8] sm:$0xff]
  %v144 = vld [vmem:[%s3 + $0xb0] sm:$0xff]
  %v145 = vld [vmem:[%s3 + $0xb8] sm:$0xff]
  %v146 = vld [vmem:[%s3 + $0xc0] sm:$0xff]
  %v147 = vld [vmem:[%s3 + $0xc8] sm:$0xff]
  %v148 = vld [vmem:[%s3 + $0xd0] sm:$0xff]
  %v149 = vld [vmem:[%s3 + $0xd8] sm:$0xff]
  %v150 = vld [vmem:[%s3 + $0xe0] sm:$0xff]
  %v151 = vld [vmem:[%s3 + $0xe8] sm:$0xff]
  %v152 = vld [vmem:[%s3 + $0xf0] sm:$0xff]
  %v153 = vld [vmem:[%s3 + $0xf8] sm:$0xff]
  %v154 = vld [vmem:[%s3 + $0x100] sm:$0xff]
  %v155 = vld [vmem:[%s3 + $0x108] sm:$0xff]
  %v156 = vld [vmem:[%s3 + $0x110] sm:$0xff]
  %v157 = vld [vmem:[%s3 + $0x118] sm:$0xff]
  %v158 = vld [vmem:[%s3 + $0x120] sm:$0xff]
  %v159 = vld [vmem:[%s3 + $0x128] sm:$0xff]
  %v160 = vld [vmem:[%s3 + $0x130] sm:$0xff]
  %v161 = vld [vmem:[%s3 + $0x138] sm:$0xff]
  %v162 = vld [vmem:[%s3 + $0x140] sm:$0xff]
  %v163 = vld [vmem:[%s3 + $0x148] sm:$0xff]
  %v164 = vld [vmem:[%s3 + $0x150] sm:$0xff]
  %v165 = vld [vmem:[%s3 + $0x158] sm:$0xff]
  %v166 = vld [vmem:[%s3 + $0x160] sm:$0xff]
  %v167 = vld [vmem:[%s3 + $0x168] sm:$0xff]
  %v168 = vld [vmem:[%s3 + $0x170] sm:$0xff]
  %v169 = vld [vmem:[%s3 + $0x178] sm:$0xff]
  %v170 = vld [vmem:[%s3 + $0x180] sm:$0xff]
  %v171 = vld [vmem:[%s3 + $0x188] sm:$0xff]
  %v172 = vld [vmem:[%s3 + $0x190] sm:$0xff]
  %v173 = vld [vmem:[%s3 + $0x198] sm:$0xff]
  %v174 = vld [vmem:[%s3 + $0x1a0] sm:$0xff]
  %v175 = vld [vmem:[%s3 + $0x1a8] sm:$0xff]
  %v176 = vld [vmem:[%s3 + $0x1b0] sm:$0xff]
  %v177 = vld [vmem:[%s3 + $0x1b8] sm:$0xff]
  %v178 = vld [vmem:[%s3 + $0x1c0] sm:$0xff]
  %v179 = vld [vmem:[%s3 + $0x1c8] sm:$0xff]
  %v180 = vld [vmem:[%s3 + $0x1d0] sm:$0xff]
  %v181 = vld [vmem:[%s3 + $0x1d8] sm:$0xff]
  %v182 = vld [vmem:[%s3 + $0x1e0] sm:$0xff]
  %v183 = vld [vmem:[%s3 + $0x1e8] sm:$0xff]
  %v184 = vld [vmem:[%s3 + $0x1f0] sm:$0xff]
  %v185 = vld [vmem:[%s3 + $0x1f8] sm:$0xff]
  %v186 = vld [vmem:[%s3 + $0x200] sm:$0xff]
  %v187 = vld [vmem:[%s3 + $0x208] sm:$0xff]
  %v188 = vld [vmem:[%s3 + $0x210] sm:$0xff]
  %v189 = vld [vmem:[%s3 + $0x218] sm:$0xff]
  %v190 = vld [vmem:[%s3 + $0x220] sm:$0xff]
  %v191 = vld [vmem:[%s3 + $0x228] sm:$0xff]
  %v192 = vld [vmem:[%s3 + $0x230] sm:$0xff]
  %v193 = vld [vmem:[%s3 + $0x238] sm:$0xff]
  %v194 = vld [vmem:[%s3 + $0x240] sm:$0xff]
  %v195 = vld [vmem:[%s3 + $0x248] sm:$0xff]
  %v196 = vld [vmem:[%s3 + $0x250] sm:$0xff]
  %v197 = vld [vmem:[%s3 + $0x258] sm:$0xff]
  %v198 = vld [vmem:[%s3 + $0x260] sm:$0xff]
  %v199 = vld [vmem:[%s3 + $0x268] sm:$0xff]
  %v200 = vld [vmem:[%s3 + $0x270] sm:$0xff]
  %v201 = vld [vmem:[%s3 + $0x278] sm:$0xff]
  %v202 = vld [vmem:[%s3 + $0x280] sm:$0xff]
  %v203 = vld [vmem:[%s3 + $0x288] sm:$0xff]
  %v204 = vld [vmem:[%s3 + $0x290] sm:$0xff]
  %v205 = vld [vmem:[%s3 + $0x298] sm:$0xff]
  %v206 = vld [vmem:[%s3 + $0x2a0] sm:$0xff]
  %v207 = vld [vmem:[%s3 + $0x2a8] sm:$0xff]
  %v208 = vld [vmem:[%s3 + $0x2b0] sm:$0xff]
  %v209 = vld [vmem:[%s3 + $0x2b8] sm:$0xff]
  %v210 = vld [vmem:[%s3 + $0x2c0] sm:$0xff]
  %v211 = vld [vmem:[%s3 + $0x2c8] sm:$0xff]
  %v212 = vld [vmem:[%s3 + $0x2d0] sm:$0xff]
  %v213 = vld [vmem:[%s3 + $0x2d8] sm:$0xff]
  %v214 = vld [vmem:[%s3 + $0x2e0] sm:$0xff]
  %v215 = vld [vmem:[%s3 + $0x2e8] sm:$0xff]
  %v216 = vld [vmem:[%s3 + $0x2f0] sm:$0xff]
  %v217 = vld [vmem:[%s3 + $0x2f8] sm:$0xff]
  %v218 = vld [vmem:[%s3 + $0x300] sm:$0xff]
  %v219 = vld [vmem:[%s3 + $0x308] sm:$0xff]
  %v220 = vld [vmem:[%s3 + $0x310] sm:$0xff]
  %v221 = vld [vmem:[%s3 + $0x318] sm:$0xff]
  %v222 = vld [vmem:[%s3 + $0x320] sm:$0xff]
  %v223 = vld [vmem:[%s3 + $0x328] sm:$0xff]
  %v224 = vld [vmem:[%s3 + $0x330] sm:$0xff]
  %v225 = vld [vmem:[%s3 + $0x338] sm:$0xff]
  %v226 = vld [vmem:[%s3 + $0x340] sm:$0xff]
  %v227 = vld [vmem:[%s3 + $0x348] sm:$0xff]
  %v228 = vld [vmem:[%s3 + $0x350] sm:$0xff]
  %v229 = vld [vmem:[%s3 + $0x358] sm:$0xff]
  %v230 = vld [vmem:[%s3 + $0x360] sm:$0xff]
  %v231 = vld [vmem:[%s3 + $0x368] sm:$0xff]
  %v232 = vld [vmem:[%s3 + $0x370] sm:$0xff]
  %v233 = vld [vmem:[%s3 + $0x378] sm:$0xff]
  %v234 = vld [vmem:[%s3 + $0x380] sm:$0xff]
  %v235 = vld [vmem:[%s3 + $0x388] sm:$0xff]
  %v236 = vld [vmem:[%s3 + $0x390] sm:$0xff]
  %v237 = vld [vmem:[%s3 + $0x398] sm:$0xff]
  %v238 = vld [vmem:[%s3 + $0x3a0] sm:$0xff]
  %v239 = vld [vmem:[%s3 + $0x3a8] sm:$0xff]
  %v240 = vld [vmem:[%s3 + $0x3b0] sm:$0xff]
  %v241 = vld [vmem:[%s3 + $0x3b8] sm:$0xff]
  %v242 = vld [vmem:[%s3 + $0x3c0] sm:$0xff]
  %v243 = vld [vmem:[%s3 + $0x3c8] sm:$0xff]
  %v244 = vld [vmem:[%s3 + $0x3d0] sm:$0xff]
  %v245 = vld [vmem:[%s3 + $0x3d8] sm:$0xff]
  %v246 = vld [vmem:[%s3 + $0x3e0] sm:$0xff]
  %v247 = vld [vmem:[%s3 + $0x3e8] sm:$0xff]
  %v248 = vld [vmem:[%s3 + $0x3f0] sm:$0xff]
  %v249 = vld [vmem:[%s3 + $0x3f8] sm:$0xff]
  %v250 = vld [vmem:[%s3 + $0x400] sm:$0xff]
  %v251 = vld [vmem:[%s3 + $0x408] sm:$0xff]
  %v252 = vld [vmem:[%s3 + $0x410] sm:$0xff]
  %v253 = vld [vmem:[%s3 + $0x418] sm:$0xff]
  %v254 = vld [vmem:[%s3 + $0x420] sm:$0xff]
  %v255 = vld [vmem:[%s3 + $0x428] sm:$0xff]
  %v256 = vld [vmem:[%s3 + $0x430] sm:$0xff]
  %v257 = vld [vmem:[%s3 + $0x438] sm:$0xff]
  %v258 = vld [vmem:[%s3 + $0x440] sm:$0xff]
  %v259 = vld [vmem:[%s3 + $0x448] sm:$0xff]
  %v260 = vld [vmem:[%s3 + $0x450] sm:$0xff]
  %v261 = vld [vmem:[%s3 + $0x458] sm:$0xff]
  %v262 = vld [vmem:[%s3 + $0x460] sm:$0xff]
  %v263 = vld [vmem:[%s3 + $0x468] sm:$0xff]
  %v264 = vld [vmem:[%s3 + $0x470] sm:$0xff]
  %v265 = vld [vmem:[%s3 + $0x478] sm:$0xff]
  %v266 = vld [vmem:[%s3 + $0x480] sm:$0xff]
  %v267 = vld [vmem:[%s3 + $0x488] sm:$0xff]
  %v268 = vld [vmem:[%s3 + $0x490] sm:$0xff]
  %v269 = vld [vmem:[%s3 + $0x498] sm:$0xff]
  %v270 = vld [vmem:[%s3 + $0x4a0] sm:$0xff]
  %v271 = vld [vmem:[%s3 + $0x4a8] sm:$0xff]
  %v272 = vld [vmem:[%s3 + $0x4b0] sm:$0xff]
  %v273 = vld [vmem:[%s3 + $0x4b8] sm:$0xff]
  %v274 = vld [vmem:[%s3 + $0x4c0] sm:$0xff]
  %v275 = vld [vmem:[%s3 + $0x4c8] sm:$0xff]
  %v276 = vld [vmem:[%s3 + $0x4d0] sm:$0xff]
  %v277 = vld [vmem:[%s3 + $0x4d8] sm:$0xff]
  %v278 = vld [vmem:[%s3 + $0x4e0] sm:$0xff]
  %v279 = vld [vmem:[%s3 + $0x4e8] sm:$0xff]
  %v280 = vld [vmem:[%s3 + $0x4f0] sm:$0xff]
  %v281 = vld [vmem:[%s3 + $0x4f8] sm:$0xff]
  %v282 = vld [vmem:[%s3 + $0x500] sm:$0xff]
  %v283 = vld [vmem:[%s3 + $0x508] sm:$0xff]
  %v284 = vld [vmem:[%s3 + $0x510] sm:$0xff]
  %v285 = vld [vmem:[%s3 + $0x518] sm:$0xff]
  %v286 = vld [vmem:[%s3 + $0x520] sm:$0xff]
  %v287 = vld [vmem:[%s3 + $0x528] sm:$0xff]
  %v288 = vld [vmem:[%s3 + $0x530] sm:$0xff]
  %v289 = vld [vmem:[%s3 + $0x538] sm:$0xff]
  %v290 = vld [vmem:[%s3 + $0x540] sm:$0xff]
  %v291 = vld [vmem:[%s3 + $0x548] sm:$0xff]
  %v292 = vld [vmem:[%s3 + $0x550] sm:$0xff]
  %v293 = vld [vmem:[%s3 + $0x558] sm:$0xff]
  %v294 = vld [vmem:[%s3 + $0x560] sm:$0xff]
  %v295 = vld [vmem:[%s3 + $0x568] sm:$0xff]
  %v296 = vld [vmem:[%s3 + $0x570] sm:$0xff]
  %v297 = vld [vmem:[%s3 + $0x578] sm:$0xff]
  %v298 = vld [vmem:[%s3 + $0x580] sm:$0xff]
  %v299 = vld [vmem:[%s3 + $0x588] sm:$0xff]
  %v300 = vld [vmem:[%s3 + $0x590] sm:$0xff]
  %v301 = vld [vmem:[%s3 + $0x598] sm:$0xff]
  %v302 = vld [vmem:[%s3 + $0x5a0] sm:$0xff]
  %v303 = vld [vmem:[%s3 + $0x5a8] sm:$0xff]
  %v304 = vld [vmem:[%s3 + $0x5b0] sm:$0xff]
  %v305 = vld [vmem:[%s3 + $0x5b8] sm:$0xff]
  %v306 = vld [vmem:[%s3 + $0x5c0] sm:$0xff]
  %v307 = vld [vmem:[%s3 + $0x5c8] sm:$0xff]
  %v308 = vld [vmem:[%s3 + $0x5d0] sm:$0xff]
  %v309 = vld [vmem:[%s3 + $0x5d8] sm:$0xff]
  %v310 = vld [vmem:[%s3 + $0x5e0] sm:$0xff]
  %v311 = vld [vmem:[%s3 + $0x5e8] sm:$0xff]
  %v312 = vld [vmem:[%s3 + $0x5f0] sm:$0xff]
  %v313 = vld [vmem:[%s3 + $0x5f8] sm:$0xff]
  %v314 = vld [vmem:[%s3 + $0x600] sm:$0xff]
  %v315 = vld [vmem:[%s3 + $0x608] sm:$0xff]
  %v316 = vld [vmem:[%s3 + $0x610] sm:$0xff]
  %v317 = vld [vmem:[%s3 + $0x618] sm:$0xff]
  %v318 = vld [vmem:[%s3 + $0x620] sm:$0xff]
  %v319 = vld [vmem:[%s3 + $0x628] sm:$0xff]
  %v320 = vld [vmem:[%s3 + $0x630] sm:$0xff]
  %v321 = vld [vmem:[%s3 + $0x638] sm:$0xff]
  %v322 = vld [vmem:[%s3 + $0x640] sm:$0xff]
  %v323 = vld [vmem:[%s3 + $0x648] sm:$0xff]
  %v324 = vld [vmem:[%s3 + $0x650] sm:$0xff]
  %v325 = vld [vmem:[%s3 + $0x658] sm:$0xff]
  %v326 = vld [vmem:[%s3 + $0x660] sm:$0xff]
  %v327 = vld [vmem:[%s3 + $0x668] sm:$0xff]
  %v328 = vld [vmem:[%s3 + $0x670] sm:$0xff]
  %v329 = vld [vmem:[%s3 + $0x678] sm:$0xff]
  %v330 = vld [vmem:[%s3 + $0x680] sm:$0xff]
  %v331 = vld [vmem:[%s3 + $0x688] sm:$0xff]
  %v332 = vld [vmem:[%s3 + $0x690] sm:$0xff]
  %v333 = vld [vmem:[%s3 + $0x698] sm:$0xff]
  %v334 = vld [vmem:[%s3 + $0x6a0] sm:$0xff]
  %v335 = vld [vmem:[%s3 + $0x6a8] sm:$0xff]
  %v336 = vld [vmem:[%s3 + $0x6b0] sm:$0xff]
  %v337 = vld [vmem:[%s3 + $0x6b8] sm:$0xff]
  %v338 = vld [vmem:[%s3 + $0x6c0] sm:$0xff]
  %v339 = vld [vmem:[%s3 + $0x6c8] sm:$0xff]
  %v340 = vld [vmem:[%s3 + $0x6d0] sm:$0xff]
  %v341 = vld [vmem:[%s3 + $0x6d8] sm:$0xff]
  %v342 = vld [vmem:[%s3 + $0x6e0] sm:$0xff]
  %v343 = vld [vmem:[%s3 + $0x6e8] sm:$0xff]
  %v344 = vld [vmem:[%s3 + $0x6f0] sm:$0xff]
  %v345 = vld [vmem:[%s3 + $0x6f8] sm:$0xff]
  %v346 = vld [vmem:[%s3 + $0x700] sm:$0xff]
  %v347 = vld [vmem:[%s3 + $0x708] sm:$0xff]
  %v348 = vld [vmem:[%s3 + $0x710] sm:$0xff]
  %v349 = vld [vmem:[%s3 + $0x718] sm:$0xff]
  %v350 = vld [vmem:[%s3 + $0x720] sm:$0xff]
  %v351 = vld [vmem:[%s3 + $0x728] sm:$0xff]
  %v352 = vld [vmem:[%s3 + $0x730] sm:$0xff]
  %v353 = vld [vmem:[%s3 + $0x738] sm:$0xff]
  %v354 = vld [vmem:[%s3 + $0x740] sm:$0xff]
  %v355 = vld [vmem:[%s3 + $0x748] sm:$0xff]
  %v356 = vld [vmem:[%s3 + $0x750] sm:$0xff]
  %v357 = vld [vmem:[%s3 + $0x758] sm:$0xff]
  %v358 = vld [vmem:[%s3 + $0x760] sm:$0xff]
  %v359 = vld [vmem:[%s3 + $0x768] sm:$0xff]
  %v360 = vld [vmem:[%s3 + $0x770] sm:$0xff]
  %v361 = vld [vmem:[%s3 + $0x778] sm:$0xff]
  %v362 = vld [vmem:[%s3 + $0x780] sm:$0xff]
  %v363 = vld [vmem:[%s3 + $0x788] sm:$0xff]
  %v364 = vld [vmem:[%s3 + $0x790] sm:$0xff]
  %v365 = vld [vmem:[%s3 + $0x798] sm:$0xff]
  %v366 = vld [vmem:[%s3 + $0x7a0] sm:$0xff]
  %v367 = vld [vmem:[%s3 + $0x7a8] sm:$0xff]
  %v368 = vld [vmem:[%s3 + $0x7b0] sm:$0xff]
  %v369 = vld [vmem:[%s3 + $0x7b8] sm:$0xff]
  %v370 = vld [vmem:[%s3 + $0x7c0] sm:$0xff]
  %v371 = vld [vmem:[%s3 + $0x7c8] sm:$0xff]
  %v372 = vld [vmem:[%s3 + $0x7d0] sm:$0xff]
  %v373 = vld [vmem:[%s3 + $0x7d8] sm:$0xff]
  %v374 = vld [vmem:[%s3 + $0x7e0] sm:$0xff]
  %v375 = vld [vmem:[%s3 + $0x7e8] sm:$0xff]
  %v376 = vld [vmem:[%s3 + $0x7f0] sm:$0xff]
  %v377 = vld [vmem:[%s3 + $0x7f8] sm:$0xff]
  %v378 = vld [vmem:[%s4] sm:$0xff]
  %v379 = vld [vmem:[%s4 + $0x8] sm:$0xff]
  %v382 = vperm.slane %v378, 0
  %v383 = vperm.slane %v378, 1
  %v384 = vperm.slane %v378, 2
  %v385 = vperm.slane %v378, 3
  %v386 = vperm.slane %v378, 4
  %v387 = vperm.slane %v378, 5
  %v388 = vperm.slane %v378, 6
  %v389 = vperm.slane %v378, 7
  %v390 = vperm.slane %v379, 0
  %v391 = vperm.slane %v379, 1
  %v392 = vperm.slane %v379, 2
  %v393 = vperm.slane %v379, 3
  %v394 = vperm.slane %v379, 4
  %v395 = vperm.slane %v379, 5
  %v396 = vperm.slane %v379, 6
  %v397 = vperm.slane %v379, 7
  %v670 = vunpack.c.l.b16 %v122
  %v671 = vunpack.c.h.b16 %v122
  %v672 = vunpack.c.l.b16 %v123
  %v673 = vunpack.c.h.b16 %v123
  %v674 = vunpack.c.l.b16 %v124
  %v675 = vunpack.c.h.b16 %v124
  %v676 = vunpack.c.l.b16 %v125
  %v677 = vunpack.c.h.b16 %v125
  %v678 = vunpack.c.l.b16 %v126
  %v679 = vunpack.c.h.b16 %v126
  %v680 = vunpack.c.l.b16 %v127
  %v681 = vunpack.c.h.b16 %v127
  %v682 = vunpack.c.l.b16 %v128
  %v683 = vunpack.c.h.b16 %v128
  %v684 = vunpack.c.l.b16 %v129
  %v685 = vunpack.c.h.b16 %v129
  %v686 = vunpack.c.l.b16 %v130
  %v687 = vunpack.c.h.b16 %v130
  %v688 = vunpack.c.l.b16 %v131
  %v689 = vunpack.c.h.b16 %v131
  %v690 = vunpack.c.l.b16 %v132
  %v691 = vunpack.c.h.b16 %v132
  %v692 = vunpack.c.l.b16 %v133
  %v693 = vunpack.c.h.b16 %v133
  %v694 = vunpack.c.l.b16 %v134
  %v695 = vunpack.c.h.b16 %v134
  %v696 = vunpack.c.l.b16 %v135
  %v697 = vunpack.c.h.b16 %v135
  %v698 = vunpack.c.l.b16 %v136
  %v699 = vunpack.c.h.b16 %v136
  %v700 = vunpack.c.l.b16 %v137
  %v701 = vunpack.c.h.b16 %v137
  %v702 = vunpack.c.l.b16 %v138
  %v703 = vunpack.c.h.b16 %v138
  %v704 = vunpack.c.l.b16 %v139
  %v705 = vunpack.c.h.b16 %v139
  %v706 = vunpack.c.l.b16 %v140
  %v707 = vunpack.c.h.b16 %v140
  %v708 = vunpack.c.l.b16 %v141
  %v709 = vunpack.c.h.b16 %v141
  %v710 = vunpack.c.l.b16 %v142
  %v711 = vunpack.c.h.b16 %v142
  %v712 = vunpack.c.l.b16 %v143
  %v713 = vunpack.c.h.b16 %v143
  %v714 = vunpack.c.l.b16 %v144
  %v715 = vunpack.c.h.b16 %v144
  %v716 = vunpack.c.l.b16 %v145
  %v717 = vunpack.c.h.b16 %v145
  %v718 = vunpack.c.l.b16 %v146
  %v719 = vunpack.c.h.b16 %v146
  %v720 = vunpack.c.l.b16 %v147
  %v721 = vunpack.c.h.b16 %v147
  %v722 = vunpack.c.l.b16 %v148
  %v723 = vunpack.c.h.b16 %v148
  %v724 = vunpack.c.l.b16 %v149
  %v725 = vunpack.c.h.b16 %v149
  %v726 = vunpack.c.l.b16 %v150
  %v727 = vunpack.c.h.b16 %v150
  %v728 = vunpack.c.l.b16 %v151
  %v729 = vunpack.c.h.b16 %v151
  %v730 = vunpack.c.l.b16 %v152
  %v731 = vunpack.c.h.b16 %v152
  %v732 = vunpack.c.l.b16 %v153
  %v733 = vunpack.c.h.b16 %v153
  %v734 = vunpack.c.l.b16 %v154
  %v735 = vunpack.c.h.b16 %v154
  %v736 = vunpack.c.l.b16 %v155
  %v737 = vunpack.c.h.b16 %v155
  %v738 = vunpack.c.l.b16 %v156
  %v739 = vunpack.c.h.b16 %v156
  %v740 = vunpack.c.l.b16 %v157
  %v741 = vunpack.c.h.b16 %v157
  %v742 = vunpack.c.l.b16 %v158
  %v743 = vunpack.c.h.b16 %v158
  %v744 = vunpack.c.l.b16 %v159
  %v745 = vunpack.c.h.b16 %v159
  %v746 = vunpack.c.l.b16 %v160
  %v747 = vunpack.c.h.b16 %v160
  %v748 = vunpack.c.l.b16 %v161
  %v749 = vunpack.c.h.b16 %v161
  %v750 = vunpack.c.l.b16 %v162
  %v751 = vunpack.c.h.b16 %v162
  %v752 = vunpack.c.l.b16 %v163
  %v753 = vunpack.c.h.b16 %v163
  %v754 = vunpack.c.l.b16 %v164
  %v755 = vunpack.c.h.b16 %v164
  %v756 = vunpack.c.l.b16 %v165
  %v757 = vunpack.c.h.b16 %v165
  %v758 = vunpack.c.l.b16 %v166
  %v759 = vunpack.c.h.b16 %v166
  %v760 = vunpack.c.l.b16 %v167
  %v761 = vunpack.c.h.b16 %v167
  %v762 = vunpack.c.l.b16 %v168
  %v763 = vunpack.c.h.b16 %v168
  %v764 = vunpack.c.l.b16 %v169
  %v765 = vunpack.c.h.b16 %v169
  %v766 = vunpack.c.l.b16 %v170
  %v767 = vunpack.c.h.b16 %v170
  %v768 = vunpack.c.l.b16 %v171
  %v769 = vunpack.c.h.b16 %v171
  %v770 = vunpack.c.l.b16 %v172
  %v771 = vunpack.c.h.b16 %v172
  %v772 = vunpack.c.l.b16 %v173
  %v773 = vunpack.c.h.b16 %v173
  %v774 = vunpack.c.l.b16 %v174
  %v775 = vunpack.c.h.b16 %v174
  %v776 = vunpack.c.l.b16 %v175
  %v777 = vunpack.c.h.b16 %v175
  %v778 = vunpack.c.l.b16 %v176
  %v779 = vunpack.c.h.b16 %v176
  %v780 = vunpack.c.l.b16 %v177
  %v781 = vunpack.c.h.b16 %v177
  %v782 = vunpack.c.l.b16 %v178
  %v783 = vunpack.c.h.b16 %v178
  %v784 = vunpack.c.l.b16 %v179
  %v785 = vunpack.c.h.b16 %v179
  %v786 = vunpack.c.l.b16 %v180
  %v787 = vunpack.c.h.b16 %v180
  %v788 = vunpack.c.l.b16 %v181
  %v789 = vunpack.c.h.b16 %v181
  %v790 = vunpack.c.l.b16 %v182
  %v791 = vunpack.c.h.b16 %v182
  %v792 = vunpack.c.l.b16 %v183
  %v793 = vunpack.c.h.b16 %v183
  %v794 = vunpack.c.l.b16 %v184
  %v795 = vunpack.c.h.b16 %v184
  %v796 = vunpack.c.l.b16 %v185
  %v797 = vunpack.c.h.b16 %v185
  %v798 = vunpack.c.l.b16 %v186
  %v799 = vunpack.c.h.b16 %v186
  %v800 = vunpack.c.l.b16 %v187
  %v801 = vunpack.c.h.b16 %v187
  %v802 = vunpack.c.l.b16 %v188
  %v803 = vunpack.c.h.b16 %v188
  %v804 = vunpack.c.l.b16 %v189
  %v805 = vunpack.c.h.b16 %v189
  %v806 = vunpack.c.l.b16 %v190
  %v807 = vunpack.c.h.b16 %v190
  %v808 = vunpack.c.l.b16 %v191
  %v809 = vunpack.c.h.b16 %v191
  %v810 = vunpack.c.l.b16 %v192
  %v811 = vunpack.c.h.b16 %v192
  %v812 = vunpack.c.l.b16 %v193
  %v813 = vunpack.c.h.b16 %v193
  %v814 = vunpack.c.l.b16 %v194
  %v815 = vunpack.c.h.b16 %v194
  %v816 = vunpack.c.l.b16 %v195
  %v817 = vunpack.c.h.b16 %v195
  %v818 = vunpack.c.l.b16 %v196
  %v819 = vunpack.c.h.b16 %v196
  %v820 = vunpack.c.l.b16 %v197
  %v821 = vunpack.c.h.b16 %v197
  %v822 = vunpack.c.l.b16 %v198
  %v823 = vunpack.c.h.b16 %v198
  %v824 = vunpack.c.l.b16 %v199
  %v825 = vunpack.c.h.b16 %v199
  %v826 = vunpack.c.l.b16 %v200
  %v827 = vunpack.c.h.b16 %v200
  %v828 = vunpack.c.l.b16 %v201
  %v829 = vunpack.c.h.b16 %v201
  %v830 = vunpack.c.l.b16 %v202
  %v831 = vunpack.c.h.b16 %v202
  %v832 = vunpack.c.l.b16 %v203
  %v833 = vunpack.c.h.b16 %v203
  %v834 = vunpack.c.l.b16 %v204
  %v835 = vunpack.c.h.b16 %v204
  %v836 = vunpack.c.l.b16 %v205
  %v837 = vunpack.c.h.b16 %v205
  %v838 = vunpack.c.l.b16 %v206
  %v839 = vunpack.c.h.b16 %v206
  %v840 = vunpack.c.l.b16 %v207
  %v841 = vunpack.c.h.b16 %v207
  %v842 = vunpack.c.l.b16 %v208
  %v843 = vunpack.c.h.b16 %v208
  %v844 = vunpack.c.l.b16 %v209
  %v845 = vunpack.c.h.b16 %v209
  %v846 = vunpack.c.l.b16 %v210
  %v847 = vunpack.c.h.b16 %v210
  %v848 = vunpack.c.l.b16 %v211
  %v849 = vunpack.c.h.b16 %v211
  %v850 = vunpack.c.l.b16 %v212
  %v851 = vunpack.c.h.b16 %v212
  %v852 = vunpack.c.l.b16 %v213
  %v853 = vunpack.c.h.b16 %v213
  %v854 = vunpack.c.l.b16 %v214
  %v855 = vunpack.c.h.b16 %v214
  %v856 = vunpack.c.l.b16 %v215
  %v857 = vunpack.c.h.b16 %v215
  %v858 = vunpack.c.l.b16 %v216
  %v859 = vunpack.c.h.b16 %v216
  %v860 = vunpack.c.l.b16 %v217
  %v861 = vunpack.c.h.b16 %v217
  %v862 = vunpack.c.l.b16 %v218
  %v863 = vunpack.c.h.b16 %v218
  %v864 = vunpack.c.l.b16 %v219
  %v865 = vunpack.c.h.b16 %v219
  %v866 = vunpack.c.l.b16 %v220
  %v867 = vunpack.c.h.b16 %v220
  %v868 = vunpack.c.l.b16 %v221
  %v869 = vunpack.c.h.b16 %v221
  %v870 = vunpack.c.l.b16 %v222
  %v871 = vunpack.c.h.b16 %v222
  %v872 = vunpack.c.l.b16 %v223
  %v873 = vunpack.c.h.b16 %v223
  %v874 = vunpack.c.l.b16 %v224
  %v875 = vunpack.c.h.b16 %v224
  %v876 = vunpack.c.l.b16 %v225
  %v877 = vunpack.c.h.b16 %v225
  %v878 = vunpack.c.l.b16 %v226
  %v879 = vunpack.c.h.b16 %v226
  %v880 = vunpack.c.l.b16 %v227
  %v881 = vunpack.c.h.b16 %v227
  %v882 = vunpack.c.l.b16 %v228
  %v883 = vunpack.c.h.b16 %v228
  %v884 = vunpack.c.l.b16 %v229
  %v885 = vunpack.c.h.b16 %v229
  %v886 = vunpack.c.l.b16 %v230
  %v887 = vunpack.c.h.b16 %v230
  %v888 = vunpack.c.l.b16 %v231
  %v889 = vunpack.c.h.b16 %v231
  %v890 = vunpack.c.l.b16 %v232
  %v891 = vunpack.c.h.b16 %v232
  %v892 = vunpack.c.l.b16 %v233
  %v893 = vunpack.c.h.b16 %v233
  %v894 = vunpack.c.l.b16 %v234
  %v895 = vunpack.c.h.b16 %v234
  %v896 = vunpack.c.l.b16 %v235
  %v897 = vunpack.c.h.b16 %v235
  %v898 = vunpack.c.l.b16 %v236
  %v899 = vunpack.c.h.b16 %v236
  %v900 = vunpack.c.l.b16 %v237
  %v901 = vunpack.c.h.b16 %v237
  %v902 = vunpack.c.l.b16 %v238
  %v903 = vunpack.c.h.b16 %v238
  %v904 = vunpack.c.l.b16 %v239
  %v905 = vunpack.c.h.b16 %v239
  %v906 = vunpack.c.l.b16 %v240
  %v907 = vunpack.c.h.b16 %v240
  %v908 = vunpack.c.l.b16 %v241
  %v909 = vunpack.c.h.b16 %v241
  %v910 = vunpack.c.l.b16 %v242
  %v911 = vunpack.c.h.b16 %v242
  %v912 = vunpack.c.l.b16 %v243
  %v913 = vunpack.c.h.b16 %v243
  %v914 = vunpack.c.l.b16 %v244
  %v915 = vunpack.c.h.b16 %v244
  %v916 = vunpack.c.l.b16 %v245
  %v917 = vunpack.c.h.b16 %v245
  %v918 = vunpack.c.l.b16 %v246
  %v919 = vunpack.c.h.b16 %v246
  %v920 = vunpack.c.l.b16 %v247
  %v921 = vunpack.c.h.b16 %v247
  %v922 = vunpack.c.l.b16 %v248
  %v923 = vunpack.c.h.b16 %v248
  %v924 = vunpack.c.l.b16 %v249
  %v925 = vunpack.c.h.b16 %v249
  %v926 = vunpack.c.l.b16 %v250
  %v927 = vunpack.c.h.b16 %v250
  %v928 = vunpack.c.l.b16 %v251
  %v929 = vunpack.c.h.b16 %v251
  %v930 = vunpack.c.l.b16 %v252
  %v931 = vunpack.c.h.b16 %v252
  %v932 = vunpack.c.l.b16 %v253
  %v933 = vunpack.c.h.b16 %v253
  %v934 = vunpack.c.l.b16 %v254
  %v935 = vunpack.c.h.b16 %v254
  %v936 = vunpack.c.l.b16 %v255
  %v937 = vunpack.c.h.b16 %v255
  %v938 = vunpack.c.l.b16 %v256
  %v939 = vunpack.c.h.b16 %v256
  %v940 = vunpack.c.l.b16 %v257
  %v941 = vunpack.c.h.b16 %v257
  %v942 = vunpack.c.l.b16 %v258
  %v943 = vunpack.c.h.b16 %v258
  %v944 = vunpack.c.l.b16 %v259
  %v945 = vunpack.c.h.b16 %v259
  %v946 = vunpack.c.l.b16 %v260
  %v947 = vunpack.c.h.b16 %v260
  %v948 = vunpack.c.l.b16 %v261
  %v949 = vunpack.c.h.b16 %v261
  %v950 = vunpack.c.l.b16 %v262
  %v951 = vunpack.c.h.b16 %v262
  %v952 = vunpack.c.l.b16 %v263
  %v953 = vunpack.c.h.b16 %v263
  %v954 = vunpack.c.l.b16 %v264
  %v955 = vunpack.c.h.b16 %v264
  %v956 = vunpack.c.l.b16 %v265
  %v957 = vunpack.c.h.b16 %v265
  %v958 = vunpack.c.l.b16 %v266
  %v959 = vunpack.c.h.b16 %v266
  %v960 = vunpack.c.l.b16 %v267
  %v961 = vunpack.c.h.b16 %v267
  %v962 = vunpack.c.l.b16 %v268
  %v963 = vunpack.c.h.b16 %v268
  %v964 = vunpack.c.l.b16 %v269
  %v965 = vunpack.c.h.b16 %v269
  %v966 = vunpack.c.l.b16 %v270
  %v967 = vunpack.c.h.b16 %v270
  %v968 = vunpack.c.l.b16 %v271
  %v969 = vunpack.c.h.b16 %v271
  %v970 = vunpack.c.l.b16 %v272
  %v971 = vunpack.c.h.b16 %v272
  %v972 = vunpack.c.l.b16 %v273
  %v973 = vunpack.c.h.b16 %v273
  %v974 = vunpack.c.l.b16 %v274
  %v975 = vunpack.c.h.b16 %v274
  %v976 = vunpack.c.l.b16 %v275
  %v977 = vunpack.c.h.b16 %v275
  %v978 = vunpack.c.l.b16 %v276
  %v979 = vunpack.c.h.b16 %v276
  %v980 = vunpack.c.l.b16 %v277
  %v981 = vunpack.c.h.b16 %v277
  %v982 = vunpack.c.l.b16 %v278
  %v983 = vunpack.c.h.b16 %v278
  %v984 = vunpack.c.l.b16 %v279
  %v985 = vunpack.c.h.b16 %v279
  %v986 = vunpack.c.l.b16 %v280
  %v987 = vunpack.c.h.b16 %v280
  %v988 = vunpack.c.l.b16 %v281
  %v989 = vunpack.c.h.b16 %v281
  %v990 = vunpack.c.l.b16 %v282
  %v991 = vunpack.c.h.b16 %v282
  %v992 = vunpack.c.l.b16 %v283
  %v993 = vunpack.c.h.b16 %v283
  %v994 = vunpack.c.l.b16 %v284
  %v995 = vunpack.c.h.b16 %v284
  %v996 = vunpack.c.l.b16 %v285
  %v997 = vunpack.c.h.b16 %v285
  %v998 = vunpack.c.l.b16 %v286
  %v999 = vunpack.c.h.b16 %v286
  %v1000 = vunpack.c.l.b16 %v287
  %v1001 = vunpack.c.h.b16 %v287
  %v1002 = vunpack.c.l.b16 %v288
  %v1003 = vunpack.c.h.b16 %v288
  %v1004 = vunpack.c.l.b16 %v289
  %v1005 = vunpack.c.h.b16 %v289
  %v1006 = vunpack.c.l.b16 %v290
  %v1007 = vunpack.c.h.b16 %v290
  %v1008 = vunpack.c.l.b16 %v291
  %v1009 = vunpack.c.h.b16 %v291
  %v1010 = vunpack.c.l.b16 %v292
  %v1011 = vunpack.c.h.b16 %v292
  %v1012 = vunpack.c.l.b16 %v293
  %v1013 = vunpack.c.h.b16 %v293
  %v1014 = vunpack.c.l.b16 %v294
  %v1015 = vunpack.c.h.b16 %v294
  %v1016 = vunpack.c.l.b16 %v295
  %v1017 = vunpack.c.h.b16 %v295
  %v1018 = vunpack.c.l.b16 %v296
  %v1019 = vunpack.c.h.b16 %v296
  %v1020 = vunpack.c.l.b16 %v297
  %v1021 = vunpack.c.h.b16 %v297
  %v1022 = vunpack.c.l.b16 %v298
  %v1023 = vunpack.c.h.b16 %v298
  %v1024 = vunpack.c.l.b16 %v299
  %v1025 = vunpack.c.h.b16 %v299
  %v1026 = vunpack.c.l.b16 %v300
  %v1027 = vunpack.c.h.b16 %v300
  %v1028 = vunpack.c.l.b16 %v301
  %v1029 = vunpack.c.h.b16 %v301
  %v1030 = vunpack.c.l.b16 %v302
  %v1031 = vunpack.c.h.b16 %v302
  %v1032 = vunpack.c.l.b16 %v303
  %v1033 = vunpack.c.h.b16 %v303
  %v1034 = vunpack.c.l.b16 %v304
  %v1035 = vunpack.c.h.b16 %v304
  %v1036 = vunpack.c.l.b16 %v305
  %v1037 = vunpack.c.h.b16 %v305
  %v1038 = vunpack.c.l.b16 %v306
  %v1039 = vunpack.c.h.b16 %v306
  %v1040 = vunpack.c.l.b16 %v307
  %v1041 = vunpack.c.h.b16 %v307
  %v1042 = vunpack.c.l.b16 %v308
  %v1043 = vunpack.c.h.b16 %v308
  %v1044 = vunpack.c.l.b16 %v309
  %v1045 = vunpack.c.h.b16 %v309
  %v1046 = vunpack.c.l.b16 %v310
  %v1047 = vunpack.c.h.b16 %v310
  %v1048 = vunpack.c.l.b16 %v311
  %v1049 = vunpack.c.h.b16 %v311
  %v1050 = vunpack.c.l.b16 %v312
  %v1051 = vunpack.c.h.b16 %v312
  %v1052 = vunpack.c.l.b16 %v313
  %v1053 = vunpack.c.h.b16 %v313
  %v1054 = vunpack.c.l.b16 %v314
  %v1055 = vunpack.c.h.b16 %v314
  %v1056 = vunpack.c.l.b16 %v315
  %v1057 = vunpack.c.h.b16 %v315
  %v1058 = vunpack.c.l.b16 %v316
  %v1059 = vunpack.c.h.b16 %v316
  %v1060 = vunpack.c.l.b16 %v317
  %v1061 = vunpack.c.h.b16 %v317
  %v1062 = vunpack.c.l.b16 %v318
  %v1063 = vunpack.c.h.b16 %v318
  %v1064 = vunpack.c.l.b16 %v319
  %v1065 = vunpack.c.h.b16 %v319
  %v1066 = vunpack.c.l.b16 %v320
  %v1067 = vunpack.c.h.b16 %v320
  %v1068 = vunpack.c.l.b16 %v321
  %v1069 = vunpack.c.h.b16 %v321
  %v1070 = vunpack.c.l.b16 %v322
  %v1071 = vunpack.c.h.b16 %v322
  %v1072 = vunpack.c.l.b16 %v323
  %v1073 = vunpack.c.h.b16 %v323
  %v1074 = vunpack.c.l.b16 %v324
  %v1075 = vunpack.c.h.b16 %v324
  %v1076 = vunpack.c.l.b16 %v325
  %v1077 = vunpack.c.h.b16 %v325
  %v1078 = vunpack.c.l.b16 %v326
  %v1079 = vunpack.c.h.b16 %v326
  %v1080 = vunpack.c.l.b16 %v327
  %v1081 = vunpack.c.h.b16 %v327
  %v1082 = vunpack.c.l.b16 %v328
  %v1083 = vunpack.c.h.b16 %v328
  %v1084 = vunpack.c.l.b16 %v329
  %v1085 = vunpack.c.h.b16 %v329
  %v1086 = vunpack.c.l.b16 %v330
  %v1087 = vunpack.c.h.b16 %v330
  %v1088 = vunpack.c.l.b16 %v331
  %v1089 = vunpack.c.h.b16 %v331
  %v1090 = vunpack.c.l.b16 %v332
  %v1091 = vunpack.c.h.b16 %v332
  %v1092 = vunpack.c.l.b16 %v333
  %v1093 = vunpack.c.h.b16 %v333
  %v1094 = vunpack.c.l.b16 %v334
  %v1095 = vunpack.c.h.b16 %v334
  %v1096 = vunpack.c.l.b16 %v335
  %v1097 = vunpack.c.h.b16 %v335
  %v1098 = vunpack.c.l.b16 %v336
  %v1099 = vunpack.c.h.b16 %v336
  %v1100 = vunpack.c.l.b16 %v337
  %v1101 = vunpack.c.h.b16 %v337
  %v1102 = vunpack.c.l.b16 %v338
  %v1103 = vunpack.c.h.b16 %v338
  %v1104 = vunpack.c.l.b16 %v339
  %v1105 = vunpack.c.h.b16 %v339
  %v1106 = vunpack.c.l.b16 %v340
  %v1107 = vunpack.c.h.b16 %v340
  %v1108 = vunpack.c.l.b16 %v341
  %v1109 = vunpack.c.h.b16 %v341
  %v1110 = vunpack.c.l.b16 %v342
  %v1111 = vunpack.c.h.b16 %v342
  %v1112 = vunpack.c.l.b16 %v343
  %v1113 = vunpack.c.h.b16 %v343
  %v1114 = vunpack.c.l.b16 %v344
  %v1115 = vunpack.c.h.b16 %v344
  %v1116 = vunpack.c.l.b16 %v345
  %v1117 = vunpack.c.h.b16 %v345
  %v1118 = vunpack.c.l.b16 %v346
  %v1119 = vunpack.c.h.b16 %v346
  %v1120 = vunpack.c.l.b16 %v347
  %v1121 = vunpack.c.h.b16 %v347
  %v1122 = vunpack.c.l.b16 %v348
  %v1123 = vunpack.c.h.b16 %v348
  %v1124 = vunpack.c.l.b16 %v349
  %v1125 = vunpack.c.h.b16 %v349
  %v1126 = vunpack.c.l.b16 %v350
  %v1127 = vunpack.c.h.b16 %v350
  %v1128 = vunpack.c.l.b16 %v351
  %v1129 = vunpack.c.h.b16 %v351
  %v1130 = vunpack.c.l.b16 %v352
  %v1131 = vunpack.c.h.b16 %v352
  %v1132 = vunpack.c.l.b16 %v353
  %v1133 = vunpack.c.h.b16 %v353
  %v1134 = vunpack.c.l.b16 %v354
  %v1135 = vunpack.c.h.b16 %v354
  %v1136 = vunpack.c.l.b16 %v355
  %v1137 = vunpack.c.h.b16 %v355
  %v1138 = vunpack.c.l.b16 %v356
  %v1139 = vunpack.c.h.b16 %v356
  %v1140 = vunpack.c.l.b16 %v357
  %v1141 = vunpack.c.h.b16 %v357
  %v1142 = vunpack.c.l.b16 %v358
  %v1143 = vunpack.c.h.b16 %v358
  %v1144 = vunpack.c.l.b16 %v359
  %v1145 = vunpack.c.h.b16 %v359
  %v1146 = vunpack.c.l.b16 %v360
  %v1147 = vunpack.c.h.b16 %v360
  %v1148 = vunpack.c.l.b16 %v361
  %v1149 = vunpack.c.h.b16 %v361
  %v1150 = vunpack.c.l.b16 %v362
  %v1151 = vunpack.c.h.b16 %v362
  %v1152 = vunpack.c.l.b16 %v363
  %v1153 = vunpack.c.h.b16 %v363
  %v1154 = vunpack.c.l.b16 %v364
  %v1155 = vunpack.c.h.b16 %v364
  %v1156 = vunpack.c.l.b16 %v365
  %v1157 = vunpack.c.h.b16 %v365
  %v1158 = vunpack.c.l.b16 %v366
  %v1159 = vunpack.c.h.b16 %v366
  %v1160 = vunpack.c.l.b16 %v367
  %v1161 = vunpack.c.h.b16 %v367
  %v1162 = vunpack.c.l.b16 %v368
  %v1163 = vunpack.c.h.b16 %v368
  %v1164 = vunpack.c.l.b16 %v369
  %v1165 = vunpack.c.h.b16 %v369
  %v1166 = vunpack.c.l.b16 %v370
  %v1167 = vunpack.c.h.b16 %v370
  %v1168 = vunpack.c.l.b16 %v371
  %v1169 = vunpack.c.h.b16 %v371
  %v1170 = vunpack.c.l.b16 %v372
  %v1171 = vunpack.c.h.b16 %v372
  %v1172 = vunpack.c.l.b16 %v373
  %v1173 = vunpack.c.h.b16 %v373
  %v1174 = vunpack.c.l.b16 %v374
  %v1175 = vunpack.c.h.b16 %v374
  %v1176 = vunpack.c.l.b16 %v375
  %v1177 = vunpack.c.h.b16 %v375
  %v1178 = vunpack.c.l.b16 %v376
  %v1179 = vunpack.c.h.b16 %v376
  %v1180 = vunpack.c.l.b16 %v377
  %v1181 = vunpack.c.h.b16 %v377
  %v1182 = vpack.c.b16 %v686, %v670
  %v1183 = vpack.c.b16 %v687, %v671
  %v1184 = vpack.c.b16 %v688, %v672
  %v1185 = vpack.c.b16 %v689, %v673
  %v1186 = vpack.c.b16 %v690, %v674
  %v1187 = vpack.c.b16 %v691, %v675
  %v1188 = vpack.c.b16 %v692, %v676
  %v1189 = vpack.c.b16 %v693, %v677
  %v1190 = vpack.c.b16 %v694, %v678
  %v1191 = vpack.c.b16 %v695, %v679
  %v1192 = vpack.c.b16 %v696, %v680
  %v1193 = vpack.c.b16 %v697, %v681
  %v1194 = vpack.c.b16 %v698, %v682
  %v1195 = vpack.c.b16 %v699, %v683
  %v1196 = vpack.c.b16 %v700, %v684
  %v1197 = vpack.c.b16 %v701, %v685
  %v1198 = vpack.c.b16 %v718, %v702
  %v1199 = vpack.c.b16 %v719, %v703
  %v1200 = vpack.c.b16 %v720, %v704
  %v1201 = vpack.c.b16 %v721, %v705
  %v1202 = vpack.c.b16 %v722, %v706
  %v1203 = vpack.c.b16 %v723, %v707
  %v1204 = vpack.c.b16 %v724, %v708
  %v1205 = vpack.c.b16 %v725, %v709
  %v1206 = vpack.c.b16 %v726, %v710
  %v1207 = vpack.c.b16 %v727, %v711
  %v1208 = vpack.c.b16 %v728, %v712
  %v1209 = vpack.c.b16 %v729, %v713
  %v1210 = vpack.c.b16 %v730, %v714
  %v1211 = vpack.c.b16 %v731, %v715
  %v1212 = vpack.c.b16 %v732, %v716
  %v1213 = vpack.c.b16 %v733, %v717
  %v1214 = vpack.c.b16 %v750, %v734
  %v1215 = vpack.c.b16 %v751, %v735
  %v1216 = vpack.c.b16 %v752, %v736
  %v1217 = vpack.c.b16 %v753, %v737
  %v1218 = vpack.c.b16 %v754, %v738
  %v1219 = vpack.c.b16 %v755, %v739
  %v1220 = vpack.c.b16 %v756, %v740
  %v1221 = vpack.c.b16 %v757, %v741
  %v1222 = vpack.c.b16 %v758, %v742
  %v1223 = vpack.c.b16 %v759, %v743
  %v1224 = vpack.c.b16 %v760, %v744
  %v1225 = vpack.c.b16 %v761, %v745
  %v1226 = vpack.c.b16 %v762, %v746
  %v1227 = vpack.c.b16 %v763, %v747
  %v1228 = vpack.c.b16 %v764, %v748
  %v1229 = vpack.c.b16 %v765, %v749
  %v1230 = vpack.c.b16 %v782, %v766
  %v1231 = vpack.c.b16 %v783, %v767
  %v1232 = vpack.c.b16 %v784, %v768
  %v1233 = vpack.c.b16 %v785, %v769
  %v1234 = vpack.c.b16 %v786, %v770
  %v1235 = vpack.c.b16 %v787, %v771
  %v1236 = vpack.c.b16 %v788, %v772
  %v1237 = vpack.c.b16 %v789, %v773
  %v1238 = vpack.c.b16 %v790, %v774
  %v1239 = vpack.c.b16 %v791, %v775
  %v1240 = vpack.c.b16 %v792, %v776
  %v1241 = vpack.c.b16 %v793, %v777
  %v1242 = vpack.c.b16 %v794, %v778
  %v1243 = vpack.c.b16 %v795, %v779
  %v1244 = vpack.c.b16 %v796, %v780
  %v1245 = vpack.c.b16 %v797, %v781
  %v1246 = vpack.c.b16 %v814, %v798
  %v1247 = vpack.c.b16 %v815, %v799
  %v1248 = vpack.c.b16 %v816, %v800
  %v1249 = vpack.c.b16 %v817, %v801
  %v1250 = vpack.c.b16 %v818, %v802
  %v1251 = vpack.c.b16 %v819, %v803
  %v1252 = vpack.c.b16 %v820, %v804
  %v1253 = vpack.c.b16 %v821, %v805
  %v1254 = vpack.c.b16 %v822, %v806
  %v1255 = vpack.c.b16 %v823, %v807
  %v1256 = vpack.c.b16 %v824, %v808
  %v1257 = vpack.c.b16 %v825, %v809
  %v1258 = vpack.c.b16 %v826, %v810
  %v1259 = vpack.c.b16 %v827, %v811
  %v1260 = vpack.c.b16 %v828, %v812
  %v1261 = vpack.c.b16 %v829, %v813
  %v1262 = vpack.c.b16 %v846, %v830
  %v1263 = vpack.c.b16 %v847, %v831
  %v1264 = vpack.c.b16 %v848, %v832
  %v1265 = vpack.c.b16 %v849, %v833
  %v1266 = vpack.c.b16 %v850, %v834
  %v1267 = vpack.c.b16 %v851, %v835
  %v1268 = vpack.c.b16 %v852, %v836
  %v1269 = vpack.c.b16 %v853, %v837
  %v1270 = vpack.c.b16 %v854, %v838
  %v1271 = vpack.c.b16 %v855, %v839
  %v1272 = vpack.c.b16 %v856, %v840
  %v1273 = vpack.c.b16 %v857, %v841
  %v1274 = vpack.c.b16 %v858, %v842
  %v1275 = vpack.c.b16 %v859, %v843
  %v1276 = vpack.c.b16 %v860, %v844
  %v1277 = vpack.c.b16 %v861, %v845
  %v1278 = vpack.c.b16 %v878, %v862
  %v1279 = vpack.c.b16 %v879, %v863
  %v1280 = vpack.c.b16 %v880, %v864
  %v1281 = vpack.c.b16 %v881, %v865
  %v1282 = vpack.c.b16 %v882, %v866
  %v1283 = vpack.c.b16 %v883, %v867
  %v1284 = vpack.c.b16 %v884, %v868
  %v1285 = vpack.c.b16 %v885, %v869
  %v1286 = vpack.c.b16 %v886, %v870
  %v1287 = vpack.c.b16 %v887, %v871
  %v1288 = vpack.c.b16 %v888, %v872
  %v1289 = vpack.c.b16 %v889, %v873
  %v1290 = vpack.c.b16 %v890, %v874
  %v1291 = vpack.c.b16 %v891, %v875
  %v1292 = vpack.c.b16 %v892, %v876
  %v1293 = vpack.c.b16 %v893, %v877
  %v1294 = vpack.c.b16 %v910, %v894
  %v1295 = vpack.c.b16 %v911, %v895
  %v1296 = vpack.c.b16 %v912, %v896
  %v1297 = vpack.c.b16 %v913, %v897
  %v1298 = vpack.c.b16 %v914, %v898
  %v1299 = vpack.c.b16 %v915, %v899
  %v1300 = vpack.c.b16 %v916, %v900
  %v1301 = vpack.c.b16 %v917, %v901
  %v1302 = vpack.c.b16 %v918, %v902
  %v1303 = vpack.c.b16 %v919, %v903
  %v1304 = vpack.c.b16 %v920, %v904
  %v1305 = vpack.c.b16 %v921, %v905
  %v1306 = vpack.c.b16 %v922, %v906
  %v1307 = vpack.c.b16 %v923, %v907
  %v1308 = vpack.c.b16 %v924, %v908
  %v1309 = vpack.c.b16 %v925, %v909
  %v1310 = vpack.c.b16 %v942, %v926
  %v1311 = vpack.c.b16 %v943, %v927
  %v1312 = vpack.c.b16 %v944, %v928
  %v1313 = vpack.c.b16 %v945, %v929
  %v1314 = vpack.c.b16 %v946, %v930
  %v1315 = vpack.c.b16 %v947, %v931
  %v1316 = vpack.c.b16 %v948, %v932
  %v1317 = vpack.c.b16 %v949, %v933
  %v1318 = vpack.c.b16 %v950, %v934
  %v1319 = vpack.c.b16 %v951, %v935
  %v1320 = vpack.c.b16 %v952, %v936
  %v1321 = vpack.c.b16 %v953, %v937
  %v1322 = vpack.c.b16 %v954, %v938
  %v1323 = vpack.c.b16 %v955, %v939
  %v1324 = vpack.c.b16 %v956, %v940
  %v1325 = vpack.c.b16 %v957, %v941
  %v1326 = vpack.c.b16 %v974, %v958
  %v1327 = vpack.c.b16 %v975, %v959
  %v1328 = vpack.c.b16 %v976, %v960
  %v1329 = vpack.c.b16 %v977, %v961
  %v1330 = vpack.c.b16 %v978, %v962
  %v1331 = vpack.c.b16 %v979, %v963
  %v1332 = vpack.c.b16 %v980, %v964
  %v1333 = vpack.c.b16 %v981, %v965
  %v1334 = vpack.c.b16 %v982, %v966
  %v1335 = vpack.c.b16 %v983, %v967
  %v1336 = vpack.c.b16 %v984, %v968
  %v1337 = vpack.c.b16 %v985, %v969
  %v1338 = vpack.c.b16 %v986, %v970
  %v1339 = vpack.c.b16 %v987, %v971
  %v1340 = vpack.c.b16 %v988, %v972
  %v1341 = vpack.c.b16 %v989, %v973
  %v1342 = vpack.c.b16 %v1006, %v990
  %v1343 = vpack.c.b16 %v1007, %v991
  %v1344 = vpack.c.b16 %v1008, %v992
  %v1345 = vpack.c.b16 %v1009, %v993
  %v1346 = vpack.c.b16 %v1010, %v994
  %v1347 = vpack.c.b16 %v1011, %v995
  %v1348 = vpack.c.b16 %v1012, %v996
  %v1349 = vpack.c.b16 %v1013, %v997
  %v1350 = vpack.c.b16 %v1014, %v998
  %v1351 = vpack.c.b16 %v1015, %v999
  %v1352 = vpack.c.b16 %v1016, %v1000
  %v1353 = vpack.c.b16 %v1017, %v1001
  %v1354 = vpack.c.b16 %v1018, %v1002
  %v1355 = vpack.c.b16 %v1019, %v1003
  %v1356 = vpack.c.b16 %v1020, %v1004
  %v1357 = vpack.c.b16 %v1021, %v1005
  %v1358 = vpack.c.b16 %v1038, %v1022
  %v1359 = vpack.c.b16 %v1039, %v1023
  %v1360 = vpack.c.b16 %v1040, %v1024
  %v1361 = vpack.c.b16 %v1041, %v1025
  %v1362 = vpack.c.b16 %v1042, %v1026
  %v1363 = vpack.c.b16 %v1043, %v1027
  %v1364 = vpack.c.b16 %v1044, %v1028
  %v1365 = vpack.c.b16 %v1045, %v1029
  %v1366 = vpack.c.b16 %v1046, %v1030
  %v1367 = vpack.c.b16 %v1047, %v1031
  %v1368 = vpack.c.b16 %v1048, %v1032
  %v1369 = vpack.c.b16 %v1049, %v1033
  %v1370 = vpack.c.b16 %v1050, %v1034
  %v1371 = vpack.c.b16 %v1051, %v1035
  %v1372 = vpack.c.b16 %v1052, %v1036
  %v1373 = vpack.c.b16 %v1053, %v1037
  %v1374 = vpack.c.b16 %v1070, %v1054
  %v1375 = vpack.c.b16 %v1071, %v1055
  %v1376 = vpack.c.b16 %v1072, %v1056
  %v1377 = vpack.c.b16 %v1073, %v1057
  %v1378 = vpack.c.b16 %v1074, %v1058
  %v1379 = vpack.c.b16 %v1075, %v1059
  %v1380 = vpack.c.b16 %v1076, %v1060
  %v1381 = vpack.c.b16 %v1077, %v1061
  %v1382 = vpack.c.b16 %v1078, %v1062
  %v1383 = vpack.c.b16 %v1079, %v1063
  %v1384 = vpack.c.b16 %v1080, %v1064
  %v1385 = vpack.c.b16 %v1081, %v1065
  %v1386 = vpack.c.b16 %v1082, %v1066
  %v1387 = vpack.c.b16 %v1083, %v1067
  %v1388 = vpack.c.b16 %v1084, %v1068
  %v1389 = vpack.c.b16 %v1085, %v1069
  %v1390 = vpack.c.b16 %v1102, %v1086
  %v1391 = vpack.c.b16 %v1103, %v1087
  %v1392 = vpack.c.b16 %v1104, %v1088
  %v1393 = vpack.c.b16 %v1105, %v1089
  %v1394 = vpack.c.b16 %v1106, %v1090
  %v1395 = vpack.c.b16 %v1107, %v1091
  %v1396 = vpack.c.b16 %v1108, %v1092
  %v1397 = vpack.c.b16 %v1109, %v1093
  %v1398 = vpack.c.b16 %v1110, %v1094
  %v1399 = vpack.c.b16 %v1111, %v1095
  %v1400 = vpack.c.b16 %v1112, %v1096
  %v1401 = vpack.c.b16 %v1113, %v1097
  %v1402 = vpack.c.b16 %v1114, %v1098
  %v1403 = vpack.c.b16 %v1115, %v1099
  %v1404 = vpack.c.b16 %v1116, %v1100
  %v1405 = vpack.c.b16 %v1117, %v1101
  %v1406 = vpack.c.b16 %v1134, %v1118
  %v1407 = vpack.c.b16 %v1135, %v1119
  %v1408 = vpack.c.b16 %v1136, %v1120
  %v1409 = vpack.c.b16 %v1137, %v1121
  %v1410 = vpack.c.b16 %v1138, %v1122
  %v1411 = vpack.c.b16 %v1139, %v1123
  %v1412 = vpack.c.b16 %v1140, %v1124
  %v1413 = vpack.c.b16 %v1141, %v1125
  %v1414 = vpack.c.b16 %v1142, %v1126
  %v1415 = vpack.c.b16 %v1143, %v1127
  %v1416 = vpack.c.b16 %v1144, %v1128
  %v1417 = vpack.c.b16 %v1145, %v1129
  %v1418 = vpack.c.b16 %v1146, %v1130
  %v1419 = vpack.c.b16 %v1147, %v1131
  %v1420 = vpack.c.b16 %v1148, %v1132
  %v1421 = vpack.c.b16 %v1149, %v1133
  %v1422 = vpack.c.b16 %v1166, %v1150
  %v1423 = vpack.c.b16 %v1167, %v1151
  %v1424 = vpack.c.b16 %v1168, %v1152
  %v1425 = vpack.c.b16 %v1169, %v1153
  %v1426 = vpack.c.b16 %v1170, %v1154
  %v1427 = vpack.c.b16 %v1171, %v1155
  %v1428 = vpack.c.b16 %v1172, %v1156
  %v1429 = vpack.c.b16 %v1173, %v1157
  %v1430 = vpack.c.b16 %v1174, %v1158
  %v1431 = vpack.c.b16 %v1175, %v1159
  %v1432 = vpack.c.b16 %v1176, %v1160
  %v1433 = vpack.c.b16 %v1177, %v1161
  %v1434 = vpack.c.b16 %v1178, %v1162
  %v1435 = vpack.c.b16 %v1179, %v1163
  %v1436 = vpack.c.b16 %v1180, %v1164
  %v1437 = vpack.c.b16 %v1181, %v1165
  %1694 = vmatpush.bf16.msra.mxu0 %v1294
  %1695 = vmatpush.bf16.msra.mxu0 %v1278
  %1696 = vmatpush.bf16.msra.mxu0 %v1262
  %1697 = vmatpush.bf16.msra.mxu0 %v1246
  %1698 = vmatpush.bf16.msra.mxu0 %v1230
  %1699 = vmatpush.bf16.msra.mxu0 %v1214
  %1700 = vmatpush.bf16.msra.mxu0 %v1198
  %1701 = vmatpush.bf16.msra.mxu0 %v1182
  %1702 = vmatmul.bf16.gmra.mxu0 %v120
  %v1703 = vpop.f32.mrf.mxu0
  %v1704 = vadd.f32 %v382, %v1703
  %v1705 = vpop.f32.mrf.mxu0
  %v1706 = vadd.f32 %v382, %v1705
  %1707 = vdwg.mxu0
  %1708 = vmatpush.bf16.msra.mxu0 %v1422
  %1709 = vmatpush.bf16.msra.mxu0 %v1406
  %1710 = vmatpush.bf16.msra.mxu0 %v1390
  %1711 = vmatpush.bf16.msra.mxu0 %v1374
  %1712 = vmatpush.bf16.msra.mxu0 %v1358
  %1713 = vmatpush.bf16.msra.mxu0 %v1342
  %1714 = vmatpush.bf16.msra.mxu0 %v1326
  %1715 = vmatpush.bf16.msra.mxu0 %v1310
  %1716 = vmatmul.bf16.gmra.mxu0 %v121
  %v1717 = vpop.f32.mrf.mxu0
  %v1718 = vadd.f32 %v1704, %v1717
  %v1719 = vpop.f32.mrf.mxu0
  %v1720 = vadd.f32 %v1706, %v1719
  %1721 = vdwg.mxu0
  %1722 = vmatpush.bf16.msra.mxu0 %v1295
  %1723 = vmatpush.bf16.msra.mxu0 %v1279
  %1724 = vmatpush.bf16.msra.mxu0 %v1263
  %1725 = vmatpush.bf16.msra.mxu0 %v1247
  %1726 = vmatpush.bf16.msra.mxu0 %v1231
  %1727 = vmatpush.bf16.msra.mxu0 %v1215
  %1728 = vmatpush.bf16.msra.mxu0 %v1199
  %1729 = vmatpush.bf16.msra.mxu0 %v1183
  %1730 = vmatmul.bf16.gmra.mxu0 %v120
  %v1731 = vpop.f32.mrf.mxu0
  %v1732 = vadd.f32 %v383, %v1731
  %v1733 = vpop.f32.mrf.mxu0
  %v1734 = vadd.f32 %v383, %v1733
  %1735 = vdwg.mxu0
  %1736 = vmatpush.bf16.msra.mxu0 %v1423
  %1737 = vmatpush.bf16.msra.mxu0 %v1407
  %1738 = vmatpush.bf16.msra.mxu0 %v1391
  %1739 = vmatpush.bf16.msra.mxu0 %v1375
  %1740 = vmatpush.bf16.msra.mxu0 %v1359
  %1741 = vmatpush.bf16.msra.mxu0 %v1343
  %1742 = vmatpush.bf16.msra.mxu0 %v1327
  %1743 = vmatpush.bf16.msra.mxu0 %v1311
  %1744 = vmatmul.bf16.gmra.mxu0 %v121
  %v1745 = vpop.f32.mrf.mxu0
  %v1746 = vadd.f32 %v1732, %v1745
  %v1747 = vpop.f32.mrf.mxu0
  %v1748 = vadd.f32 %v1734, %v1747
  %1749 = vdwg.mxu0
  %1750 = vmatpush.bf16.msra.mxu0 %v1296
  %1751 = vmatpush.bf16.msra.mxu0 %v1280
  %1752 = vmatpush.bf16.msra.mxu0 %v1264
  %1753 = vmatpush.bf16.msra.mxu0 %v1248
  %1754 = vmatpush.bf16.msra.mxu0 %v1232
  %1755 = vmatpush.bf16.msra.mxu0 %v1216
  %1756 = vmatpush.bf16.msra.mxu0 %v1200
  %1757 = vmatpush.bf16.msra.mxu0 %v1184
  %1758 = vmatmul.bf16.gmra.mxu0 %v120
  %v1759 = vpop.f32.mrf.mxu0
  %v1760 = vadd.f32 %v384, %v1759
  %v1761 = vpop.f32.mrf.mxu0
  %v1762 = vadd.f32 %v384, %v1761
  %1763 = vdwg.mxu0
  %1764 = vmatpush.bf16.msra.mxu0 %v1424
  %1765 = vmatpush.bf16.msra.mxu0 %v1408
  %1766 = vmatpush.bf16.msra.mxu0 %v1392
  %1767 = vmatpush.bf16.msra.mxu0 %v1376
  %1768 = vmatpush.bf16.msra.mxu0 %v1360
  %1769 = vmatpush.bf16.msra.mxu0 %v1344
  %1770 = vmatpush.bf16.msra.mxu0 %v1328
  %1771 = vmatpush.bf16.msra.mxu0 %v1312
  %1772 = vmatmul.bf16.gmra.mxu0 %v121
  %v1773 = vpop.f32.mrf.mxu0
  %v1774 = vadd.f32 %v1760, %v1773
  %v1775 = vpop.f32.mrf.mxu0
  %v1776 = vadd.f32 %v1762, %v1775
  %1777 = vdwg.mxu0
  %1778 = vmatpush.bf16.msra.mxu0 %v1297
  %1779 = vmatpush.bf16.msra.mxu0 %v1281
  %1780 = vmatpush.bf16.msra.mxu0 %v1265
  %1781 = vmatpush.bf16.msra.mxu0 %v1249
  %1782 = vmatpush.bf16.msra.mxu0 %v1233
  %1783 = vmatpush.bf16.msra.mxu0 %v1217
  %1784 = vmatpush.bf16.msra.mxu0 %v1201
  %1785 = vmatpush.bf16.msra.mxu0 %v1185
  %1786 = vmatmul.bf16.gmra.mxu0 %v120
  %v1787 = vpop.f32.mrf.mxu0
  %v1788 = vadd.f32 %v385, %v1787
  %v1789 = vpop.f32.mrf.mxu0
  %v1790 = vadd.f32 %v385, %v1789
  %1791 = vdwg.mxu0
  %1792 = vmatpush.bf16.msra.mxu0 %v1425
  %1793 = vmatpush.bf16.msra.mxu0 %v1409
  %1794 = vmatpush.bf16.msra.mxu0 %v1393
  %1795 = vmatpush.bf16.msra.mxu0 %v1377
  %1796 = vmatpush.bf16.msra.mxu0 %v1361
  %1797 = vmatpush.bf16.msra.mxu0 %v1345
  %1798 = vmatpush.bf16.msra.mxu0 %v1329
  %1799 = vmatpush.bf16.msra.mxu0 %v1313
  %1800 = vmatmul.bf16.gmra.mxu0 %v121
  %v1801 = vpop.f32.mrf.mxu0
  %v1802 = vadd.f32 %v1788, %v1801
  %v1803 = vpop.f32.mrf.mxu0
  %v1804 = vadd.f32 %v1790, %v1803
  %1805 = vdwg.mxu0
  %1806 = vmatpush.bf16.msra.mxu0 %v1298
  %1807 = vmatpush.bf16.msra.mxu0 %v1282
  %1808 = vmatpush.bf16.msra.mxu0 %v1266
  %1809 = vmatpush.bf16.msra.mxu0 %v1250
  %1810 = vmatpush.bf16.msra.mxu0 %v1234
  %1811 = vmatpush.bf16.msra.mxu0 %v1218
  %1812 = vmatpush.bf16.msra.mxu0 %v1202
  %1813 = vmatpush.bf16.msra.mxu0 %v1186
  %1814 = vmatmul.bf16.gmra.mxu0 %v120
  %v1815 = vpop.f32.mrf.mxu0
  %v1816 = vadd.f32 %v386, %v1815
  %v1817 = vpop.f32.mrf.mxu0
  %v1818 = vadd.f32 %v386, %v1817
  %1819 = vdwg.mxu0
  %1820 = vmatpush.bf16.msra.mxu0 %v1426
  %1821 = vmatpush.bf16.msra.mxu0 %v1410
  %1822 = vmatpush.bf16.msra.mxu0 %v1394
  %1823 = vmatpush.bf16.msra.mxu0 %v1378
  %1824 = vmatpush.bf16.msra.mxu0 %v1362
  %1825 = vmatpush.bf16.msra.mxu0 %v1346
  %1826 = vmatpush.bf16.msra.mxu0 %v1330
  %1827 = vmatpush.bf16.msra.mxu0 %v1314
  %1828 = vmatmul.bf16.gmra.mxu0 %v121
  %v1829 = vpop.f32.mrf.mxu0
  %v1830 = vadd.f32 %v1816, %v1829
  %v1831 = vpop.f32.mrf.mxu0
  %v1832 = vadd.f32 %v1818, %v1831
  %1833 = vdwg.mxu0
  %1834 = vmatpush.bf16.msra.mxu0 %v1299
  %1835 = vmatpush.bf16.msra.mxu0 %v1283
  %1836 = vmatpush.bf16.msra.mxu0 %v1267
  %1837 = vmatpush.bf16.msra.mxu0 %v1251
  %1838 = vmatpush.bf16.msra.mxu0 %v1235
  %1839 = vmatpush.bf16.msra.mxu0 %v1219
  %1840 = vmatpush.bf16.msra.mxu0 %v1203
  %1841 = vmatpush.bf16.msra.mxu0 %v1187
  %1842 = vmatmul.bf16.gmra.mxu0 %v120
  %v1843 = vpop.f32.mrf.mxu0
  %v1844 = vadd.f32 %v387, %v1843
  %v1845 = vpop.f32.mrf.mxu0
  %v1846 = vadd.f32 %v387, %v1845
  %1847 = vdwg.mxu0
  %1848 = vmatpush.bf16.msra.mxu0 %v1427
  %1849 = vmatpush.bf16.msra.mxu0 %v1411
  %1850 = vmatpush.bf16.msra.mxu0 %v1395
  %1851 = vmatpush.bf16.msra.mxu0 %v1379
  %1852 = vmatpush.bf16.msra.mxu0 %v1363
  %1853 = vmatpush.bf16.msra.mxu0 %v1347
  %1854 = vmatpush.bf16.msra.mxu0 %v1331
  %1855 = vmatpush.bf16.msra.mxu0 %v1315
  %1856 = vmatmul.bf16.gmra.mxu0 %v121
  %v1857 = vpop.f32.mrf.mxu0
  %v1858 = vadd.f32 %v1844, %v1857
  %v1859 = vpop.f32.mrf.mxu0
  %v1860 = vadd.f32 %v1846, %v1859
  %1861 = vdwg.mxu0
  %1862 = vmatpush.bf16.msra.mxu0 %v1300
  %1863 = vmatpush.bf16.msra.mxu0 %v1284
  %1864 = vmatpush.bf16.msra.mxu0 %v1268
  %1865 = vmatpush.bf16.msra.mxu0 %v1252
  %1866 = vmatpush.bf16.msra.mxu0 %v1236
  %1867 = vmatpush.bf16.msra.mxu0 %v1220
  %1868 = vmatpush.bf16.msra.mxu0 %v1204
  %1869 = vmatpush.bf16.msra.mxu0 %v1188
  %1870 = vmatmul.bf16.gmra.mxu0 %v120
  %v1871 = vpop.f32.mrf.mxu0
  %v1872 = vadd.f32 %v388, %v1871
  %v1873 = vpop.f32.mrf.mxu0
  %v1874 = vadd.f32 %v388, %v1873
  %1875 = vdwg.mxu0
  %1876 = vmatpush.bf16.msra.mxu0 %v1428
  %1877 = vmatpush.bf16.msra.mxu0 %v1412
  %1878 = vmatpush.bf16.msra.mxu0 %v1396
  %1879 = vmatpush.bf16.msra.mxu0 %v1380
  %1880 = vmatpush.bf16.msra.mxu0 %v1364
  %1881 = vmatpush.bf16.msra.mxu0 %v1348
  %1882 = vmatpush.bf16.msra.mxu0 %v1332
  %1883 = vmatpush.bf16.msra.mxu0 %v1316
  %1884 = vmatmul.bf16.gmra.mxu0 %v121
  %v1885 = vpop.f32.mrf.mxu0
  %v1886 = vadd.f32 %v1872, %v1885
  %v1887 = vpop.f32.mrf.mxu0
  %v1888 = vadd.f32 %v1874, %v1887
  %1889 = vdwg.mxu0
  %1890 = vmatpush.bf16.msra.mxu0 %v1301
  %1891 = vmatpush.bf16.msra.mxu0 %v1285
  %1892 = vmatpush.bf16.msra.mxu0 %v1269
  %1893 = vmatpush.bf16.msra.mxu0 %v1253
  %1894 = vmatpush.bf16.msra.mxu0 %v1237
  %1895 = vmatpush.bf16.msra.mxu0 %v1221
  %1896 = vmatpush.bf16.msra.mxu0 %v1205
  %1897 = vmatpush.bf16.msra.mxu0 %v1189
  %1898 = vmatmul.bf16.gmra.mxu0 %v120
  %v1899 = vpop.f32.mrf.mxu0
  %v1900 = vadd.f32 %v389, %v1899
  %v1901 = vpop.f32.mrf.mxu0
  %v1902 = vadd.f32 %v389, %v1901
  %1903 = vdwg.mxu0
  %1904 = vmatpush.bf16.msra.mxu0 %v1429
  %1905 = vmatpush.bf16.msra.mxu0 %v1413
  %1906 = vmatpush.bf16.msra.mxu0 %v1397
  %1907 = vmatpush.bf16.msra.mxu0 %v1381
  %1908 = vmatpush.bf16.msra.mxu0 %v1365
  %1909 = vmatpush.bf16.msra.mxu0 %v1349
  %1910 = vmatpush.bf16.msra.mxu0 %v1333
  %1911 = vmatpush.bf16.msra.mxu0 %v1317
  %1912 = vmatmul.bf16.gmra.mxu0 %v121
  %v1913 = vpop.f32.mrf.mxu0
  %v1914 = vadd.f32 %v1900, %v1913
  %v1915 = vpop.f32.mrf.mxu0
  %v1916 = vadd.f32 %v1902, %v1915
  %1917 = vdwg.mxu0
  %1918 = vmatpush.bf16.msra.mxu0 %v1302
  %1919 = vmatpush.bf16.msra.mxu0 %v1286
  %1920 = vmatpush.bf16.msra.mxu0 %v1270
  %1921 = vmatpush.bf16.msra.mxu0 %v1254
  %1922 = vmatpush.bf16.msra.mxu0 %v1238
  %1923 = vmatpush.bf16.msra.mxu0 %v1222
  %1924 = vmatpush.bf16.msra.mxu0 %v1206
  %1925 = vmatpush.bf16.msra.mxu0 %v1190
  %1926 = vmatmul.bf16.gmra.mxu0 %v120
  %v1927 = vpop.f32.mrf.mxu0
  %v1928 = vadd.f32 %v390, %v1927
  %v1929 = vpop.f32.mrf.mxu0
  %v1930 = vadd.f32 %v390, %v1929
  %1931 = vdwg.mxu0
  %1932 = vmatpush.bf16.msra.mxu0 %v1430
  %1933 = vmatpush.bf16.msra.mxu0 %v1414
  %1934 = vmatpush.bf16.msra.mxu0 %v1398
  %1935 = vmatpush.bf16.msra.mxu0 %v1382
  %1936 = vmatpush.bf16.msra.mxu0 %v1366
  %1937 = vmatpush.bf16.msra.mxu0 %v1350
  %1938 = vmatpush.bf16.msra.mxu0 %v1334
  %1939 = vmatpush.bf16.msra.mxu0 %v1318
  %1940 = vmatmul.bf16.gmra.mxu0 %v121
  %v1941 = vpop.f32.mrf.mxu0
  %v1942 = vadd.f32 %v1928, %v1941
  %v1943 = vpop.f32.mrf.mxu0
  %v1944 = vadd.f32 %v1930, %v1943
  %1945 = vdwg.mxu0
  %1946 = vmatpush.bf16.msra.mxu0 %v1303
  %1947 = vmatpush.bf16.msra.mxu0 %v1287
  %1948 = vmatpush.bf16.msra.mxu0 %v1271
  %1949 = vmatpush.bf16.msra.mxu0 %v1255
  %1950 = vmatpush.bf16.msra.mxu0 %v1239
  %1951 = vmatpush.bf16.msra.mxu0 %v1223
  %1952 = vmatpush.bf16.msra.mxu0 %v1207
  %1953 = vmatpush.bf16.msra.mxu0 %v1191
  %1954 = vmatmul.bf16.gmra.mxu0 %v120
  %v1955 = vpop.f32.mrf.mxu0
  %v1956 = vadd.f32 %v391, %v1955
  %v1957 = vpop.f32.mrf.mxu0
  %v1958 = vadd.f32 %v391, %v1957
  %1959 = vdwg.mxu0
  %1960 = vmatpush.bf16.msra.mxu0 %v1431
  %1961 = vmatpush.bf16.msra.mxu0 %v1415
  %1962 = vmatpush.bf16.msra.mxu0 %v1399
  %1963 = vmatpush.bf16.msra.mxu0 %v1383
  %1964 = vmatpush.bf16.msra.mxu0 %v1367
  %1965 = vmatpush.bf16.msra.mxu0 %v1351
  %1966 = vmatpush.bf16.msra.mxu0 %v1335
  %1967 = vmatpush.bf16.msra.mxu0 %v1319
  %1968 = vmatmul.bf16.gmra.mxu0 %v121
  %v1969 = vpop.f32.mrf.mxu0
  %v1970 = vadd.f32 %v1956, %v1969
  %v1971 = vpop.f32.mrf.mxu0
  %v1972 = vadd.f32 %v1958, %v1971
  %1973 = vdwg.mxu0
  %1974 = vmatpush.bf16.msra.mxu0 %v1304
  %1975 = vmatpush.bf16.msra.mxu0 %v1288
  %1976 = vmatpush.bf16.msra.mxu0 %v1272
  %1977 = vmatpush.bf16.msra.mxu0 %v1256
  %1978 = vmatpush.bf16.msra.mxu0 %v1240
  %1979 = vmatpush.bf16.msra.mxu0 %v1224
  %1980 = vmatpush.bf16.msra.mxu0 %v1208
  %1981 = vmatpush.bf16.msra.mxu0 %v1192
  %1982 = vmatmul.bf16.gmra.mxu0 %v120
  %v1983 = vpop.f32.mrf.mxu0
  %v1984 = vadd.f32 %v392, %v1983
  %v1985 = vpop.f32.mrf.mxu0
  %v1986 = vadd.f32 %v392, %v1985
  %1987 = vdwg.mxu0
  %1988 = vmatpush.bf16.msra.mxu0 %v1432
  %1989 = vmatpush.bf16.msra.mxu0 %v1416
  %1990 = vmatpush.bf16.msra.mxu0 %v1400
  %1991 = vmatpush.bf16.msra.mxu0 %v1384
  %1992 = vmatpush.bf16.msra.mxu0 %v1368
  %1993 = vmatpush.bf16.msra.mxu0 %v1352
  %1994 = vmatpush.bf16.msra.mxu0 %v1336
  %1995 = vmatpush.bf16.msra.mxu0 %v1320
  %1996 = vmatmul.bf16.gmra.mxu0 %v121
  %v1997 = vpop.f32.mrf.mxu0
  %v1998 = vadd.f32 %v1984, %v1997
  %v1999 = vpop.f32.mrf.mxu0
  %v2000 = vadd.f32 %v1986, %v1999
  %2001 = vdwg.mxu0
  %2002 = vmatpush.bf16.msra.mxu0 %v1305
  %2003 = vmatpush.bf16.msra.mxu0 %v1289
  %2004 = vmatpush.bf16.msra.mxu0 %v1273
  %2005 = vmatpush.bf16.msra.mxu0 %v1257
  %2006 = vmatpush.bf16.msra.mxu0 %v1241
  %2007 = vmatpush.bf16.msra.mxu0 %v1225
  %2008 = vmatpush.bf16.msra.mxu0 %v1209
  %2009 = vmatpush.bf16.msra.mxu0 %v1193
  %2010 = vmatmul.bf16.gmra.mxu0 %v120
  %v2011 = vpop.f32.mrf.mxu0
  %v2012 = vadd.f32 %v393, %v2011
  %v2013 = vpop.f32.mrf.mxu0
  %v2014 = vadd.f32 %v393, %v2013
  %2015 = vdwg.mxu0
  %2016 = vmatpush.bf16.msra.mxu0 %v1433
  %2017 = vmatpush.bf16.msra.mxu0 %v1417
  %2018 = vmatpush.bf16.msra.mxu0 %v1401
  %2019 = vmatpush.bf16.msra.mxu0 %v1385
  %2020 = vmatpush.bf16.msra.mxu0 %v1369
  %2021 = vmatpush.bf16.msra.mxu0 %v1353
  %2022 = vmatpush.bf16.msra.mxu0 %v1337
  %2023 = vmatpush.bf16.msra.mxu0 %v1321
  %2024 = vmatmul.bf16.gmra.mxu0 %v121
  %v2025 = vpop.f32.mrf.mxu0
  %v2026 = vadd.f32 %v2012, %v2025
  %v2027 = vpop.f32.mrf.mxu0
  %v2028 = vadd.f32 %v2014, %v2027
  %2029 = vdwg.mxu0
  %2030 = vmatpush.bf16.msra.mxu0 %v1306
  %2031 = vmatpush.bf16.msra.mxu0 %v1290
  %2032 = vmatpush.bf16.msra.mxu0 %v1274
  %2033 = vmatpush.bf16.msra.mxu0 %v1258
  %2034 = vmatpush.bf16.msra.mxu0 %v1242
  %2035 = vmatpush.bf16.msra.mxu0 %v1226
  %2036 = vmatpush.bf16.msra.mxu0 %v1210
  %2037 = vmatpush.bf16.msra.mxu0 %v1194
  %2038 = vmatmul.bf16.gmra.mxu0 %v120
  %v2039 = vpop.f32.mrf.mxu0
  %v2040 = vadd.f32 %v394, %v2039
  %v2041 = vpop.f32.mrf.mxu0
  %v2042 = vadd.f32 %v394, %v2041
  %2043 = vdwg.mxu0
  %2044 = vmatpush.bf16.msra.mxu0 %v1434
  %2045 = vmatpush.bf16.msra.mxu0 %v1418
  %2046 = vmatpush.bf16.msra.mxu0 %v1402
  %2047 = vmatpush.bf16.msra.mxu0 %v1386
  %2048 = vmatpush.bf16.msra.mxu0 %v1370
  %2049 = vmatpush.bf16.msra.mxu0 %v1354
  %2050 = vmatpush.bf16.msra.mxu0 %v1338
  %2051 = vmatpush.bf16.msra.mxu0 %v1322
  %2052 = vmatmul.bf16.gmra.mxu0 %v121
  %v2053 = vpop.f32.mrf.mxu0
  %v2054 = vadd.f32 %v2040, %v2053
  %v2055 = vpop.f32.mrf.mxu0
  %v2056 = vadd.f32 %v2042, %v2055
  %2057 = vdwg.mxu0
  %2058 = vmatpush.bf16.msra.mxu0 %v1307
  %2059 = vmatpush.bf16.msra.mxu0 %v1291
  %2060 = vmatpush.bf16.msra.mxu0 %v1275
  %2061 = vmatpush.bf16.msra.mxu0 %v1259
  %2062 = vmatpush.bf16.msra.mxu0 %v1243
  %2063 = vmatpush.bf16.msra.mxu0 %v1227
  %2064 = vmatpush.bf16.msra.mxu0 %v1211
  %2065 = vmatpush.bf16.msra.mxu0 %v1195
  %2066 = vmatmul.bf16.gmra.mxu0 %v120
  %v2067 = vpop.f32.mrf.mxu0
  %v2068 = vadd.f32 %v395, %v2067
  %v2069 = vpop.f32.mrf.mxu0
  %v2070 = vadd.f32 %v395, %v2069
  %2071 = vdwg.mxu0
  %2072 = vmatpush.bf16.msra.mxu0 %v1435
  %2073 = vmatpush.bf16.msra.mxu0 %v1419
  %2074 = vmatpush.bf16.msra.mxu0 %v1403
  %2075 = vmatpush.bf16.msra.mxu0 %v1387
  %2076 = vmatpush.bf16.msra.mxu0 %v1371
  %2077 = vmatpush.bf16.msra.mxu0 %v1355
  %2078 = vmatpush.bf16.msra.mxu0 %v1339
  %2079 = vmatpush.bf16.msra.mxu0 %v1323
  %2080 = vmatmul.bf16.gmra.mxu0 %v121
  %v2081 = vpop.f32.mrf.mxu0
  %v2082 = vadd.f32 %v2068, %v2081
  %v2083 = vpop.f32.mrf.mxu0
  %v2084 = vadd.f32 %v2070, %v2083
  %2085 = vdwg.mxu0
  %2086 = vmatpush.bf16.msra.mxu0 %v1308
  %2087 = vmatpush.bf16.msra.mxu0 %v1292
  %2088 = vmatpush.bf16.msra.mxu0 %v1276
  %2089 = vmatpush.bf16.msra.mxu0 %v1260
  %2090 = vmatpush.bf16.msra.mxu0 %v1244
  %2091 = vmatpush.bf16.msra.mxu0 %v1228
  %2092 = vmatpush.bf16.msra.mxu0 %v1212
  %2093 = vmatpush.bf16.msra.mxu0 %v1196
  %2094 = vmatmul.bf16.gmra.mxu0 %v120
  %v2095 = vpop.f32.mrf.mxu0
  %v2096 = vadd.f32 %v396, %v2095
  %v2097 = vpop.f32.mrf.mxu0
  %v2098 = vadd.f32 %v396, %v2097
  %2099 = vdwg.mxu0
  %2100 = vmatpush.bf16.msra.mxu0 %v1436
  %2101 = vmatpush.bf16.msra.mxu0 %v1420
  %2102 = vmatpush.bf16.msra.mxu0 %v1404
  %2103 = vmatpush.bf16.msra.mxu0 %v1388
  %2104 = vmatpush.bf16.msra.mxu0 %v1372
  %2105 = vmatpush.bf16.msra.mxu0 %v1356
  %2106 = vmatpush.bf16.msra.mxu0 %v1340
  %2107 = vmatpush.bf16.msra.mxu0 %v1324
  %2108 = vmatmul.bf16.gmra.mxu0 %v121
  %v2109 = vpop.f32.mrf.mxu0
  %v2110 = vadd.f32 %v2096, %v2109
  %v2111 = vpop.f32.mrf.mxu0
  %v2112 = vadd.f32 %v2098, %v2111
  %2113 = vdwg.mxu0
  %2114 = vmatpush.bf16.msra.mxu0 %v1309
  %2115 = vmatpush.bf16.msra.mxu0 %v1293
  %2116 = vmatpush.bf16.msra.mxu0 %v1277
  %2117 = vmatpush.bf16.msra.mxu0 %v1261
  %2118 = vmatpush.bf16.msra.mxu0 %v1245
  %2119 = vmatpush.bf16.msra.mxu0 %v1229
  %2120 = vmatpush.bf16.msra.mxu0 %v1213
  %2121 = vmatpush.bf16.msra.mxu0 %v1197
  %2122 = vmatmul.bf16.gmra.mxu0 %v120
  %v2123 = vpop.f32.mrf.mxu0
  %v2124 = vadd.f32 %v397, %v2123
  %v2125 = vpop.f32.mrf.mxu0
  %v2126 = vadd.f32 %v397, %v2125
  %2127 = vdwg.mxu0
  %2128 = vmatpush.bf16.msra.mxu0 %v1437
  %2129 = vmatpush.bf16.msra.mxu0 %v1421
  %2130 = vmatpush.bf16.msra.mxu0 %v1405
  %2131 = vmatpush.bf16.msra.mxu0 %v1389
  %2132 = vmatpush.bf16.msra.mxu0 %v1373
  %2133 = vmatpush.bf16.msra.mxu0 %v1357
  %2134 = vmatpush.bf16.msra.mxu0 %v1341
  %2135 = vmatpush.bf16.msra.mxu0 %v1325
  %2136 = vmatmul.bf16.gmra.mxu0 %v121
  %v2137 = vpop.f32.mrf.mxu0
  %v2138 = vadd.f32 %v2124, %v2137
  %v2139 = vpop.f32.mrf.mxu0
  %v2140 = vadd.f32 %v2126, %v2139
  %2141 = vdwg.mxu0
  %v2142 = vmax.f32 %v1718, 0.0
  %v2143 = vmax.f32 %v1746, 0.0
  %v2144 = vmax.f32 %v1774, 0.0
  %v2145 = vmax.f32 %v1802, 0.0
  %v2146 = vmax.f32 %v1830, 0.0
  %v2147 = vmax.f32 %v1858, 0.0
  %v2148 = vmax.f32 %v1886, 0.0
  %v2149 = vmax.f32 %v1914, 0.0
  %v2150 = vmax.f32 %v1942, 0.0
  %v2151 = vmax.f32 %v1970, 0.0
  %v2152 = vmax.f32 %v1998, 0.0
  %v2153 = vmax.f32 %v2026, 0.0
  %v2154 = vmax.f32 %v2054, 0.0
  %v2155 = vmax.f32 %v2082, 0.0
  %v2156 = vmax.f32 %v2110, 0.0
  %v2157 = vmax.f32 %v2138, 0.0
  %v2158 = vmax.f32 %v1720, 0.0
  %v2159 = vmax.f32 %v1748, 0.0
  %v2160 = vmax.f32 %v1776, 0.0
  %v2161 = vmax.f32 %v1804, 0.0
  %v2162 = vmax.f32 %v1832, 0.0
  %v2163 = vmax.f32 %v1860, 0.0
  %v2164 = vmax.f32 %v1888, 0.0
  %v2165 = vmax.f32 %v1916, 0.0
  %v2166 = vmax.f32 %v1944, 0.0
  %v2167 = vmax.f32 %v1972, 0.0
  %v2168 = vmax.f32 %v2000, 0.0
  %v2169 = vmax.f32 %v2028, 0.0
  %v2170 = vmax.f32 %v2056, 0.0
  %v2171 = vmax.f32 %v2084, 0.0
  %v2172 = vmax.f32 %v2112, 0.0
  %v2173 = vmax.f32 %v2140, 0.0
  %v2174 = vpack.c.bf16 %v2158, %v2142
  %v2175 = vpack.c.bf16 %v2159, %v2143
  %v2176 = vpack.c.bf16 %v2160, %v2144
  %v2177 = vpack.c.bf16 %v2161, %v2145
  %v2178 = vpack.c.bf16 %v2162, %v2146
  %v2179 = vpack.c.bf16 %v2163, %v2147
  %v2180 = vpack.c.bf16 %v2164, %v2148
  %v2181 = vpack.c.bf16 %v2165, %v2149
  %v2182 = vpack.c.bf16 %v2166, %v2150
  %v2183 = vpack.c.bf16 %v2167, %v2151
  %v2184 = vpack.c.bf16 %v2168, %v2152
  %v2185 = vpack.c.bf16 %v2169, %v2153
  %v2186 = vpack.c.bf16 %v2170, %v2154
  %v2187 = vpack.c.bf16 %v2171, %v2155
  %v2188 = vpack.c.bf16 %v2172, %v2156
  %v2189 = vpack.c.bf16 %v2173, %v2157
  %v2190 = vld [vmem:[%s5] sm:$0xff]
  %v2191 = vld [vmem:[%s5 + $0x8] sm:$0xff]
  %v2192 = vld [vmem:[%s5 + $0x10] sm:$0xff]
  %v2193 = vld [vmem:[%s5 + $0x18] sm:$0xff]
  %v2194 = vld [vmem:[%s5 + $0x20] sm:$0xff]
  %v2195 = vld [vmem:[%s5 + $0x28] sm:$0xff]
  %v2196 = vld [vmem:[%s5 + $0x30] sm:$0xff]
  %v2197 = vld [vmem:[%s5 + $0x38] sm:$0xff]
  %v2198 = vld [vmem:[%s5 + $0x40] sm:$0xff]
  %v2199 = vld [vmem:[%s5 + $0x48] sm:$0xff]
  %v2200 = vld [vmem:[%s5 + $0x50] sm:$0xff]
  %v2201 = vld [vmem:[%s5 + $0x58] sm:$0xff]
  %v2202 = vld [vmem:[%s5 + $0x60] sm:$0xff]
  %v2203 = vld [vmem:[%s5 + $0x68] sm:$0xff]
  %v2204 = vld [vmem:[%s5 + $0x70] sm:$0xff]
  %v2205 = vld [vmem:[%s5 + $0x78] sm:$0xff]
  %v2206 = vld [vmem:[%s5 + $0x80] sm:$0xff]
  %v2207 = vld [vmem:[%s5 + $0x88] sm:$0xff]
  %v2208 = vld [vmem:[%s5 + $0x90] sm:$0xff]
  %v2209 = vld [vmem:[%s5 + $0x98] sm:$0xff]
  %v2210 = vld [vmem:[%s5 + $0xa0] sm:$0xff]
  %v2211 = vld [vmem:[%s5 + $0xa8] sm:$0xff]
  %v2212 = vld [vmem:[%s5 + $0xb0] sm:$0xff]
  %v2213 = vld [vmem:[%s5 + $0xb8] sm:$0xff]
  %v2214 = vld [vmem:[%s5 + $0xc0] sm:$0xff]
  %v2215 = vld [vmem:[%s5 + $0xc8] sm:$0xff]
  %v2216 = vld [vmem:[%s5 + $0xd0] sm:$0xff]
  %v2217 = vld [vmem:[%s5 + $0xd8] sm:$0xff]
  %v2218 = vld [vmem:[%s5 + $0xe0] sm:$0xff]
  %v2219 = vld [vmem:[%s5 + $0xe8] sm:$0xff]
  %v2220 = vld [vmem:[%s5 + $0xf0] sm:$0xff]
  %v2221 = vld [vmem:[%s5 + $0xf8] sm:$0xff]
  %v2222 = vld [vmem:[%s5 + $0x100] sm:$0xff]
  %v2223 = vld [vmem:[%s5 + $0x108] sm:$0xff]
  %v2224 = vld [vmem:[%s5 + $0x110] sm:$0xff]
  %v2225 = vld [vmem:[%s5 + $0x118] sm:$0xff]
  %v2226 = vld [vmem:[%s5 + $0x120] sm:$0xff]
  %v2227 = vld [vmem:[%s5 + $0x128] sm:$0xff]
  %v2228 = vld [vmem:[%s5 + $0x130] sm:$0xff]
  %v2229 = vld [vmem:[%s5 + $0x138] sm:$0xff]
  %v2230 = vld [vmem:[%s5 + $0x140] sm:$0xff]
  %v2231 = vld [vmem:[%s5 + $0x148] sm:$0xff]
  %v2232 = vld [vmem:[%s5 + $0x150] sm:$0xff]
  %v2233 = vld [vmem:[%s5 + $0x158] sm:$0xff]
  %v2234 = vld [vmem:[%s5 + $0x160] sm:$0xff]
  %v2235 = vld [vmem:[%s5 + $0x168] sm:$0xff]
  %v2236 = vld [vmem:[%s5 + $0x170] sm:$0xff]
  %v2237 = vld [vmem:[%s5 + $0x178] sm:$0xff]
  %v2238 = vld [vmem:[%s5 + $0x180] sm:$0xff]
  %v2239 = vld [vmem:[%s5 + $0x188] sm:$0xff]
  %v2240 = vld [vmem:[%s5 + $0x190] sm:$0xff]
  %v2241 = vld [vmem:[%s5 + $0x198] sm:$0xff]
  %v2242 = vld [vmem:[%s5 + $0x1a0] sm:$0xff]
  %v2243 = vld [vmem:[%s5 + $0x1a8] sm:$0xff]
  %v2244 = vld [vmem:[%s5 + $0x1b0] sm:$0xff]
  %v2245 = vld [vmem:[%s5 + $0x1b8] sm:$0xff]
  %v2246 = vld [vmem:[%s5 + $0x1c0] sm:$0xff]
  %v2247 = vld [vmem:[%s5 + $0x1c8] sm:$0xff]
  %v2248 = vld [vmem:[%s5 + $0x1d0] sm:$0xff]
  %v2249 = vld [vmem:[%s5 + $0x1d8] sm:$0xff]
  %v2250 = vld [vmem:[%s5 + $0x1e0] sm:$0xff]
  %v2251 = vld [vmem:[%s5 + $0x1e8] sm:$0xff]
  %v2252 = vld [vmem:[%s5 + $0x1f0] sm:$0xff]
  %v2253 = vld [vmem:[%s5 + $0x1f8] sm:$0xff]
  %v2254 = vld [vmem:[%s5 + $0x200] sm:$0xff]
  %v2255 = vld [vmem:[%s5 + $0x208] sm:$0xff]
  %v2256 = vld [vmem:[%s5 + $0x210] sm:$0xff]
  %v2257 = vld [vmem:[%s5 + $0x218] sm:$0xff]
  %v2258 = vld [vmem:[%s5 + $0x220] sm:$0xff]
  %v2259 = vld [vmem:[%s5 + $0x228] sm:$0xff]
  %v2260 = vld [vmem:[%s5 + $0x230] sm:$0xff]
  %v2261 = vld [vmem:[%s5 + $0x238] sm:$0xff]
  %v2262 = vld [vmem:[%s5 + $0x240] sm:$0xff]
  %v2263 = vld [vmem:[%s5 + $0x248] sm:$0xff]
  %v2264 = vld [vmem:[%s5 + $0x250] sm:$0xff]
  %v2265 = vld [vmem:[%s5 + $0x258] sm:$0xff]
  %v2266 = vld [vmem:[%s5 + $0x260] sm:$0xff]
  %v2267 = vld [vmem:[%s5 + $0x268] sm:$0xff]
  %v2268 = vld [vmem:[%s5 + $0x270] sm:$0xff]
  %v2269 = vld [vmem:[%s5 + $0x278] sm:$0xff]
  %v2270 = vld [vmem:[%s5 + $0x280] sm:$0xff]
  %v2271 = vld [vmem:[%s5 + $0x288] sm:$0xff]
  %v2272 = vld [vmem:[%s5 + $0x290] sm:$0xff]
  %v2273 = vld [vmem:[%s5 + $0x298] sm:$0xff]
  %v2274 = vld [vmem:[%s5 + $0x2a0] sm:$0xff]
  %v2275 = vld [vmem:[%s5 + $0x2a8] sm:$0xff]
  %v2276 = vld [vmem:[%s5 + $0x2b0] sm:$0xff]
  %v2277 = vld [vmem:[%s5 + $0x2b8] sm:$0xff]
  %v2278 = vld [vmem:[%s5 + $0x2c0] sm:$0xff]
  %v2279 = vld [vmem:[%s5 + $0x2c8] sm:$0xff]
  %v2280 = vld [vmem:[%s5 + $0x2d0] sm:$0xff]
  %v2281 = vld [vmem:[%s5 + $0x2d8] sm:$0xff]
  %v2282 = vld [vmem:[%s5 + $0x2e0] sm:$0xff]
  %v2283 = vld [vmem:[%s5 + $0x2e8] sm:$0xff]
  %v2284 = vld [vmem:[%s5 + $0x2f0] sm:$0xff]
  %v2285 = vld [vmem:[%s5 + $0x2f8] sm:$0xff]
  %v2286 = vld [vmem:[%s5 + $0x300] sm:$0xff]
  %v2287 = vld [vmem:[%s5 + $0x308] sm:$0xff]
  %v2288 = vld [vmem:[%s5 + $0x310] sm:$0xff]
  %v2289 = vld [vmem:[%s5 + $0x318] sm:$0xff]
  %v2290 = vld [vmem:[%s5 + $0x320] sm:$0xff]
  %v2291 = vld [vmem:[%s5 + $0x328] sm:$0xff]
  %v2292 = vld [vmem:[%s5 + $0x330] sm:$0xff]
  %v2293 = vld [vmem:[%s5 + $0x338] sm:$0xff]
  %v2294 = vld [vmem:[%s5 + $0x340] sm:$0xff]
  %v2295 = vld [vmem:[%s5 + $0x348] sm:$0xff]
  %v2296 = vld [vmem:[%s5 + $0x350] sm:$0xff]
  %v2297 = vld [vmem:[%s5 + $0x358] sm:$0xff]
  %v2298 = vld [vmem:[%s5 + $0x360] sm:$0xff]
  %v2299 = vld [vmem:[%s5 + $0x368] sm:$0xff]
  %v2300 = vld [vmem:[%s5 + $0x370] sm:$0xff]
  %v2301 = vld [vmem:[%s5 + $0x378] sm:$0xff]
  %v2302 = vld [vmem:[%s5 + $0x380] sm:$0xff]
  %v2303 = vld [vmem:[%s5 + $0x388] sm:$0xff]
  %v2304 = vld [vmem:[%s5 + $0x390] sm:$0xff]
  %v2305 = vld [vmem:[%s5 + $0x398] sm:$0xff]
  %v2306 = vld [vmem:[%s5 + $0x3a0] sm:$0xff]
  %v2307 = vld [vmem:[%s5 + $0x3a8] sm:$0xff]
  %v2308 = vld [vmem:[%s5 + $0x3b0] sm:$0xff]
  %v2309 = vld [vmem:[%s5 + $0x3b8] sm:$0xff]
  %v2310 = vld [vmem:[%s5 + $0x3c0] sm:$0xff]
  %v2311 = vld [vmem:[%s5 + $0x3c8] sm:$0xff]
  %v2312 = vld [vmem:[%s5 + $0x3d0] sm:$0xff]
  %v2313 = vld [vmem:[%s5 + $0x3d8] sm:$0xff]
  %v2314 = vld [vmem:[%s5 + $0x3e0] sm:$0xff]
  %v2315 = vld [vmem:[%s5 + $0x3e8] sm:$0xff]
  %v2316 = vld [vmem:[%s5 + $0x3f0] sm:$0xff]
  %v2317 = vld [vmem:[%s5 + $0x3f8] sm:$0xff]
  %v2318 = vld [vmem:[%s5 + $0x400] sm:$0xff]
  %v2319 = vld [vmem:[%s5 + $0x408] sm:$0xff]
  %v2320 = vld [vmem:[%s5 + $0x410] sm:$0xff]
  %v2321 = vld [vmem:[%s5 + $0x418] sm:$0xff]
  %v2322 = vld [vmem:[%s5 + $0x420] sm:$0xff]
  %v2323 = vld [vmem:[%s5 + $0x428] sm:$0xff]
  %v2324 = vld [vmem:[%s5 + $0x430] sm:$0xff]
  %v2325 = vld [vmem:[%s5 + $0x438] sm:$0xff]
  %v2326 = vld [vmem:[%s5 + $0x440] sm:$0xff]
  %v2327 = vld [vmem:[%s5 + $0x448] sm:$0xff]
  %v2328 = vld [vmem:[%s5 + $0x450] sm:$0xff]
  %v2329 = vld [vmem:[%s5 + $0x458] sm:$0xff]
  %v2330 = vld [vmem:[%s5 + $0x460] sm:$0xff]
  %v2331 = vld [vmem:[%s5 + $0x468] sm:$0xff]
  %v2332 = vld [vmem:[%s5 + $0x470] sm:$0xff]
  %v2333 = vld [vmem:[%s5 + $0x478] sm:$0xff]
  %v2334 = vld [vmem:[%s5 + $0x480] sm:$0xff]
  %v2335 = vld [vmem:[%s5 + $0x488] sm:$0xff]
  %v2336 = vld [vmem:[%s5 + $0x490] sm:$0xff]
  %v2337 = vld [vmem:[%s5 + $0x498] sm:$0xff]
  %v2338 = vld [vmem:[%s5 + $0x4a0] sm:$0xff]
  %v2339 = vld [vmem:[%s5 + $0x4a8] sm:$0xff]
  %v2340 = vld [vmem:[%s5 + $0x4b0] sm:$0xff]
  %v2341 = vld [vmem:[%s5 + $0x4b8] sm:$0xff]
  %v2342 = vld [vmem:[%s5 + $0x4c0] sm:$0xff]
  %v2343 = vld [vmem:[%s5 + $0x4c8] sm:$0xff]
  %v2344 = vld [vmem:[%s5 + $0x4d0] sm:$0xff]
  %v2345 = vld [vmem:[%s5 + $0x4d8] sm:$0xff]
  %v2346 = vld [vmem:[%s5 + $0x4e0] sm:$0xff]
  %v2347 = vld [vmem:[%s5 + $0x4e8] sm:$0xff]
  %v2348 = vld [vmem:[%s5 + $0x4f0] sm:$0xff]
  %v2349 = vld [vmem:[%s5 + $0x4f8] sm:$0xff]
  %v2350 = vld [vmem:[%s5 + $0x500] sm:$0xff]
  %v2351 = vld [vmem:[%s5 + $0x508] sm:$0xff]
  %v2352 = vld [vmem:[%s5 + $0x510] sm:$0xff]
  %v2353 = vld [vmem:[%s5 + $0x518] sm:$0xff]
  %v2354 = vld [vmem:[%s5 + $0x520] sm:$0xff]
  %v2355 = vld [vmem:[%s5 + $0x528] sm:$0xff]
  %v2356 = vld [vmem:[%s5 + $0x530] sm:$0xff]
  %v2357 = vld [vmem:[%s5 + $0x538] sm:$0xff]
  %v2358 = vld [vmem:[%s5 + $0x540] sm:$0xff]
  %v2359 = vld [vmem:[%s5 + $0x548] sm:$0xff]
  %v2360 = vld [vmem:[%s5 + $0x550] sm:$0xff]
  %v2361 = vld [vmem:[%s5 + $0x558] sm:$0xff]
  %v2362 = vld [vmem:[%s5 + $0x560] sm:$0xff]
  %v2363 = vld [vmem:[%s5 + $0x568] sm:$0xff]
  %v2364 = vld [vmem:[%s5 + $0x570] sm:$0xff]
  %v2365 = vld [vmem:[%s5 + $0x578] sm:$0xff]
  %v2366 = vld [vmem:[%s5 + $0x580] sm:$0xff]
  %v2367 = vld [vmem:[%s5 + $0x588] sm:$0xff]
  %v2368 = vld [vmem:[%s5 + $0x590] sm:$0xff]
  %v2369 = vld [vmem:[%s5 + $0x598] sm:$0xff]
  %v2370 = vld [vmem:[%s5 + $0x5a0] sm:$0xff]
  %v2371 = vld [vmem:[%s5 + $0x5a8] sm:$0xff]
  %v2372 = vld [vmem:[%s5 + $0x5b0] sm:$0xff]
  %v2373 = vld [vmem:[%s5 + $0x5b8] sm:$0xff]
  %v2374 = vld [vmem:[%s5 + $0x5c0] sm:$0xff]
  %v2375 = vld [vmem:[%s5 + $0x5c8] sm:$0xff]
  %v2376 = vld [vmem:[%s5 + $0x5d0] sm:$0xff]
  %v2377 = vld [vmem:[%s5 + $0x5d8] sm:$0xff]
  %v2378 = vld [vmem:[%s5 + $0x5e0] sm:$0xff]
  %v2379 = vld [vmem:[%s5 + $0x5e8] sm:$0xff]
  %v2380 = vld [vmem:[%s5 + $0x5f0] sm:$0xff]
  %v2381 = vld [vmem:[%s5 + $0x5f8] sm:$0xff]
  %v2382 = vld [vmem:[%s5 + $0x600] sm:$0xff]
  %v2383 = vld [vmem:[%s5 + $0x608] sm:$0xff]
  %v2384 = vld [vmem:[%s5 + $0x610] sm:$0xff]
  %v2385 = vld [vmem:[%s5 + $0x618] sm:$0xff]
  %v2386 = vld [vmem:[%s5 + $0x620] sm:$0xff]
  %v2387 = vld [vmem:[%s5 + $0x628] sm:$0xff]
  %v2388 = vld [vmem:[%s5 + $0x630] sm:$0xff]
  %v2389 = vld [vmem:[%s5 + $0x638] sm:$0xff]
  %v2390 = vld [vmem:[%s5 + $0x640] sm:$0xff]
  %v2391 = vld [vmem:[%s5 + $0x648] sm:$0xff]
  %v2392 = vld [vmem:[%s5 + $0x650] sm:$0xff]
  %v2393 = vld [vmem:[%s5 + $0x658] sm:$0xff]
  %v2394 = vld [vmem:[%s5 + $0x660] sm:$0xff]
  %v2395 = vld [vmem:[%s5 + $0x668] sm:$0xff]
  %v2396 = vld [vmem:[%s5 + $0x670] sm:$0xff]
  %v2397 = vld [vmem:[%s5 + $0x678] sm:$0xff]
  %v2398 = vld [vmem:[%s5 + $0x680] sm:$0xff]
  %v2399 = vld [vmem:[%s5 + $0x688] sm:$0xff]
  %v2400 = vld [vmem:[%s5 + $0x690] sm:$0xff]
  %v2401 = vld [vmem:[%s5 + $0x698] sm:$0xff]
  %v2402 = vld [vmem:[%s5 + $0x6a0] sm:$0xff]
  %v2403 = vld [vmem:[%s5 + $0x6a8] sm:$0xff]
  %v2404 = vld [vmem:[%s5 + $0x6b0] sm:$0xff]
  %v2405 = vld [vmem:[%s5 + $0x6b8] sm:$0xff]
  %v2406 = vld [vmem:[%s5 + $0x6c0] sm:$0xff]
  %v2407 = vld [vmem:[%s5 + $0x6c8] sm:$0xff]
  %v2408 = vld [vmem:[%s5 + $0x6d0] sm:$0xff]
  %v2409 = vld [vmem:[%s5 + $0x6d8] sm:$0xff]
  %v2410 = vld [vmem:[%s5 + $0x6e0] sm:$0xff]
  %v2411 = vld [vmem:[%s5 + $0x6e8] sm:$0xff]
  %v2412 = vld [vmem:[%s5 + $0x6f0] sm:$0xff]
  %v2413 = vld [vmem:[%s5 + $0x6f8] sm:$0xff]
  %v2414 = vld [vmem:[%s5 + $0x700] sm:$0xff]
  %v2415 = vld [vmem:[%s5 + $0x708] sm:$0xff]
  %v2416 = vld [vmem:[%s5 + $0x710] sm:$0xff]
  %v2417 = vld [vmem:[%s5 + $0x718] sm:$0xff]
  %v2418 = vld [vmem:[%s5 + $0x720] sm:$0xff]
  %v2419 = vld [vmem:[%s5 + $0x728] sm:$0xff]
  %v2420 = vld [vmem:[%s5 + $0x730] sm:$0xff]
  %v2421 = vld [vmem:[%s5 + $0x738] sm:$0xff]
  %v2422 = vld [vmem:[%s5 + $0x740] sm:$0xff]
  %v2423 = vld [vmem:[%s5 + $0x748] sm:$0xff]
  %v2424 = vld [vmem:[%s5 + $0x750] sm:$0xff]
  %v2425 = vld [vmem:[%s5 + $0x758] sm:$0xff]
  %v2426 = vld [vmem:[%s5 + $0x760] sm:$0xff]
  %v2427 = vld [vmem:[%s5 + $0x768] sm:$0xff]
  %v2428 = vld [vmem:[%s5 + $0x770] sm:$0xff]
  %v2429 = vld [vmem:[%s5 + $0x778] sm:$0xff]
  %v2430 = vld [vmem:[%s5 + $0x780] sm:$0xff]
  %v2431 = vld [vmem:[%s5 + $0x788] sm:$0xff]
  %v2432 = vld [vmem:[%s5 + $0x790] sm:$0xff]
  %v2433 = vld [vmem:[%s5 + $0x798] sm:$0xff]
  %v2434 = vld [vmem:[%s5 + $0x7a0] sm:$0xff]
  %v2435 = vld [vmem:[%s5 + $0x7a8] sm:$0xff]
  %v2436 = vld [vmem:[%s5 + $0x7b0] sm:$0xff]
  %v2437 = vld [vmem:[%s5 + $0x7b8] sm:$0xff]
  %v2438 = vld [vmem:[%s5 + $0x7c0] sm:$0xff]
  %v2439 = vld [vmem:[%s5 + $0x7c8] sm:$0xff]
  %v2440 = vld [vmem:[%s5 + $0x7d0] sm:$0xff]
  %v2441 = vld [vmem:[%s5 + $0x7d8] sm:$0xff]
  %v2442 = vld [vmem:[%s5 + $0x7e0] sm:$0xff]
  %v2443 = vld [vmem:[%s5 + $0x7e8] sm:$0xff]
  %v2444 = vld [vmem:[%s5 + $0x7f0] sm:$0xff]
  %v2445 = vld [vmem:[%s5 + $0x7f8] sm:$0xff]
  %v2446 = vld [vmem:[%s6] sm:$0x3]
  %v2448 = vperm.slane %v2446, 0
  %v2449 = vperm.slane %v2446, 1
  %v2708 = vunpack.c.l.b16 %v2190
  %v2709 = vunpack.c.h.b16 %v2190
  %v2710 = vunpack.c.l.b16 %v2191
  %v2711 = vunpack.c.h.b16 %v2191
  %v2712 = vunpack.c.l.b16 %v2192
  %v2713 = vunpack.c.h.b16 %v2192
  %v2714 = vunpack.c.l.b16 %v2193
  %v2715 = vunpack.c.h.b16 %v2193
  %v2716 = vunpack.c.l.b16 %v2194
  %v2717 = vunpack.c.h.b16 %v2194
  %v2718 = vunpack.c.l.b16 %v2195
  %v2719 = vunpack.c.h.b16 %v2195
  %v2720 = vunpack.c.l.b16 %v2196
  %v2721 = vunpack.c.h.b16 %v2196
  %v2722 = vunpack.c.l.b16 %v2197
  %v2723 = vunpack.c.h.b16 %v2197
  %v2724 = vunpack.c.l.b16 %v2198
  %v2725 = vunpack.c.h.b16 %v2198
  %v2726 = vunpack.c.l.b16 %v2199
  %v2727 = vunpack.c.h.b16 %v2199
  %v2728 = vunpack.c.l.b16 %v2200
  %v2729 = vunpack.c.h.b16 %v2200
  %v2730 = vunpack.c.l.b16 %v2201
  %v2731 = vunpack.c.h.b16 %v2201
  %v2732 = vunpack.c.l.b16 %v2202
  %v2733 = vunpack.c.h.b16 %v2202
  %v2734 = vunpack.c.l.b16 %v2203
  %v2735 = vunpack.c.h.b16 %v2203
  %v2736 = vunpack.c.l.b16 %v2204
  %v2737 = vunpack.c.h.b16 %v2204
  %v2738 = vunpack.c.l.b16 %v2205
  %v2739 = vunpack.c.h.b16 %v2205
  %v2740 = vunpack.c.l.b16 %v2206
  %v2741 = vunpack.c.h.b16 %v2206
  %v2742 = vunpack.c.l.b16 %v2207
  %v2743 = vunpack.c.h.b16 %v2207
  %v2744 = vunpack.c.l.b16 %v2208
  %v2745 = vunpack.c.h.b16 %v2208
  %v2746 = vunpack.c.l.b16 %v2209
  %v2747 = vunpack.c.h.b16 %v2209
  %v2748 = vunpack.c.l.b16 %v2210
  %v2749 = vunpack.c.h.b16 %v2210
  %v2750 = vunpack.c.l.b16 %v2211
  %v2751 = vunpack.c.h.b16 %v2211
  %v2752 = vunpack.c.l.b16 %v2212
  %v2753 = vunpack.c.h.b16 %v2212
  %v2754 = vunpack.c.l.b16 %v2213
  %v2755 = vunpack.c.h.b16 %v2213
  %v2756 = vunpack.c.l.b16 %v2214
  %v2757 = vunpack.c.h.b16 %v2214
  %v2758 = vunpack.c.l.b16 %v2215
  %v2759 = vunpack.c.h.b16 %v2215
  %v2760 = vunpack.c.l.b16 %v2216
  %v2761 = vunpack.c.h.b16 %v2216
  %v2762 = vunpack.c.l.b16 %v2217
  %v2763 = vunpack.c.h.b16 %v2217
  %v2764 = vunpack.c.l.b16 %v2218
  %v2765 = vunpack.c.h.b16 %v2218
  %v2766 = vunpack.c.l.b16 %v2219
  %v2767 = vunpack.c.h.b16 %v2219
  %v2768 = vunpack.c.l.b16 %v2220
  %v2769 = vunpack.c.h.b16 %v2220
  %v2770 = vunpack.c.l.b16 %v2221
  %v2771 = vunpack.c.h.b16 %v2221
  %v2772 = vunpack.c.l.b16 %v2222
  %v2773 = vunpack.c.h.b16 %v2222
  %v2774 = vunpack.c.l.b16 %v2223
  %v2775 = vunpack.c.h.b16 %v2223
  %v2776 = vunpack.c.l.b16 %v2224
  %v2777 = vunpack.c.h.b16 %v2224
  %v2778 = vunpack.c.l.b16 %v2225
  %v2779 = vunpack.c.h.b16 %v2225
  %v2780 = vunpack.c.l.b16 %v2226
  %v2781 = vunpack.c.h.b16 %v2226
  %v2782 = vunpack.c.l.b16 %v2227
  %v2783 = vunpack.c.h.b16 %v2227
  %v2784 = vunpack.c.l.b16 %v2228
  %v2785 = vunpack.c.h.b16 %v2228
  %v2786 = vunpack.c.l.b16 %v2229
  %v2787 = vunpack.c.h.b16 %v2229
  %v2788 = vunpack.c.l.b16 %v2230
  %v2789 = vunpack.c.h.b16 %v2230
  %v2790 = vunpack.c.l.b16 %v2231
  %v2791 = vunpack.c.h.b16 %v2231
  %v2792 = vunpack.c.l.b16 %v2232
  %v2793 = vunpack.c.h.b16 %v2232
  %v2794 = vunpack.c.l.b16 %v2233
  %v2795 = vunpack.c.h.b16 %v2233
  %v2796 = vunpack.c.l.b16 %v2234
  %v2797 = vunpack.c.h.b16 %v2234
  %v2798 = vunpack.c.l.b16 %v2235
  %v2799 = vunpack.c.h.b16 %v2235
  %v2800 = vunpack.c.l.b16 %v2236
  %v2801 = vunpack.c.h.b16 %v2236
  %v2802 = vunpack.c.l.b16 %v2237
  %v2803 = vunpack.c.h.b16 %v2237
  %v2804 = vunpack.c.l.b16 %v2238
  %v2805 = vunpack.c.h.b16 %v2238
  %v2806 = vunpack.c.l.b16 %v2239
  %v2807 = vunpack.c.h.b16 %v2239
  %v2808 = vunpack.c.l.b16 %v2240
  %v2809 = vunpack.c.h.b16 %v2240
  %v2810 = vunpack.c.l.b16 %v2241
  %v2811 = vunpack.c.h.b16 %v2241
  %v2812 = vunpack.c.l.b16 %v2242
  %v2813 = vunpack.c.h.b16 %v2242
  %v2814 = vunpack.c.l.b16 %v2243
  %v2815 = vunpack.c.h.b16 %v2243
  %v2816 = vunpack.c.l.b16 %v2244
  %v2817 = vunpack.c.h.b16 %v2244
  %v2818 = vunpack.c.l.b16 %v2245
  %v2819 = vunpack.c.h.b16 %v2245
  %v2820 = vunpack.c.l.b16 %v2246
  %v2821 = vunpack.c.h.b16 %v2246
  %v2822 = vunpack.c.l.b16 %v2247
  %v2823 = vunpack.c.h.b16 %v2247
  %v2824 = vunpack.c.l.b16 %v2248
  %v2825 = vunpack.c.h.b16 %v2248
  %v2826 = vunpack.c.l.b16 %v2249
  %v2827 = vunpack.c.h.b16 %v2249
  %v2828 = vunpack.c.l.b16 %v2250
  %v2829 = vunpack.c.h.b16 %v2250
  %v2830 = vunpack.c.l.b16 %v2251
  %v2831 = vunpack.c.h.b16 %v2251
  %v2832 = vunpack.c.l.b16 %v2252
  %v2833 = vunpack.c.h.b16 %v2252
  %v2834 = vunpack.c.l.b16 %v2253
  %v2835 = vunpack.c.h.b16 %v2253
  %v2836 = vunpack.c.l.b16 %v2254
  %v2837 = vunpack.c.h.b16 %v2254
  %v2838 = vunpack.c.l.b16 %v2255
  %v2839 = vunpack.c.h.b16 %v2255
  %v2840 = vunpack.c.l.b16 %v2256
  %v2841 = vunpack.c.h.b16 %v2256
  %v2842 = vunpack.c.l.b16 %v2257
  %v2843 = vunpack.c.h.b16 %v2257
  %v2844 = vunpack.c.l.b16 %v2258
  %v2845 = vunpack.c.h.b16 %v2258
  %v2846 = vunpack.c.l.b16 %v2259
  %v2847 = vunpack.c.h.b16 %v2259
  %v2848 = vunpack.c.l.b16 %v2260
  %v2849 = vunpack.c.h.b16 %v2260
  %v2850 = vunpack.c.l.b16 %v2261
  %v2851 = vunpack.c.h.b16 %v2261
  %v2852 = vunpack.c.l.b16 %v2262
  %v2853 = vunpack.c.h.b16 %v2262
  %v2854 = vunpack.c.l.b16 %v2263
  %v2855 = vunpack.c.h.b16 %v2263
  %v2856 = vunpack.c.l.b16 %v2264
  %v2857 = vunpack.c.h.b16 %v2264
  %v2858 = vunpack.c.l.b16 %v2265
  %v2859 = vunpack.c.h.b16 %v2265
  %v2860 = vunpack.c.l.b16 %v2266
  %v2861 = vunpack.c.h.b16 %v2266
  %v2862 = vunpack.c.l.b16 %v2267
  %v2863 = vunpack.c.h.b16 %v2267
  %v2864 = vunpack.c.l.b16 %v2268
  %v2865 = vunpack.c.h.b16 %v2268
  %v2866 = vunpack.c.l.b16 %v2269
  %v2867 = vunpack.c.h.b16 %v2269
  %v2868 = vunpack.c.l.b16 %v2270
  %v2869 = vunpack.c.h.b16 %v2270
  %v2870 = vunpack.c.l.b16 %v2271
  %v2871 = vunpack.c.h.b16 %v2271
  %v2872 = vunpack.c.l.b16 %v2272
  %v2873 = vunpack.c.h.b16 %v2272
  %v2874 = vunpack.c.l.b16 %v2273
  %v2875 = vunpack.c.h.b16 %v2273
  %v2876 = vunpack.c.l.b16 %v2274
  %v2877 = vunpack.c.h.b16 %v2274
  %v2878 = vunpack.c.l.b16 %v2275
  %v2879 = vunpack.c.h.b16 %v2275
  %v2880 = vunpack.c.l.b16 %v2276
  %v2881 = vunpack.c.h.b16 %v2276
  %v2882 = vunpack.c.l.b16 %v2277
  %v2883 = vunpack.c.h.b16 %v2277
  %v2884 = vunpack.c.l.b16 %v2278
  %v2885 = vunpack.c.h.b16 %v2278
  %v2886 = vunpack.c.l.b16 %v2279
  %v2887 = vunpack.c.h.b16 %v2279
  %v2888 = vunpack.c.l.b16 %v2280
  %v2889 = vunpack.c.h.b16 %v2280
  %v2890 = vunpack.c.l.b16 %v2281
  %v2891 = vunpack.c.h.b16 %v2281
  %v2892 = vunpack.c.l.b16 %v2282
  %v2893 = vunpack.c.h.b16 %v2282
  %v2894 = vunpack.c.l.b16 %v2283
  %v2895 = vunpack.c.h.b16 %v2283
  %v2896 = vunpack.c.l.b16 %v2284
  %v2897 = vunpack.c.h.b16 %v2284
  %v2898 = vunpack.c.l.b16 %v2285
  %v2899 = vunpack.c.h.b16 %v2285
  %v2900 = vunpack.c.l.b16 %v2286
  %v2901 = vunpack.c.h.b16 %v2286
  %v2902 = vunpack.c.l.b16 %v2287
  %v2903 = vunpack.c.h.b16 %v2287
  %v2904 = vunpack.c.l.b16 %v2288
  %v2905 = vunpack.c.h.b16 %v2288
  %v2906 = vunpack.c.l.b16 %v2289
  %v2907 = vunpack.c.h.b16 %v2289
  %v2908 = vunpack.c.l.b16 %v2290
  %v2909 = vunpack.c.h.b16 %v2290
  %v2910 = vunpack.c.l.b16 %v2291
  %v2911 = vunpack.c.h.b16 %v2291
  %v2912 = vunpack.c.l.b16 %v2292
  %v2913 = vunpack.c.h.b16 %v2292
  %v2914 = vunpack.c.l.b16 %v2293
  %v2915 = vunpack.c.h.b16 %v2293
  %v2916 = vunpack.c.l.b16 %v2294
  %v2917 = vunpack.c.h.b16 %v2294
  %v2918 = vunpack.c.l.b16 %v2295
  %v2919 = vunpack.c.h.b16 %v2295
  %v2920 = vunpack.c.l.b16 %v2296
  %v2921 = vunpack.c.h.b16 %v2296
  %v2922 = vunpack.c.l.b16 %v2297
  %v2923 = vunpack.c.h.b16 %v2297
  %v2924 = vunpack.c.l.b16 %v2298
  %v2925 = vunpack.c.h.b16 %v2298
  %v2926 = vunpack.c.l.b16 %v2299
  %v2927 = vunpack.c.h.b16 %v2299
  %v2928 = vunpack.c.l.b16 %v2300
  %v2929 = vunpack.c.h.b16 %v2300
  %v2930 = vunpack.c.l.b16 %v2301
  %v2931 = vunpack.c.h.b16 %v2301
  %v2932 = vunpack.c.l.b16 %v2302
  %v2933 = vunpack.c.h.b16 %v2302
  %v2934 = vunpack.c.l.b16 %v2303
  %v2935 = vunpack.c.h.b16 %v2303
  %v2936 = vunpack.c.l.b16 %v2304
  %v2937 = vunpack.c.h.b16 %v2304
  %v2938 = vunpack.c.l.b16 %v2305
  %v2939 = vunpack.c.h.b16 %v2305
  %v2940 = vunpack.c.l.b16 %v2306
  %v2941 = vunpack.c.h.b16 %v2306
  %v2942 = vunpack.c.l.b16 %v2307
  %v2943 = vunpack.c.h.b16 %v2307
  %v2944 = vunpack.c.l.b16 %v2308
  %v2945 = vunpack.c.h.b16 %v2308
  %v2946 = vunpack.c.l.b16 %v2309
  %v2947 = vunpack.c.h.b16 %v2309
  %v2948 = vunpack.c.l.b16 %v2310
  %v2949 = vunpack.c.h.b16 %v2310
  %v2950 = vunpack.c.l.b16 %v2311
  %v2951 = vunpack.c.h.b16 %v2311
  %v2952 = vunpack.c.l.b16 %v2312
  %v2953 = vunpack.c.h.b16 %v2312
  %v2954 = vunpack.c.l.b16 %v2313
  %v2955 = vunpack.c.h.b16 %v2313
  %v2956 = vunpack.c.l.b16 %v2314
  %v2957 = vunpack.c.h.b16 %v2314
  %v2958 = vunpack.c.l.b16 %v2315
  %v2959 = vunpack.c.h.b16 %v2315
  %v2960 = vunpack.c.l.b16 %v2316
  %v2961 = vunpack.c.h.b16 %v2316
  %v2962 = vunpack.c.l.b16 %v2317
  %v2963 = vunpack.c.h.b16 %v2317
  %v2964 = vunpack.c.l.b16 %v2318
  %v2965 = vunpack.c.h.b16 %v2318
  %v2966 = vunpack.c.l.b16 %v2319
  %v2967 = vunpack.c.h.b16 %v2319
  %v2968 = vunpack.c.l.b16 %v2320
  %v2969 = vunpack.c.h.b16 %v2320
  %v2970 = vunpack.c.l.b16 %v2321
  %v2971 = vunpack.c.h.b16 %v2321
  %v2972 = vunpack.c.l.b16 %v2322
  %v2973 = vunpack.c.h.b16 %v2322
  %v2974 = vunpack.c.l.b16 %v2323
  %v2975 = vunpack.c.h.b16 %v2323
  %v2976 = vunpack.c.l.b16 %v2324
  %v2977 = vunpack.c.h.b16 %v2324
  %v2978 = vunpack.c.l.b16 %v2325
  %v2979 = vunpack.c.h.b16 %v2325
  %v2980 = vunpack.c.l.b16 %v2326
  %v2981 = vunpack.c.h.b16 %v2326
  %v2982 = vunpack.c.l.b16 %v2327
  %v2983 = vunpack.c.h.b16 %v2327
  %v2984 = vunpack.c.l.b16 %v2328
  %v2985 = vunpack.c.h.b16 %v2328
  %v2986 = vunpack.c.l.b16 %v2329
  %v2987 = vunpack.c.h.b16 %v2329
  %v2988 = vunpack.c.l.b16 %v2330
  %v2989 = vunpack.c.h.b16 %v2330
  %v2990 = vunpack.c.l.b16 %v2331
  %v2991 = vunpack.c.h.b16 %v2331
  %v2992 = vunpack.c.l.b16 %v2332
  %v2993 = vunpack.c.h.b16 %v2332
  %v2994 = vunpack.c.l.b16 %v2333
  %v2995 = vunpack.c.h.b16 %v2333
  %v2996 = vunpack.c.l.b16 %v2334
  %v2997 = vunpack.c.h.b16 %v2334
  %v2998 = vunpack.c.l.b16 %v2335
  %v2999 = vunpack.c.h.b16 %v2335
  %v3000 = vunpack.c.l.b16 %v2336
  %v3001 = vunpack.c.h.b16 %v2336
  %v3002 = vunpack.c.l.b16 %v2337
  %v3003 = vunpack.c.h.b16 %v2337
  %v3004 = vunpack.c.l.b16 %v2338
  %v3005 = vunpack.c.h.b16 %v2338
  %v3006 = vunpack.c.l.b16 %v2339
  %v3007 = vunpack.c.h.b16 %v2339
  %v3008 = vunpack.c.l.b16 %v2340
  %v3009 = vunpack.c.h.b16 %v2340
  %v3010 = vunpack.c.l.b16 %v2341
  %v3011 = vunpack.c.h.b16 %v2341
  %v3012 = vunpack.c.l.b16 %v2342
  %v3013 = vunpack.c.h.b16 %v2342
  %v3014 = vunpack.c.l.b16 %v2343
  %v3015 = vunpack.c.h.b16 %v2343
  %v3016 = vunpack.c.l.b16 %v2344
  %v3017 = vunpack.c.h.b16 %v2344
  %v3018 = vunpack.c.l.b16 %v2345
  %v3019 = vunpack.c.h.b16 %v2345
  %v3020 = vunpack.c.l.b16 %v2346
  %v3021 = vunpack.c.h.b16 %v2346
  %v3022 = vunpack.c.l.b16 %v2347
  %v3023 = vunpack.c.h.b16 %v2347
  %v3024 = vunpack.c.l.b16 %v2348
  %v3025 = vunpack.c.h.b16 %v2348
  %v3026 = vunpack.c.l.b16 %v2349
  %v3027 = vunpack.c.h.b16 %v2349
  %v3028 = vunpack.c.l.b16 %v2350
  %v3029 = vunpack.c.h.b16 %v2350
  %v3030 = vunpack.c.l.b16 %v2351
  %v3031 = vunpack.c.h.b16 %v2351
  %v3032 = vunpack.c.l.b16 %v2352
  %v3033 = vunpack.c.h.b16 %v2352
  %v3034 = vunpack.c.l.b16 %v2353
  %v3035 = vunpack.c.h.b16 %v2353
  %v3036 = vunpack.c.l.b16 %v2354
  %v3037 = vunpack.c.h.b16 %v2354
  %v3038 = vunpack.c.l.b16 %v2355
  %v3039 = vunpack.c.h.b16 %v2355
  %v3040 = vunpack.c.l.b16 %v2356
  %v3041 = vunpack.c.h.b16 %v2356
  %v3042 = vunpack.c.l.b16 %v2357
  %v3043 = vunpack.c.h.b16 %v2357
  %v3044 = vunpack.c.l.b16 %v2358
  %v3045 = vunpack.c.h.b16 %v2358
  %v3046 = vunpack.c.l.b16 %v2359
  %v3047 = vunpack.c.h.b16 %v2359
  %v3048 = vunpack.c.l.b16 %v2360
  %v3049 = vunpack.c.h.b16 %v2360
  %v3050 = vunpack.c.l.b16 %v2361
  %v3051 = vunpack.c.h.b16 %v2361
  %v3052 = vunpack.c.l.b16 %v2362
  %v3053 = vunpack.c.h.b16 %v2362
  %v3054 = vunpack.c.l.b16 %v2363
  %v3055 = vunpack.c.h.b16 %v2363
  %v3056 = vunpack.c.l.b16 %v2364
  %v3057 = vunpack.c.h.b16 %v2364
  %v3058 = vunpack.c.l.b16 %v2365
  %v3059 = vunpack.c.h.b16 %v2365
  %v3060 = vunpack.c.l.b16 %v2366
  %v3061 = vunpack.c.h.b16 %v2366
  %v3062 = vunpack.c.l.b16 %v2367
  %v3063 = vunpack.c.h.b16 %v2367
  %v3064 = vunpack.c.l.b16 %v2368
  %v3065 = vunpack.c.h.b16 %v2368
  %v3066 = vunpack.c.l.b16 %v2369
  %v3067 = vunpack.c.h.b16 %v2369
  %v3068 = vunpack.c.l.b16 %v2370
  %v3069 = vunpack.c.h.b16 %v2370
  %v3070 = vunpack.c.l.b16 %v2371
  %v3071 = vunpack.c.h.b16 %v2371
  %v3072 = vunpack.c.l.b16 %v2372
  %v3073 = vunpack.c.h.b16 %v2372
  %v3074 = vunpack.c.l.b16 %v2373
  %v3075 = vunpack.c.h.b16 %v2373
  %v3076 = vunpack.c.l.b16 %v2374
  %v3077 = vunpack.c.h.b16 %v2374
  %v3078 = vunpack.c.l.b16 %v2375
  %v3079 = vunpack.c.h.b16 %v2375
  %v3080 = vunpack.c.l.b16 %v2376
  %v3081 = vunpack.c.h.b16 %v2376
  %v3082 = vunpack.c.l.b16 %v2377
  %v3083 = vunpack.c.h.b16 %v2377
  %v3084 = vunpack.c.l.b16 %v2378
  %v3085 = vunpack.c.h.b16 %v2378
  %v3086 = vunpack.c.l.b16 %v2379
  %v3087 = vunpack.c.h.b16 %v2379
  %v3088 = vunpack.c.l.b16 %v2380
  %v3089 = vunpack.c.h.b16 %v2380
  %v3090 = vunpack.c.l.b16 %v2381
  %v3091 = vunpack.c.h.b16 %v2381
  %v3092 = vunpack.c.l.b16 %v2382
  %v3093 = vunpack.c.h.b16 %v2382
  %v3094 = vunpack.c.l.b16 %v2383
  %v3095 = vunpack.c.h.b16 %v2383
  %v3096 = vunpack.c.l.b16 %v2384
  %v3097 = vunpack.c.h.b16 %v2384
  %v3098 = vunpack.c.l.b16 %v2385
  %v3099 = vunpack.c.h.b16 %v2385
  %v3100 = vunpack.c.l.b16 %v2386
  %v3101 = vunpack.c.h.b16 %v2386
  %v3102 = vunpack.c.l.b16 %v2387
  %v3103 = vunpack.c.h.b16 %v2387
  %v3104 = vunpack.c.l.b16 %v2388
  %v3105 = vunpack.c.h.b16 %v2388
  %v3106 = vunpack.c.l.b16 %v2389
  %v3107 = vunpack.c.h.b16 %v2389
  %v3108 = vunpack.c.l.b16 %v2390
  %v3109 = vunpack.c.h.b16 %v2390
  %v3110 = vunpack.c.l.b16 %v2391
  %v3111 = vunpack.c.h.b16 %v2391
  %v3112 = vunpack.c.l.b16 %v2392
  %v3113 = vunpack.c.h.b16 %v2392
  %v3114 = vunpack.c.l.b16 %v2393
  %v3115 = vunpack.c.h.b16 %v2393
  %v3116 = vunpack.c.l.b16 %v2394
  %v3117 = vunpack.c.h.b16 %v2394
  %v3118 = vunpack.c.l.b16 %v2395
  %v3119 = vunpack.c.h.b16 %v2395
  %v3120 = vunpack.c.l.b16 %v2396
  %v3121 = vunpack.c.h.b16 %v2396
  %v3122 = vunpack.c.l.b16 %v2397
  %v3123 = vunpack.c.h.b16 %v2397
  %v3124 = vunpack.c.l.b16 %v2398
  %v3125 = vunpack.c.h.b16 %v2398
  %v3126 = vunpack.c.l.b16 %v2399
  %v3127 = vunpack.c.h.b16 %v2399
  %v3128 = vunpack.c.l.b16 %v2400
  %v3129 = vunpack.c.h.b16 %v2400
  %v3130 = vunpack.c.l.b16 %v2401
  %v3131 = vunpack.c.h.b16 %v2401
  %v3132 = vunpack.c.l.b16 %v2402
  %v3133 = vunpack.c.h.b16 %v2402
  %v3134 = vunpack.c.l.b16 %v2403
  %v3135 = vunpack.c.h.b16 %v2403
  %v3136 = vunpack.c.l.b16 %v2404
  %v3137 = vunpack.c.h.b16 %v2404
  %v3138 = vunpack.c.l.b16 %v2405
  %v3139 = vunpack.c.h.b16 %v2405
  %v3140 = vunpack.c.l.b16 %v2406
  %v3141 = vunpack.c.h.b16 %v2406
  %v3142 = vunpack.c.l.b16 %v2407
  %v3143 = vunpack.c.h.b16 %v2407
  %v3144 = vunpack.c.l.b16 %v2408
  %v3145 = vunpack.c.h.b16 %v2408
  %v3146 = vunpack.c.l.b16 %v2409
  %v3147 = vunpack.c.h.b16 %v2409
  %v3148 = vunpack.c.l.b16 %v2410
  %v3149 = vunpack.c.h.b16 %v2410
  %v3150 = vunpack.c.l.b16 %v2411
  %v3151 = vunpack.c.h.b16 %v2411
  %v3152 = vunpack.c.l.b16 %v2412
  %v3153 = vunpack.c.h.b16 %v2412
  %v3154 = vunpack.c.l.b16 %v2413
  %v3155 = vunpack.c.h.b16 %v2413
  %v3156 = vunpack.c.l.b16 %v2414
  %v3157 = vunpack.c.h.b16 %v2414
  %v3158 = vunpack.c.l.b16 %v2415
  %v3159 = vunpack.c.h.b16 %v2415
  %v3160 = vunpack.c.l.b16 %v2416
  %v3161 = vunpack.c.h.b16 %v2416
  %v3162 = vunpack.c.l.b16 %v2417
  %v3163 = vunpack.c.h.b16 %v2417
  %v3164 = vunpack.c.l.b16 %v2418
  %v3165 = vunpack.c.h.b16 %v2418
  %v3166 = vunpack.c.l.b16 %v2419
  %v3167 = vunpack.c.h.b16 %v2419
  %v3168 = vunpack.c.l.b16 %v2420
  %v3169 = vunpack.c.h.b16 %v2420
  %v3170 = vunpack.c.l.b16 %v2421
  %v3171 = vunpack.c.h.b16 %v2421
  %v3172 = vunpack.c.l.b16 %v2422
  %v3173 = vunpack.c.h.b16 %v2422
  %v3174 = vunpack.c.l.b16 %v2423
  %v3175 = vunpack.c.h.b16 %v2423
  %v3176 = vunpack.c.l.b16 %v2424
  %v3177 = vunpack.c.h.b16 %v2424
  %v3178 = vunpack.c.l.b16 %v2425
  %v3179 = vunpack.c.h.b16 %v2425
  %v3180 = vunpack.c.l.b16 %v2426
  %v3181 = vunpack.c.h.b16 %v2426
  %v3182 = vunpack.c.l.b16 %v2427
  %v3183 = vunpack.c.h.b16 %v2427
  %v3184 = vunpack.c.l.b16 %v2428
  %v3185 = vunpack.c.h.b16 %v2428
  %v3186 = vunpack.c.l.b16 %v2429
  %v3187 = vunpack.c.h.b16 %v2429
  %v3188 = vunpack.c.l.b16 %v2430
  %v3189 = vunpack.c.h.b16 %v2430
  %v3190 = vunpack.c.l.b16 %v2431
  %v3191 = vunpack.c.h.b16 %v2431
  %v3192 = vunpack.c.l.b16 %v2432
  %v3193 = vunpack.c.h.b16 %v2432
  %v3194 = vunpack.c.l.b16 %v2433
  %v3195 = vunpack.c.h.b16 %v2433
  %v3196 = vunpack.c.l.b16 %v2434
  %v3197 = vunpack.c.h.b16 %v2434
  %v3198 = vunpack.c.l.b16 %v2435
  %v3199 = vunpack.c.h.b16 %v2435
  %v3200 = vunpack.c.l.b16 %v2436
  %v3201 = vunpack.c.h.b16 %v2436
  %v3202 = vunpack.c.l.b16 %v2437
  %v3203 = vunpack.c.h.b16 %v2437
  %v3204 = vunpack.c.l.b16 %v2438
  %v3205 = vunpack.c.h.b16 %v2438
  %v3206 = vunpack.c.l.b16 %v2439
  %v3207 = vunpack.c.h.b16 %v2439
  %v3208 = vunpack.c.l.b16 %v2440
  %v3209 = vunpack.c.h.b16 %v2440
  %v3210 = vunpack.c.l.b16 %v2441
  %v3211 = vunpack.c.h.b16 %v2441
  %v3212 = vunpack.c.l.b16 %v2442
  %v3213 = vunpack.c.h.b16 %v2442
  %v3214 = vunpack.c.l.b16 %v2443
  %v3215 = vunpack.c.h.b16 %v2443
  %v3216 = vunpack.c.l.b16 %v2444
  %v3217 = vunpack.c.h.b16 %v2444
  %v3218 = vunpack.c.l.b16 %v2445
  %v3219 = vunpack.c.h.b16 %v2445
  %v3220 = vpack.c.b16 %v2710, %v2708
  %v3221 = vpack.c.b16 %v2711, %v2709
  %v3222 = vpack.c.b16 %v2714, %v2712
  %v3223 = vpack.c.b16 %v2715, %v2713
  %v3224 = vpack.c.b16 %v2718, %v2716
  %v3225 = vpack.c.b16 %v2719, %v2717
  %v3226 = vpack.c.b16 %v2722, %v2720
  %v3227 = vpack.c.b16 %v2723, %v2721
  %v3228 = vpack.c.b16 %v2726, %v2724
  %v3229 = vpack.c.b16 %v2727, %v2725
  %v3230 = vpack.c.b16 %v2730, %v2728
  %v3231 = vpack.c.b16 %v2731, %v2729
  %v3232 = vpack.c.b16 %v2734, %v2732
  %v3233 = vpack.c.b16 %v2735, %v2733
  %v3234 = vpack.c.b16 %v2738, %v2736
  %v3235 = vpack.c.b16 %v2739, %v2737
  %v3236 = vpack.c.b16 %v2742, %v2740
  %v3237 = vpack.c.b16 %v2743, %v2741
  %v3238 = vpack.c.b16 %v2746, %v2744
  %v3239 = vpack.c.b16 %v2747, %v2745
  %v3240 = vpack.c.b16 %v2750, %v2748
  %v3241 = vpack.c.b16 %v2751, %v2749
  %v3242 = vpack.c.b16 %v2754, %v2752
  %v3243 = vpack.c.b16 %v2755, %v2753
  %v3244 = vpack.c.b16 %v2758, %v2756
  %v3245 = vpack.c.b16 %v2759, %v2757
  %v3246 = vpack.c.b16 %v2762, %v2760
  %v3247 = vpack.c.b16 %v2763, %v2761
  %v3248 = vpack.c.b16 %v2766, %v2764
  %v3249 = vpack.c.b16 %v2767, %v2765
  %v3250 = vpack.c.b16 %v2770, %v2768
  %v3251 = vpack.c.b16 %v2771, %v2769
  %v3252 = vpack.c.b16 %v2774, %v2772
  %v3253 = vpack.c.b16 %v2775, %v2773
  %v3254 = vpack.c.b16 %v2778, %v2776
  %v3255 = vpack.c.b16 %v2779, %v2777
  %v3256 = vpack.c.b16 %v2782, %v2780
  %v3257 = vpack.c.b16 %v2783, %v2781
  %v3258 = vpack.c.b16 %v2786, %v2784
  %v3259 = vpack.c.b16 %v2787, %v2785
  %v3260 = vpack.c.b16 %v2790, %v2788
  %v3261 = vpack.c.b16 %v2791, %v2789
  %v3262 = vpack.c.b16 %v2794, %v2792
  %v3263 = vpack.c.b16 %v2795, %v2793
  %v3264 = vpack.c.b16 %v2798, %v2796
  %v3265 = vpack.c.b16 %v2799, %v2797
  %v3266 = vpack.c.b16 %v2802, %v2800
  %v3267 = vpack.c.b16 %v2803, %v2801
  %v3268 = vpack.c.b16 %v2806, %v2804
  %v3269 = vpack.c.b16 %v2807, %v2805
  %v3270 = vpack.c.b16 %v2810, %v2808
  %v3271 = vpack.c.b16 %v2811, %v2809
  %v3272 = vpack.c.b16 %v2814, %v2812
  %v3273 = vpack.c.b16 %v2815, %v2813
  %v3274 = vpack.c.b16 %v2818, %v2816
  %v3275 = vpack.c.b16 %v2819, %v2817
  %v3276 = vpack.c.b16 %v2822, %v2820
  %v3277 = vpack.c.b16 %v2823, %v2821
  %v3278 = vpack.c.b16 %v2826, %v2824
  %v3279 = vpack.c.b16 %v2827, %v2825
  %v3280 = vpack.c.b16 %v2830, %v2828
  %v3281 = vpack.c.b16 %v2831, %v2829
  %v3282 = vpack.c.b16 %v2834, %v2832
  %v3283 = vpack.c.b16 %v2835, %v2833
  %v3284 = vpack.c.b16 %v2838, %v2836
  %v3285 = vpack.c.b16 %v2839, %v2837
  %v3286 = vpack.c.b16 %v2842, %v2840
  %v3287 = vpack.c.b16 %v2843, %v2841
  %v3288 = vpack.c.b16 %v2846, %v2844
  %v3289 = vpack.c.b16 %v2847, %v2845
  %v3290 = vpack.c.b16 %v2850, %v2848
  %v3291 = vpack.c.b16 %v2851, %v2849
  %v3292 = vpack.c.b16 %v2854, %v2852
  %v3293 = vpack.c.b16 %v2855, %v2853
  %v3294 = vpack.c.b16 %v2858, %v2856
  %v3295 = vpack.c.b16 %v2859, %v2857
  %v3296 = vpack.c.b16 %v2862, %v2860
  %v3297 = vpack.c.b16 %v2863, %v2861
  %v3298 = vpack.c.b16 %v2866, %v2864
  %v3299 = vpack.c.b16 %v2867, %v2865
  %v3300 = vpack.c.b16 %v2870, %v2868
  %v3301 = vpack.c.b16 %v2871, %v2869
  %v3302 = vpack.c.b16 %v2874, %v2872
  %v3303 = vpack.c.b16 %v2875, %v2873
  %v3304 = vpack.c.b16 %v2878, %v2876
  %v3305 = vpack.c.b16 %v2879, %v2877
  %v3306 = vpack.c.b16 %v2882, %v2880
  %v3307 = vpack.c.b16 %v2883, %v2881
  %v3308 = vpack.c.b16 %v2886, %v2884
  %v3309 = vpack.c.b16 %v2887, %v2885
  %v3310 = vpack.c.b16 %v2890, %v2888
  %v3311 = vpack.c.b16 %v2891, %v2889
  %v3312 = vpack.c.b16 %v2894, %v2892
  %v3313 = vpack.c.b16 %v2895, %v2893
  %v3314 = vpack.c.b16 %v2898, %v2896
  %v3315 = vpack.c.b16 %v2899, %v2897
  %v3316 = vpack.c.b16 %v2902, %v2900
  %v3317 = vpack.c.b16 %v2903, %v2901
  %v3318 = vpack.c.b16 %v2906, %v2904
  %v3319 = vpack.c.b16 %v2907, %v2905
  %v3320 = vpack.c.b16 %v2910, %v2908
  %v3321 = vpack.c.b16 %v2911, %v2909
  %v3322 = vpack.c.b16 %v2914, %v2912
  %v3323 = vpack.c.b16 %v2915, %v2913
  %v3324 = vpack.c.b16 %v2918, %v2916
  %v3325 = vpack.c.b16 %v2919, %v2917
  %v3326 = vpack.c.b16 %v2922, %v2920
  %v3327 = vpack.c.b16 %v2923, %v2921
  %v3328 = vpack.c.b16 %v2926, %v2924
  %v3329 = vpack.c.b16 %v2927, %v2925
  %v3330 = vpack.c.b16 %v2930, %v2928
  %v3331 = vpack.c.b16 %v2931, %v2929
  %v3332 = vpack.c.b16 %v2934, %v2932
  %v3333 = vpack.c.b16 %v2935, %v2933
  %v3334 = vpack.c.b16 %v2938, %v2936
  %v3335 = vpack.c.b16 %v2939, %v2937
  %v3336 = vpack.c.b16 %v2942, %v2940
  %v3337 = vpack.c.b16 %v2943, %v2941
  %v3338 = vpack.c.b16 %v2946, %v2944
  %v3339 = vpack.c.b16 %v2947, %v2945
  %v3340 = vpack.c.b16 %v2950, %v2948
  %v3341 = vpack.c.b16 %v2951, %v2949
  %v3342 = vpack.c.b16 %v2954, %v2952
  %v3343 = vpack.c.b16 %v2955, %v2953
  %v3344 = vpack.c.b16 %v2958, %v2956
  %v3345 = vpack.c.b16 %v2959, %v2957
  %v3346 = vpack.c.b16 %v2962, %v2960
  %v3347 = vpack.c.b16 %v2963, %v2961
  %v3348 = vpack.c.b16 %v2966, %v2964
  %v3349 = vpack.c.b16 %v2967, %v2965
  %v3350 = vpack.c.b16 %v2970, %v2968
  %v3351 = vpack.c.b16 %v2971, %v2969
  %v3352 = vpack.c.b16 %v2974, %v2972
  %v3353 = vpack.c.b16 %v2975, %v2973
  %v3354 = vpack.c.b16 %v2978, %v2976
  %v3355 = vpack.c.b16 %v2979, %v2977
  %v3356 = vpack.c.b16 %v2982, %v2980
  %v3357 = vpack.c.b16 %v2983, %v2981
  %v3358 = vpack.c.b16 %v2986, %v2984
  %v3359 = vpack.c.b16 %v2987, %v2985
  %v3360 = vpack.c.b16 %v2990, %v2988
  %v3361 = vpack.c.b16 %v2991, %v2989
  %v3362 = vpack.c.b16 %v2994, %v2992
  %v3363 = vpack.c.b16 %v2995, %v2993
  %v3364 = vpack.c.b16 %v2998, %v2996
  %v3365 = vpack.c.b16 %v2999, %v2997
  %v3366 = vpack.c.b16 %v3002, %v3000
  %v3367 = vpack.c.b16 %v3003, %v3001
  %v3368 = vpack.c.b16 %v3006, %v3004
  %v3369 = vpack.c.b16 %v3007, %v3005
  %v3370 = vpack.c.b16 %v3010, %v3008
  %v3371 = vpack.c.b16 %v3011, %v3009
  %v3372 = vpack.c.b16 %v3014, %v3012
  %v3373 = vpack.c.b16 %v3015, %v3013
  %v3374 = vpack.c.b16 %v3018, %v3016
  %v3375 = vpack.c.b16 %v3019, %v3017
  %v3376 = vpack.c.b16 %v3022, %v3020
  %v3377 = vpack.c.b16 %v3023, %v3021
  %v3378 = vpack.c.b16 %v3026, %v3024
  %v3379 = vpack.c.b16 %v3027, %v3025
  %v3380 = vpack.c.b16 %v3030, %v3028
  %v3381 = vpack.c.b16 %v3031, %v3029
  %v3382 = vpack.c.b16 %v3034, %v3032
  %v3383 = vpack.c.b16 %v3035, %v3033
  %v3384 = vpack.c.b16 %v3038, %v3036
  %v3385 = vpack.c.b16 %v3039, %v3037
  %v3386 = vpack.c.b16 %v3042, %v3040
  %v3387 = vpack.c.b16 %v3043, %v3041
  %v3388 = vpack.c.b16 %v3046, %v3044
  %v3389 = vpack.c.b16 %v3047, %v3045
  %v3390 = vpack.c.b16 %v3050, %v3048
  %v3391 = vpack.c.b16 %v3051, %v3049
  %v3392 = vpack.c.b16 %v3054, %v3052
  %v3393 = vpack.c.b16 %v3055, %v3053
  %v3394 = vpack.c.b16 %v3058, %v3056
  %v3395 = vpack.c.b16 %v3059, %v3057
  %v3396 = vpack.c.b16 %v3062, %v3060
  %v3397 = vpack.c.b16 %v3063, %v3061
  %v3398 = vpack.c.b16 %v3066, %v3064
  %v3399 = vpack.c.b16 %v3067, %v3065
  %v3400 = vpack.c.b16 %v3070, %v3068
  %v3401 = vpack.c.b16 %v3071, %v3069
  %v3402 = vpack.c.b16 %v3074, %v3072
  %v3403 = vpack.c.b16 %v3075, %v3073
  %v3404 = vpack.c.b16 %v3078, %v3076
  %v3405 = vpack.c.b16 %v3079, %v3077
  %v3406 = vpack.c.b16 %v3082, %v3080
  %v3407 = vpack.c.b16 %v3083, %v3081
  %v3408 = vpack.c.b16 %v3086, %v3084
  %v3409 = vpack.c.b16 %v3087, %v3085
  %v3410 = vpack.c.b16 %v3090, %v3088
  %v3411 = vpack.c.b16 %v3091, %v3089
  %v3412 = vpack.c.b16 %v3094, %v3092
  %v3413 = vpack.c.b16 %v3095, %v3093
  %v3414 = vpack.c.b16 %v3098, %v3096
  %v3415 = vpack.c.b16 %v3099, %v3097
  %v3416 = vpack.c.b16 %v3102, %v3100
  %v3417 = vpack.c.b16 %v3103, %v3101
  %v3418 = vpack.c.b16 %v3106, %v3104
  %v3419 = vpack.c.b16 %v3107, %v3105
  %v3420 = vpack.c.b16 %v3110, %v3108
  %v3421 = vpack.c.b16 %v3111, %v3109
  %v3422 = vpack.c.b16 %v3114, %v3112
  %v3423 = vpack.c.b16 %v3115, %v3113
  %v3424 = vpack.c.b16 %v3118, %v3116
  %v3425 = vpack.c.b16 %v3119, %v3117
  %v3426 = vpack.c.b16 %v3122, %v3120
  %v3427 = vpack.c.b16 %v3123, %v3121
  %v3428 = vpack.c.b16 %v3126, %v3124
  %v3429 = vpack.c.b16 %v3127, %v3125
  %v3430 = vpack.c.b16 %v3130, %v3128
  %v3431 = vpack.c.b16 %v3131, %v3129
  %v3432 = vpack.c.b16 %v3134, %v3132
  %v3433 = vpack.c.b16 %v3135, %v3133
  %v3434 = vpack.c.b16 %v3138, %v3136
  %v3435 = vpack.c.b16 %v3139, %v3137
  %v3436 = vpack.c.b16 %v3142, %v3140
  %v3437 = vpack.c.b16 %v3143, %v3141
  %v3438 = vpack.c.b16 %v3146, %v3144
  %v3439 = vpack.c.b16 %v3147, %v3145
  %v3440 = vpack.c.b16 %v3150, %v3148
  %v3441 = vpack.c.b16 %v3151, %v3149
  %v3442 = vpack.c.b16 %v3154, %v3152
  %v3443 = vpack.c.b16 %v3155, %v3153
  %v3444 = vpack.c.b16 %v3158, %v3156
  %v3445 = vpack.c.b16 %v3159, %v3157
  %v3446 = vpack.c.b16 %v3162, %v3160
  %v3447 = vpack.c.b16 %v3163, %v3161
  %v3448 = vpack.c.b16 %v3166, %v3164
  %v3449 = vpack.c.b16 %v3167, %v3165
  %v3450 = vpack.c.b16 %v3170, %v3168
  %v3451 = vpack.c.b16 %v3171, %v3169
  %v3452 = vpack.c.b16 %v3174, %v3172
  %v3453 = vpack.c.b16 %v3175, %v3173
  %v3454 = vpack.c.b16 %v3178, %v3176
  %v3455 = vpack.c.b16 %v3179, %v3177
  %v3456 = vpack.c.b16 %v3182, %v3180
  %v3457 = vpack.c.b16 %v3183, %v3181
  %v3458 = vpack.c.b16 %v3186, %v3184
  %v3459 = vpack.c.b16 %v3187, %v3185
  %v3460 = vpack.c.b16 %v3190, %v3188
  %v3461 = vpack.c.b16 %v3191, %v3189
  %v3462 = vpack.c.b16 %v3194, %v3192
  %v3463 = vpack.c.b16 %v3195, %v3193
  %v3464 = vpack.c.b16 %v3198, %v3196
  %v3465 = vpack.c.b16 %v3199, %v3197
  %v3466 = vpack.c.b16 %v3202, %v3200
  %v3467 = vpack.c.b16 %v3203, %v3201
  %v3468 = vpack.c.b16 %v3206, %v3204
  %v3469 = vpack.c.b16 %v3207, %v3205
  %v3470 = vpack.c.b16 %v3210, %v3208
  %v3471 = vpack.c.b16 %v3211, %v3209
  %v3472 = vpack.c.b16 %v3214, %v3212
  %v3473 = vpack.c.b16 %v3215, %v3213
  %v3474 = vpack.c.b16 %v3218, %v3216
  %v3475 = vpack.c.b16 %v3219, %v3217
  %3732 = vmatpush.bf16.msra.mxu0 %v3234
  %3733 = vmatpush.bf16.msra.mxu0 %v3232
  %3734 = vmatpush.bf16.msra.mxu0 %v3230
  %3735 = vmatpush.bf16.msra.mxu0 %v3228
  %3736 = vmatpush.bf16.msra.mxu0 %v3226
  %3737 = vmatpush.bf16.msra.mxu0 %v3224
  %3738 = vmatpush.bf16.msra.mxu0 %v3222
  %3739 = vmatpush.bf16.msra.mxu0 %v3220
  %3740 = vmatmul.bf16.gmra.mxu0 %v2174
  %v3741 = vpop.f32.mrf.mxu0
  %v3742 = vadd.f32 %v2448, %v3741
  %v3743 = vpop.f32.mrf.mxu0
  %v3744 = vadd.f32 %v2448, %v3743
  %3745 = vdwg.mxu0
  %3746 = vmatpush.bf16.msra.mxu0 %v3250
  %3747 = vmatpush.bf16.msra.mxu0 %v3248
  %3748 = vmatpush.bf16.msra.mxu0 %v3246
  %3749 = vmatpush.bf16.msra.mxu0 %v3244
  %3750 = vmatpush.bf16.msra.mxu0 %v3242
  %3751 = vmatpush.bf16.msra.mxu0 %v3240
  %3752 = vmatpush.bf16.msra.mxu0 %v3238
  %3753 = vmatpush.bf16.msra.mxu0 %v3236
  %3754 = vmatmul.bf16.gmra.mxu0 %v2175
  %v3755 = vpop.f32.mrf.mxu0
  %v3756 = vadd.f32 %v3742, %v3755
  %v3757 = vpop.f32.mrf.mxu0
  %v3758 = vadd.f32 %v3744, %v3757
  %3759 = vdwg.mxu0
  %3760 = vmatpush.bf16.msra.mxu0 %v3266
  %3761 = vmatpush.bf16.msra.mxu0 %v3264
  %3762 = vmatpush.bf16.msra.mxu0 %v3262
  %3763 = vmatpush.bf16.msra.mxu0 %v3260
  %3764 = vmatpush.bf16.msra.mxu0 %v3258
  %3765 = vmatpush.bf16.msra.mxu0 %v3256
  %3766 = vmatpush.bf16.msra.mxu0 %v3254
  %3767 = vmatpush.bf16.msra.mxu0 %v3252
  %3768 = vmatmul.bf16.gmra.mxu0 %v2176
  %v3769 = vpop.f32.mrf.mxu0
  %v3770 = vadd.f32 %v3756, %v3769
  %v3771 = vpop.f32.mrf.mxu0
  %v3772 = vadd.f32 %v3758, %v3771
  %3773 = vdwg.mxu0
  %3774 = vmatpush.bf16.msra.mxu0 %v3282
  %3775 = vmatpush.bf16.msra.mxu0 %v3280
  %3776 = vmatpush.bf16.msra.mxu0 %v3278
  %3777 = vmatpush.bf16.msra.mxu0 %v3276
  %3778 = vmatpush.bf16.msra.mxu0 %v3274
  %3779 = vmatpush.bf16.msra.mxu0 %v3272
  %3780 = vmatpush.bf16.msra.mxu0 %v3270
  %3781 = vmatpush.bf16.msra.mxu0 %v3268
  %3782 = vmatmul.bf16.gmra.mxu0 %v2177
  %v3783 = vpop.f32.mrf.mxu0
  %v3784 = vadd.f32 %v3770, %v3783
  %v3785 = vpop.f32.mrf.mxu0
  %v3786 = vadd.f32 %v3772, %v3785
  %3787 = vdwg.mxu0
  %3788 = vmatpush.bf16.msra.mxu0 %v3298
  %3789 = vmatpush.bf16.msra.mxu0 %v3296
  %3790 = vmatpush.bf16.msra.mxu0 %v3294
  %3791 = vmatpush.bf16.msra.mxu0 %v3292
  %3792 = vmatpush.bf16.msra.mxu0 %v3290
  %3793 = vmatpush.bf16.msra.mxu0 %v3288
  %3794 = vmatpush.bf16.msra.mxu0 %v3286
  %3795 = vmatpush.bf16.msra.mxu0 %v3284
  %3796 = vmatmul.bf16.gmra.mxu0 %v2178
  %v3797 = vpop.f32.mrf.mxu0
  %v3798 = vadd.f32 %v3784, %v3797
  %v3799 = vpop.f32.mrf.mxu0
  %v3800 = vadd.f32 %v3786, %v3799
  %3801 = vdwg.mxu0
  %3802 = vmatpush.bf16.msra.mxu0 %v3314
  %3803 = vmatpush.bf16.msra.mxu0 %v3312
  %3804 = vmatpush.bf16.msra.mxu0 %v3310
  %3805 = vmatpush.bf16.msra.mxu0 %v3308
  %3806 = vmatpush.bf16.msra.mxu0 %v3306
  %3807 = vmatpush.bf16.msra.mxu0 %v3304
  %3808 = vmatpush.bf16.msra.mxu0 %v3302
  %3809 = vmatpush.bf16.msra.mxu0 %v3300
  %3810 = vmatmul.bf16.gmra.mxu0 %v2179
  %v3811 = vpop.f32.mrf.mxu0
  %v3812 = vadd.f32 %v3798, %v3811
  %v3813 = vpop.f32.mrf.mxu0
  %v3814 = vadd.f32 %v3800, %v3813
  %3815 = vdwg.mxu0
  %3816 = vmatpush.bf16.msra.mxu0 %v3330
  %3817 = vmatpush.bf16.msra.mxu0 %v3328
  %3818 = vmatpush.bf16.msra.mxu0 %v3326
  %3819 = vmatpush.bf16.msra.mxu0 %v3324
  %3820 = vmatpush.bf16.msra.mxu0 %v3322
  %3821 = vmatpush.bf16.msra.mxu0 %v3320
  %3822 = vmatpush.bf16.msra.mxu0 %v3318
  %3823 = vmatpush.bf16.msra.mxu0 %v3316
  %3824 = vmatmul.bf16.gmra.mxu0 %v2180
  %v3825 = vpop.f32.mrf.mxu0
  %v3826 = vadd.f32 %v3812, %v3825
  %v3827 = vpop.f32.mrf.mxu0
  %v3828 = vadd.f32 %v3814, %v3827
  %3829 = vdwg.mxu0
  %3830 = vmatpush.bf16.msra.mxu0 %v3346
  %3831 = vmatpush.bf16.msra.mxu0 %v3344
  %3832 = vmatpush.bf16.msra.mxu0 %v3342
  %3833 = vmatpush.bf16.msra.mxu0 %v3340
  %3834 = vmatpush.bf16.msra.mxu0 %v3338
  %3835 = vmatpush.bf16.msra.mxu0 %v3336
  %3836 = vmatpush.bf16.msra.mxu0 %v3334
  %3837 = vmatpush.bf16.msra.mxu0 %v3332
  %3838 = vmatmul.bf16.gmra.mxu0 %v2181
  %v3839 = vpop.f32.mrf.mxu0
  %v3840 = vadd.f32 %v3826, %v3839
  %v3841 = vpop.f32.mrf.mxu0
  %v3842 = vadd.f32 %v3828, %v3841
  %3843 = vdwg.mxu0
  %3844 = vmatpush.bf16.msra.mxu0 %v3362
  %3845 = vmatpush.bf16.msra.mxu0 %v3360
  %3846 = vmatpush.bf16.msra.mxu0 %v3358
  %3847 = vmatpush.bf16.msra.mxu0 %v3356
  %3848 = vmatpush.bf16.msra.mxu0 %v3354
  %3849 = vmatpush.bf16.msra.mxu0 %v3352
  %3850 = vmatpush.bf16.msra.mxu0 %v3350
  %3851 = vmatpush.bf16.msra.mxu0 %v3348
  %3852 = vmatmul.bf16.gmra.mxu0 %v2182
  %v3853 = vpop.f32.mrf.mxu0
  %v3854 = vadd.f32 %v3840, %v3853
  %v3855 = vpop.f32.mrf.mxu0
  %v3856 = vadd.f32 %v3842, %v3855
  %3857 = vdwg.mxu0
  %3858 = vmatpush.bf16.msra.mxu0 %v3378
  %3859 = vmatpush.bf16.msra.mxu0 %v3376
  %3860 = vmatpush.bf16.msra.mxu0 %v3374
  %3861 = vmatpush.bf16.msra.mxu0 %v3372
  %3862 = vmatpush.bf16.msra.mxu0 %v3370
  %3863 = vmatpush.bf16.msra.mxu0 %v3368
  %3864 = vmatpush.bf16.msra.mxu0 %v3366
  %3865 = vmatpush.bf16.msra.mxu0 %v3364
  %3866 = vmatmul.bf16.gmra.mxu0 %v2183
  %v3867 = vpop.f32.mrf.mxu0
  %v3868 = vadd.f32 %v3854, %v3867
  %v3869 = vpop.f32.mrf.mxu0
  %v3870 = vadd.f32 %v3856, %v3869
  %3871 = vdwg.mxu0
  %3872 = vmatpush.bf16.msra.mxu0 %v3394
  %3873 = vmatpush.bf16.msra.mxu0 %v3392
  %3874 = vmatpush.bf16.msra.mxu0 %v3390
  %3875 = vmatpush.bf16.msra.mxu0 %v3388
  %3876 = vmatpush.bf16.msra.mxu0 %v3386
  %3877 = vmatpush.bf16.msra.mxu0 %v3384
  %3878 = vmatpush.bf16.msra.mxu0 %v3382
  %3879 = vmatpush.bf16.msra.mxu0 %v3380
  %3880 = vmatmul.bf16.gmra.mxu0 %v2184
  %v3881 = vpop.f32.mrf.mxu0
  %v3882 = vadd.f32 %v3868, %v3881
  %v3883 = vpop.f32.mrf.mxu0
  %v3884 = vadd.f32 %v3870, %v3883
  %3885 = vdwg.mxu0
  %3886 = vmatpush.bf16.msra.mxu0 %v3410
  %3887 = vmatpush.bf16.msra.mxu0 %v3408
  %3888 = vmatpush.bf16.msra.mxu0 %v3406
  %3889 = vmatpush.bf16.msra.mxu0 %v3404
  %3890 = vmatpush.bf16.msra.mxu0 %v3402
  %3891 = vmatpush.bf16.msra.mxu0 %v3400
  %3892 = vmatpush.bf16.msra.mxu0 %v3398
  %3893 = vmatpush.bf16.msra.mxu0 %v3396
  %3894 = vmatmul.bf16.gmra.mxu0 %v2185
  %v3895 = vpop.f32.mrf.mxu0
  %v3896 = vadd.f32 %v3882, %v3895
  %v3897 = vpop.f32.mrf.mxu0
  %v3898 = vadd.f32 %v3884, %v3897
  %3899 = vdwg.mxu0
  %3900 = vmatpush.bf16.msra.mxu0 %v3426
  %3901 = vmatpush.bf16.msra.mxu0 %v3424
  %3902 = vmatpush.bf16.msra.mxu0 %v3422
  %3903 = vmatpush.bf16.msra.mxu0 %v3420
  %3904 = vmatpush.bf16.msra.mxu0 %v3418
  %3905 = vmatpush.bf16.msra.mxu0 %v3416
  %3906 = vmatpush.bf16.msra.mxu0 %v3414
  %3907 = vmatpush.bf16.msra.mxu0 %v3412
  %3908 = vmatmul.bf16.gmra.mxu0 %v2186
  %v3909 = vpop.f32.mrf.mxu0
  %v3910 = vadd.f32 %v3896, %v3909
  %v3911 = vpop.f32.mrf.mxu0
  %v3912 = vadd.f32 %v3898, %v3911
  %3913 = vdwg.mxu0
  %3914 = vmatpush.bf16.msra.mxu0 %v3442
  %3915 = vmatpush.bf16.msra.mxu0 %v3440
  %3916 = vmatpush.bf16.msra.mxu0 %v3438
  %3917 = vmatpush.bf16.msra.mxu0 %v3436
  %3918 = vmatpush.bf16.msra.mxu0 %v3434
  %3919 = vmatpush.bf16.msra.mxu0 %v3432
  %3920 = vmatpush.bf16.msra.mxu0 %v3430
  %3921 = vmatpush.bf16.msra.mxu0 %v3428
  %3922 = vmatmul.bf16.gmra.mxu0 %v2187
  %v3923 = vpop.f32.mrf.mxu0
  %v3924 = vadd.f32 %v3910, %v3923
  %v3925 = vpop.f32.mrf.mxu0
  %v3926 = vadd.f32 %v3912, %v3925
  %3927 = vdwg.mxu0
  %3928 = vmatpush.bf16.msra.mxu0 %v3458
  %3929 = vmatpush.bf16.msra.mxu0 %v3456
  %3930 = vmatpush.bf16.msra.mxu0 %v3454
  %3931 = vmatpush.bf16.msra.mxu0 %v3452
  %3932 = vmatpush.bf16.msra.mxu0 %v3450
  %3933 = vmatpush.bf16.msra.mxu0 %v3448
  %3934 = vmatpush.bf16.msra.mxu0 %v3446
  %3935 = vmatpush.bf16.msra.mxu0 %v3444
  %3936 = vmatmul.bf16.gmra.mxu0 %v2188
  %v3937 = vpop.f32.mrf.mxu0
  %v3938 = vadd.f32 %v3924, %v3937
  %v3939 = vpop.f32.mrf.mxu0
  %v3940 = vadd.f32 %v3926, %v3939
  %3941 = vdwg.mxu0
  %3942 = vmatpush.bf16.msra.mxu0 %v3474
  %3943 = vmatpush.bf16.msra.mxu0 %v3472
  %3944 = vmatpush.bf16.msra.mxu0 %v3470
  %3945 = vmatpush.bf16.msra.mxu0 %v3468
  %3946 = vmatpush.bf16.msra.mxu0 %v3466
  %3947 = vmatpush.bf16.msra.mxu0 %v3464
  %3948 = vmatpush.bf16.msra.mxu0 %v3462
  %3949 = vmatpush.bf16.msra.mxu0 %v3460
  %3950 = vmatmul.bf16.gmra.mxu0 %v2189
  %v3951 = vpop.f32.mrf.mxu0
  %v3952 = vadd.f32 %v3938, %v3951
  %v3953 = vpop.f32.mrf.mxu0
  %v3954 = vadd.f32 %v3940, %v3953
  %3955 = vdwg.mxu0
  %3956 = vmatpush.bf16.msra.mxu0 %v3235
  %3957 = vmatpush.bf16.msra.mxu0 %v3233
  %3958 = vmatpush.bf16.msra.mxu0 %v3231
  %3959 = vmatpush.bf16.msra.mxu0 %v3229
  %3960 = vmatpush.bf16.msra.mxu0 %v3227
  %3961 = vmatpush.bf16.msra.mxu0 %v3225
  %3962 = vmatpush.bf16.msra.mxu0 %v3223
  %3963 = vmatpush.bf16.msra.mxu0 %v3221
  %3964 = vmatmul.bf16.gmra.mxu0 %v2174
  %v3965 = vpop.f32.mrf.mxu0
  %v3966 = vadd.f32 %v2449, %v3965
  %v3967 = vpop.f32.mrf.mxu0
  %v3968 = vadd.f32 %v2449, %v3967
  %3969 = vdwg.mxu0
  %3970 = vmatpush.bf16.msra.mxu0 %v3251
  %3971 = vmatpush.bf16.msra.mxu0 %v3249
  %3972 = vmatpush.bf16.msra.mxu0 %v3247
  %3973 = vmatpush.bf16.msra.mxu0 %v3245
  %3974 = vmatpush.bf16.msra.mxu0 %v3243
  %3975 = vmatpush.bf16.msra.mxu0 %v3241
  %3976 = vmatpush.bf16.msra.mxu0 %v3239
  %3977 = vmatpush.bf16.msra.mxu0 %v3237
  %3978 = vmatmul.bf16.gmra.mxu0 %v2175
  %v3979 = vpop.f32.mrf.mxu0
  %v3980 = vadd.f32 %v3966, %v3979
  %v3981 = vpop.f32.mrf.mxu0
  %v3982 = vadd.f32 %v3968, %v3981
  %3983 = vdwg.mxu0
  %3984 = vmatpush.bf16.msra.mxu0 %v3267
  %3985 = vmatpush.bf16.msra.mxu0 %v3265
  %3986 = vmatpush.bf16.msra.mxu0 %v3263
  %3987 = vmatpush.bf16.msra.mxu0 %v3261
  %3988 = vmatpush.bf16.msra.mxu0 %v3259
  %3989 = vmatpush.bf16.msra.mxu0 %v3257
  %3990 = vmatpush.bf16.msra.mxu0 %v3255
  %3991 = vmatpush.bf16.msra.mxu0 %v3253
  %3992 = vmatmul.bf16.gmra.mxu0 %v2176
  %v3993 = vpop.f32.mrf.mxu0
  %v3994 = vadd.f32 %v3980, %v3993
  %v3995 = vpop.f32.mrf.mxu0
  %v3996 = vadd.f32 %v3982, %v3995
  %3997 = vdwg.mxu0
  %3998 = vmatpush.bf16.msra.mxu0 %v3283
  %3999 = vmatpush.bf16.msra.mxu0 %v3281
  %4000 = vmatpush.bf16.msra.mxu0 %v3279
  %4001 = vmatpush.bf16.msra.mxu0 %v3277
  %4002 = vmatpush.bf16.msra.mxu0 %v3275
  %4003 = vmatpush.bf16.msra.mxu0 %v3273
  %4004 = vmatpush.bf16.msra.mxu0 %v3271
  %4005 = vmatpush.bf16.msra.mxu0 %v3269
  %4006 = vmatmul.bf16.gmra.mxu0 %v2177
  %v4007 = vpop.f32.mrf.mxu0
  %v4008 = vadd.f32 %v3994, %v4007
  %v4009 = vpop.f32.mrf.mxu0
  %v4010 = vadd.f32 %v3996, %v4009
  %4011 = vdwg.mxu0
  %4012 = vmatpush.bf16.msra.mxu0 %v3299
  %4013 = vmatpush.bf16.msra.mxu0 %v3297
  %4014 = vmatpush.bf16.msra.mxu0 %v3295
  %4015 = vmatpush.bf16.msra.mxu0 %v3293
  %4016 = vmatpush.bf16.msra.mxu0 %v3291
  %4017 = vmatpush.bf16.msra.mxu0 %v3289
  %4018 = vmatpush.bf16.msra.mxu0 %v3287
  %4019 = vmatpush.bf16.msra.mxu0 %v3285
  %4020 = vmatmul.bf16.gmra.mxu0 %v2178
  %v4021 = vpop.f32.mrf.mxu0
  %v4022 = vadd.f32 %v4008, %v4021
  %v4023 = vpop.f32.mrf.mxu0
  %v4024 = vadd.f32 %v4010, %v4023
  %4025 = vdwg.mxu0
  %4026 = vmatpush.bf16.msra.mxu0 %v3315
  %4027 = vmatpush.bf16.msra.mxu0 %v3313
  %4028 = vmatpush.bf16.msra.mxu0 %v3311
  %4029 = vmatpush.bf16.msra.mxu0 %v3309
  %4030 = vmatpush.bf16.msra.mxu0 %v3307
  %4031 = vmatpush.bf16.msra.mxu0 %v3305
  %4032 = vmatpush.bf16.msra.mxu0 %v3303
  %4033 = vmatpush.bf16.msra.mxu0 %v3301
  %4034 = vmatmul.bf16.gmra.mxu0 %v2179
  %v4035 = vpop.f32.mrf.mxu0
  %v4036 = vadd.f32 %v4022, %v4035
  %v4037 = vpop.f32.mrf.mxu0
  %v4038 = vadd.f32 %v4024, %v4037
  %4039 = vdwg.mxu0
  %4040 = vmatpush.bf16.msra.mxu0 %v3331
  %4041 = vmatpush.bf16.msra.mxu0 %v3329
  %4042 = vmatpush.bf16.msra.mxu0 %v3327
  %4043 = vmatpush.bf16.msra.mxu0 %v3325
  %4044 = vmatpush.bf16.msra.mxu0 %v3323
  %4045 = vmatpush.bf16.msra.mxu0 %v3321
  %4046 = vmatpush.bf16.msra.mxu0 %v3319
  %4047 = vmatpush.bf16.msra.mxu0 %v3317
  %4048 = vmatmul.bf16.gmra.mxu0 %v2180
  %v4049 = vpop.f32.mrf.mxu0
  %v4050 = vadd.f32 %v4036, %v4049
  %v4051 = vpop.f32.mrf.mxu0
  %v4052 = vadd.f32 %v4038, %v4051
  %4053 = vdwg.mxu0
  %4054 = vmatpush.bf16.msra.mxu0 %v3347
  %4055 = vmatpush.bf16.msra.mxu0 %v3345
  %4056 = vmatpush.bf16.msra.mxu0 %v3343
  %4057 = vmatpush.bf16.msra.mxu0 %v3341
  %4058 = vmatpush.bf16.msra.mxu0 %v3339
  %4059 = vmatpush.bf16.msra.mxu0 %v3337
  %4060 = vmatpush.bf16.msra.mxu0 %v3335
  %4061 = vmatpush.bf16.msra.mxu0 %v3333
  %4062 = vmatmul.bf16.gmra.mxu0 %v2181
  %v4063 = vpop.f32.mrf.mxu0
  %v4064 = vadd.f32 %v4050, %v4063
  %v4065 = vpop.f32.mrf.mxu0
  %v4066 = vadd.f32 %v4052, %v4065
  %4067 = vdwg.mxu0
  %4068 = vmatpush.bf16.msra.mxu0 %v3363
  %4069 = vmatpush.bf16.msra.mxu0 %v3361
  %4070 = vmatpush.bf16.msra.mxu0 %v3359
  %4071 = vmatpush.bf16.msra.mxu0 %v3357
  %4072 = vmatpush.bf16.msra.mxu0 %v3355
  %4073 = vmatpush.bf16.msra.mxu0 %v3353
  %4074 = vmatpush.bf16.msra.mxu0 %v3351
  %4075 = vmatpush.bf16.msra.mxu0 %v3349
  %4076 = vmatmul.bf16.gmra.mxu0 %v2182
  %v4077 = vpop.f32.mrf.mxu0
  %v4078 = vadd.f32 %v4064, %v4077
  %v4079 = vpop.f32.mrf.mxu0
  %v4080 = vadd.f32 %v4066, %v4079
  %4081 = vdwg.mxu0
  %4082 = vmatpush.bf16.msra.mxu0 %v3379
  %4083 = vmatpush.bf16.msra.mxu0 %v3377
  %4084 = vmatpush.bf16.msra.mxu0 %v3375
  %4085 = vmatpush.bf16.msra.mxu0 %v3373
  %4086 = vmatpush.bf16.msra.mxu0 %v3371
  %4087 = vmatpush.bf16.msra.mxu0 %v3369
  %4088 = vmatpush.bf16.msra.mxu0 %v3367
  %4089 = vmatpush.bf16.msra.mxu0 %v3365
  %4090 = vmatmul.bf16.gmra.mxu0 %v2183
  %v4091 = vpop.f32.mrf.mxu0
  %v4092 = vadd.f32 %v4078, %v4091
  %v4093 = vpop.f32.mrf.mxu0
  %v4094 = vadd.f32 %v4080, %v4093
  %4095 = vdwg.mxu0
  %4096 = vmatpush.bf16.msra.mxu0 %v3395
  %4097 = vmatpush.bf16.msra.mxu0 %v3393
  %4098 = vmatpush.bf16.msra.mxu0 %v3391
  %4099 = vmatpush.bf16.msra.mxu0 %v3389
  %4100 = vmatpush.bf16.msra.mxu0 %v3387
  %4101 = vmatpush.bf16.msra.mxu0 %v3385
  %4102 = vmatpush.bf16.msra.mxu0 %v3383
  %4103 = vmatpush.bf16.msra.mxu0 %v3381
  %4104 = vmatmul.bf16.gmra.mxu0 %v2184
  %v4105 = vpop.f32.mrf.mxu0
  %v4106 = vadd.f32 %v4092, %v4105
  %v4107 = vpop.f32.mrf.mxu0
  %v4108 = vadd.f32 %v4094, %v4107
  %4109 = vdwg.mxu0
  %4110 = vmatpush.bf16.msra.mxu0 %v3411
  %4111 = vmatpush.bf16.msra.mxu0 %v3409
  %4112 = vmatpush.bf16.msra.mxu0 %v3407
  %4113 = vmatpush.bf16.msra.mxu0 %v3405
  %4114 = vmatpush.bf16.msra.mxu0 %v3403
  %4115 = vmatpush.bf16.msra.mxu0 %v3401
  %4116 = vmatpush.bf16.msra.mxu0 %v3399
  %4117 = vmatpush.bf16.msra.mxu0 %v3397
  %4118 = vmatmul.bf16.gmra.mxu0 %v2185
  %v4119 = vpop.f32.mrf.mxu0
  %v4120 = vadd.f32 %v4106, %v4119
  %v4121 = vpop.f32.mrf.mxu0
  %v4122 = vadd.f32 %v4108, %v4121
  %4123 = vdwg.mxu0
  %4124 = vmatpush.bf16.msra.mxu0 %v3427
  %4125 = vmatpush.bf16.msra.mxu0 %v3425
  %4126 = vmatpush.bf16.msra.mxu0 %v3423
  %4127 = vmatpush.bf16.msra.mxu0 %v3421
  %4128 = vmatpush.bf16.msra.mxu0 %v3419
  %4129 = vmatpush.bf16.msra.mxu0 %v3417
  %4130 = vmatpush.bf16.msra.mxu0 %v3415
  %4131 = vmatpush.bf16.msra.mxu0 %v3413
  %4132 = vmatmul.bf16.gmra.mxu0 %v2186
  %v4133 = vpop.f32.mrf.mxu0
  %v4134 = vadd.f32 %v4120, %v4133
  %v4135 = vpop.f32.mrf.mxu0
  %v4136 = vadd.f32 %v4122, %v4135
  %4137 = vdwg.mxu0
  %4138 = vmatpush.bf16.msra.mxu0 %v3443
  %4139 = vmatpush.bf16.msra.mxu0 %v3441
  %4140 = vmatpush.bf16.msra.mxu0 %v3439
  %4141 = vmatpush.bf16.msra.mxu0 %v3437
  %4142 = vmatpush.bf16.msra.mxu0 %v3435
  %4143 = vmatpush.bf16.msra.mxu0 %v3433
  %4144 = vmatpush.bf16.msra.mxu0 %v3431
  %4145 = vmatpush.bf16.msra.mxu0 %v3429
  %4146 = vmatmul.bf16.gmra.mxu0 %v2187
  %v4147 = vpop.f32.mrf.mxu0
  %v4148 = vadd.f32 %v4134, %v4147
  %v4149 = vpop.f32.mrf.mxu0
  %v4150 = vadd.f32 %v4136, %v4149
  %4151 = vdwg.mxu0
  %4152 = vmatpush.bf16.msra.mxu0 %v3459
  %4153 = vmatpush.bf16.msra.mxu0 %v3457
  %4154 = vmatpush.bf16.msra.mxu0 %v3455
  %4155 = vmatpush.bf16.msra.mxu0 %v3453
  %4156 = vmatpush.bf16.msra.mxu0 %v3451
  %4157 = vmatpush.bf16.msra.mxu0 %v3449
  %4158 = vmatpush.bf16.msra.mxu0 %v3447
  %4159 = vmatpush.bf16.msra.mxu0 %v3445
  %4160 = vmatmul.bf16.gmra.mxu0 %v2188
  %v4161 = vpop.f32.mrf.mxu0
  %v4162 = vadd.f32 %v4148, %v4161
  %v4163 = vpop.f32.mrf.mxu0
  %v4164 = vadd.f32 %v4150, %v4163
  %4165 = vdwg.mxu0
  %4166 = vmatpush.bf16.msra.mxu0 %v3475
  %4167 = vmatpush.bf16.msra.mxu0 %v3473
  %4168 = vmatpush.bf16.msra.mxu0 %v3471
  %4169 = vmatpush.bf16.msra.mxu0 %v3469
  %4170 = vmatpush.bf16.msra.mxu0 %v3467
  %4171 = vmatpush.bf16.msra.mxu0 %v3465
  %4172 = vmatpush.bf16.msra.mxu0 %v3463
  %4173 = vmatpush.bf16.msra.mxu0 %v3461
  %4174 = vmatmul.bf16.gmra.mxu0 %v2189
  %v4175 = vpop.f32.mrf.mxu0
  %v4176 = vadd.f32 %v4162, %v4175
  %v4177 = vpop.f32.mrf.mxu0
  %v4178 = vadd.f32 %v4164, %v4177
  %4179 = vdwg.mxu0
  %4180 = vst [vmem:[%s7] sm:$0xff] %v3952
  %4181 = vst [vmem:[%s7 + $0x8] sm:$0xff] %v4176
  %4182 = vst [vmem:[%s7 + $0x10] sm:$0xff] %v3954
  %4183 = vst [vmem:[%s7 + $0x18] sm:$0xff] %v4178
  // Predicated region
  $region30: #{_forward.1} parent=0 // pred_check
    _
  $region31: #{_forward.1} parent=0 // pred_check_branch
    %4185 = sbr.rel (0) target = $region33
  $region32: #{_forward.1} parent=0 // pred_region
    _
  $region33: #{_forward.1} parent=0 // pred_fallthru
    _
  // Predicated region
  $region34: #{_forward.1} parent=0 // pred_check
    _
  $region35: #{_forward.1} parent=0 // pred_check_branch
    %4187 = sbr.rel (0) target = $region37
  $region36: #{_forward.1} parent=0 // pred_region
    _
  $region37: #{_forward.1} parent=0 // pred_fallthru
    _

</llo_original>
